<compile_context>
chip_gen: v5e
topology: v5e:2x2
jax: 0.10.0
libtpu: 0.0.40
codegen_flags: <defaults>
</compile_context>

<pallas_src>
import functools
import math

import jax
import jax.numpy as jnp
from jax.experimental import pallas as pl
from jax.experimental.pallas import tpu as pltpu


# -----------------------------------------------------------------------------
# Fused kernel builder
# -----------------------------------------------------------------------------
def _make_fused_kernel(*, T, Bp, H, num_layer, num_dir, mm_dtype):
    """Builds a kernel computing num_layer (bi)LSTM layers + Linear head."""
    G = 4 * H                  # gates per direction
    GD = num_dir * G           # gates for all directions
    D2 = num_dir * H           # hidden width across directions
    n_lstm = num_layer * 3     # (wih_cat, bias_cat, whh_blockdiag) per layer

    def kernel(*args):
        x_ref = args[0]                               # (T*Bp, in_dim) mm_dtype
        lstm_refs = args[1:1 + n_lstm]
        wlin_ref = args[1 + n_lstm]                   # (D2, OD_pad)  mm_dtype
        blin_ref = args[2 + n_lstm]                   # (1, OD_pad)   f32
        out_ref = args[3 + n_lstm]                    # (T*Bp, OD_pad)
        xg_scr = args[4 + n_lstm]                     # (T, Bp, GD)   f32
        hs_scr = args[5 + n_lstm]                     # (T, Bp, D2)   f32

        for layer in range(num_layer):
            wih_ref = lstm_refs[3 * layer]            # (K, GD)  mm_dtype
            bias_ref = lstm_refs[3 * layer + 1]       # (1, GD)  f32
            whh_ref = lstm_refs[3 * layer + 2]        # (D2, GD) mm_dtype

            # ---- prologue: hoisted input->gates projection (one full-K
            # matmul per layer, off the serial path) ------------------------
            if layer == 0:
                src = x_ref[...]
            else:
                src = hs_scr[...].reshape(T * Bp, D2).astype(mm_dtype)
            xg = jnp.dot(src, wih_ref[...],
                         preferred_element_type=jnp.float32)
            xg = xg + bias_ref[...].astype(jnp.float32)
            xg_scr[...] = xg.reshape(T, Bp, GD)

            whh = whh_ref[...]                        # block-diag (D2, GD)

            # ---- serial recurrence: fwd+bwd fused in one matmul per step ---
            def step(s, carry):
                h, c = carry                          # (Bp, D2) f32 each
                if num_dir == 2:
                    t_b = (T - 1) - s
                    xg_f = xg_scr[s, :, 0:G]
                    xg_b = xg_scr[t_b, :, G:2 * G]
                    xg_t = jnp.concatenate([xg_f, xg_b], axis=-1)
                else:
                    xg_t = xg_scr[s]
                g = xg_t + jnp.dot(h.astype(mm_dtype), whh,
                                   preferred_element_type=jnp.float32)
                # Full-tile nonlinearities, then slice gates out.
                # PyTorch gate order per direction: i, f, g, o
                sg = jax.nn.sigmoid(g)
                th = jnp.tanh(g)
                if num_dir == 2:
                    i_g = jnp.concatenate(
                        [sg[:, 0:H], sg[:, G:G + H]], axis=-1)
                    f_g = jnp.concatenate(
                        [sg[:, H:2 * H], sg[:, G + H:G + 2 * H]], axis=-1)
                    g_g = jnp.concatenate(
                        [th[:, 2 * H:3 * H], th[:, G + 2 * H:G + 3 * H]],
                        axis=-1)
                    o_g = jnp.concatenate(
                        [sg[:, 3 * H:4 * H], sg[:, G + 3 * H:G + 4 * H]],
                        axis=-1)
                else:
                    i_g = sg[:, 0:H]
                    f_g = sg[:, H:2 * H]
                    g_g = th[:, 2 * H:3 * H]
                    o_g = sg[:, 3 * H:4 * H]
                c_n = f_g * c + i_g * g_g
                h_n = o_g * jnp.tanh(c_n)
                if num_dir == 2:
                    hs_scr[s, :, 0:H] = h_n[:, 0:H]
                    hs_scr[t_b, :, H:2 * H] = h_n[:, H:2 * H]
                else:
                    hs_scr[s] = h_n
                return (h_n, c_n)

            zeros = jnp.zeros((Bp, D2), jnp.float32)
            unroll = True if T <= 32 else 8
            _ = jax.lax.fori_loop(0, T, step, (zeros, zeros), unroll=unroll)

        # ---- fused Linear head: one full-K matmul, lane-dense store --------
        h_all = hs_scr[...].reshape(T * Bp, D2).astype(mm_dtype)
        y = jnp.dot(h_all, wlin_ref[...], preferred_element_type=jnp.float32)
        y = y + blin_ref[...].astype(jnp.float32)
        out_ref[...] = y.astype(out_ref.dtype)

    return kernel


# -----------------------------------------------------------------------------
# Public forward (matches TGRNNNetwork.forward semantics)
# -----------------------------------------------------------------------------
def tg_rnn_forward(x, params, *, hidden_dim, num_layer, bidirect,
                   mm_dtype=jnp.bfloat16):
    # Replicate the dim-promotion logic of the PyTorch forward.
    if x.ndim == 1:
        x = x.reshape(1, -1, 1)
    elif x.ndim == 2:
        x = x.reshape(*x.shape, 1)
    B, T, in_dim = x.shape
    H = hidden_dim
    num_dir = 2 if bidirect else 1
    G = 4 * H
    GD = num_dir * G
    D2 = num_dir * H
    out_dim = params["lin_wT"].shape[1]
    OD_pad = max(128, ((out_dim + 127) // 128) * 128)   # lane-dense output
    Bp = ((B + 7) // 8) * 8                 # pad batch to a full sublane tile

    xt = jnp.transpose(x, (1, 0, 2))        # (T, B, I) time-major
    if Bp != B:
        xt = jnp.pad(xt, ((0, 0), (0, Bp - B), (0, 0)))
    x_flat = xt.reshape(T * Bp, in_dim).astype(mm_dtype)

    # ---- pack weights once (in XLA, outside the kernel): bf16 casts, per-
    # layer column-concat of the directions' W_ih, block-diag fused W_hh,
    # and a 128-column-padded Linear head.
    inputs = [x_flat]
    for layer in range(num_layer):
        ps = [params["lstm"][(layer, d)] for d in range(num_dir)]
        wih_cat = jnp.concatenate([p["w_ihT"] for p in ps],
                                  axis=1).astype(mm_dtype)       # (K, GD)
        bias_cat = jnp.concatenate([p["bias"] for p in ps],
                                   axis=1).astype(jnp.float32)   # (1, GD)
        whh_blk = jnp.zeros((D2, GD), mm_dtype)
        for d, p in enumerate(ps):
            whh_blk = whh_blk.at[d * H:(d + 1) * H,
                                 d * G:(d + 1) * G].set(
                                     p["w_hhT"].astype(mm_dtype))
        inputs += [wih_cat, bias_cat, whh_blk]
    lin_wT = jnp.zeros((D2, OD_pad), mm_dtype).at[:, :out_dim].set(
        params["lin_wT"].astype(mm_dtype))
    lin_b = jnp.zeros((1, OD_pad), jnp.float32).at[:, :out_dim].set(
        params["lin_b"].astype(jnp.float32))
    inputs += [lin_wT, lin_b]

    def full2d(shape):
        return pl.BlockSpec(shape, lambda i: (0, 0))

    in_specs = [full2d(a.shape) for a in inputs]

    kernel = _make_fused_kernel(T=T, Bp=Bp, H=H, num_layer=num_layer,
                                num_dir=num_dir, mm_dtype=mm_dtype)

    scratch_shapes = [pltpu.VMEM((T, Bp, GD), jnp.float32),
                      pltpu.VMEM((T, Bp, D2), jnp.float32)]

    # VMEM budget: inputs + output (double-buffered) + scratch, with headroom.
    in_bytes = sum(a.size * a.dtype.itemsize for a in inputs)
    out_bytes = T * Bp * OD_pad * 4
    scr_bytes = T * Bp * (GD + D2) * 4
    vmem_limit = int(min(128 << 20,
                         max(32 << 20,
                             2 * (in_bytes + out_bytes) + scr_bytes
                             + (4 << 20))))

    out_flat = pl.pallas_call(
        kernel,
        out_shape=jax.ShapeDtypeStruct((T * Bp, OD_pad), x.dtype),
        grid_spec=pltpu.PrefetchScalarGridSpec(
            num_scalar_prefetch=0,
            grid=(1,),
            in_specs=in_specs,
            out_specs=full2d((T * Bp, OD_pad)),
            scratch_shapes=scratch_shapes,
        ),
        compiler_params=pltpu.CompilerParams(
            dimension_semantics=("arbitrary",),
            vmem_limit_bytes=vmem_limit),
    )(*inputs)

    y = out_flat.reshape(T, Bp, OD_pad)[:, :B, :out_dim]
    return jnp.transpose(y, (1, 0, 2))      # (B, T, out_dim)


# -----------------------------------------------------------------------------
# Parameter init (deterministic, mimics PyTorch nn.LSTM / nn.Linear init)
# -----------------------------------------------------------------------------
def init_params(key, hidden_dim, num_layer, in_dim, out_dim, bidirect, dtype):
    num_dir = 2 if bidirect else 1
    k_lstm = 1.0 / math.sqrt(hidden_dim)
    params = {"lstm": {}}
    for layer in range(num_layer):
        layer_in = in_dim if layer == 0 else hidden_dim * num_dir
        for d in range(num_dir):
            key, k1, k2, k3, k4 = jax.random.split(key, 5)
            w_ih = jax.random.uniform(k1, (4 * hidden_dim, layer_in),
                                      minval=-k_lstm, maxval=k_lstm, dtype=dtype)
            w_hh = jax.random.uniform(k2, (4 * hidden_dim, hidden_dim),
                                      minval=-k_lstm, maxval=k_lstm, dtype=dtype)
            b_ih = jax.random.uniform(k3, (4 * hidden_dim,),
                                      minval=-k_lstm, maxval=k_lstm, dtype=dtype)
            b_hh = jax.random.uniform(k4, (4 * hidden_dim,),
                                      minval=-k_lstm, maxval=k_lstm, dtype=dtype)
            params["lstm"][(layer, d)] = {
                "w_ihT": w_ih.T,                         # (layer_in, 4H)
                "w_hhT": w_hh.T,                         # (H, 4H)
                "bias": (b_ih + b_hh).reshape(1, -1),    # (1, 4H)
            }
    lin_in = hidden_dim * num_dir
    k_lin = 1.0 / math.sqrt(lin_in)
    key, k1, k2 = jax.random.split(key, 3)
    lin_w = jax.random.uniform(k1, (out_dim, lin_in),
                               minval=-k_lin, maxval=k_lin, dtype=dtype)
    lin_b = jax.random.uniform(k2, (out_dim,),
                               minval=-k_lin, maxval=k_lin, dtype=dtype)
    params["lin_wT"] = lin_w.T                # (lin_in, out_dim)
    params["lin_b"] = lin_b.reshape(1, -1)    # (1, out_dim)
    return params


# -----------------------------------------------------------------------------
# Pure-JAX references (sanity checks)
# -----------------------------------------------------------------------------
def _ref_forward(x, params, *, hidden_dim, num_layer, bidirect, mm_dtype=None):
    """Reference. mm_dtype=None -> pure f32; bf16 -> mirrors kernel matmuls."""
    def mm(a, b):
        if mm_dtype is not None:
            a = a.astype(mm_dtype)
            b = b.astype(mm_dtype)
        return jnp.dot(a, b, preferred_element_type=jnp.float32)

    if x.ndim == 1:
        x = x.reshape(1, -1, 1)
    elif x.ndim == 2:
        x = x.reshape(*x.shape, 1)
    B, T, _ = x.shape
    H = hidden_dim
    num_dir = 2 if bidirect else 1
    h = jnp.transpose(x, (1, 0, 2)).astype(jnp.float32)   # (T, B, I)

    def run_layer(seq, p):
        xg = mm(seq, p["w_ihT"]) + p["bias"][0].astype(jnp.float32)

        def step(carry, xg_t):
            hh, cc = carry
            g = xg_t + mm(hh, p["w_hhT"])
            i = jax.nn.sigmoid(g[:, 0 * H:1 * H])
            f = jax.nn.sigmoid(g[:, 1 * H:2 * H])
            gg = jnp.tanh(g[:, 2 * H:3 * H])
            o = jax.nn.sigmoid(g[:, 3 * H:4 * H])
            cc = f * cc + i * gg
            hh = o * jnp.tanh(cc)
            return (hh, cc), hh

        init = (jnp.zeros((B, H), jnp.float32), jnp.zeros((B, H), jnp.float32))
        _, hs = jax.lax.scan(step, init, xg)
        return hs

    for layer in range(num_layer):
        outs = []
        for d in range(num_dir):
            p = params["lstm"][(layer, d)]
            seq = h if d == 0 else h[::-1]
            hs = run_layer(seq, p)
            if d == 1:
                hs = hs[::-1]
            outs.append(hs)
        h = outs[0] if num_dir == 1 else jnp.concatenate(outs, axis=-1)

    y = mm(h, params["lin_wT"]) + params["lin_b"][0].astype(jnp.float32)
    return jnp.transpose(y, (1, 0, 2))


# -----------------------------------------------------------------------------
if __name__ == "__main__":
    hidden_dim = 32
    num_layer = 2
    in_dim = 4
    out_dim = 8
    bidirect = True
    dtype = jnp.float32

    B, T = 2, 8

    key = jax.random.PRNGKey(0)
    key, pkey, xkey = jax.random.split(key, 3)
    params = init_params(pkey, hidden_dim, num_layer, in_dim, out_dim,
                         bidirect, dtype)
    x = jax.random.normal(xkey, (B, T, in_dim), dtype=dtype)

    fwd = jax.jit(functools.partial(tg_rnn_forward, params=params,
                                    hidden_dim=hidden_dim,
                                    num_layer=num_layer, bidirect=bidirect))
    y = jax.block_until_ready(fwd(x))
    assert y.shape == (B, T, out_dim)

    # Tight check vs. a reference that mirrors the kernel's bf16-operand /
    # f32-accumulate matmuls, plus a looser semantic check vs. pure f32.
    y_ref_bf = _ref_forward(x, params, hidden_dim=hidden_dim,
                            num_layer=num_layer, bidirect=bidirect,
                            mm_dtype=jnp.bfloat16)
    y_ref_f32 = _ref_forward(x, params, hidden_dim=hidden_dim,
                             num_layer=num_layer, bidirect=bidirect,
                             mm_dtype=None)
    assert jnp.allclose(y, y_ref_bf, rtol=5e-3, atol=5e-3)
    assert jnp.allclose(y, y_ref_f32, rtol=5e-2, atol=5e-2)

    print("KERNEL_OK")
</pallas_src>

<mosaic_0001>
module attributes {stable_mosaic.version = 11 : i64} {
  func.func @kernel(%arg0: i32, %arg1: memref<64x4xbf16, #tpu.memory_space<vmem>>, %arg2: memref<4x256xbf16, #tpu.memory_space<vmem>>, %arg3: memref<1x256xf32, #tpu.memory_space<vmem>>, %arg4: memref<64x256xbf16, #tpu.memory_space<vmem>>, %arg5: memref<64x256xbf16, #tpu.memory_space<vmem>>, %arg6: memref<1x256xf32, #tpu.memory_space<vmem>>, %arg7: memref<64x256xbf16, #tpu.memory_space<vmem>>, %arg8: memref<64x128xbf16, #tpu.memory_space<vmem>>, %arg9: memref<1x128xf32, #tpu.memory_space<vmem>>, %arg10: memref<64x128xf32, #tpu.memory_space<vmem>>, %arg11: memref<8x8x256xf32, #tpu.memory_space<vmem>>, %arg12: memref<8x8x64xf32, #tpu.memory_space<vmem>>) attributes {dimension_semantics = [#tpu.dimension_semantics<arbitrary>], iteration_bounds = array<i64: 1>, scalar_prefetch = 0 : i64, scratch_operands = 2 : i64, tpu.core_type = #tpu.core_type<tc>, window_params = [{pipeline_mode = #tpu.pipeline_mode<synchronous>, transform_indices = @transform_0, window_bounds = array<i64: 64, 4>}, {pipeline_mode = #tpu.pipeline_mode<synchronous>, transform_indices = @transform_1, window_bounds = array<i64: 4, 256>}, {pipeline_mode = #tpu.pipeline_mode<synchronous>, transform_indices = @transform_2, window_bounds = array<i64: 1, 256>}, {pipeline_mode = #tpu.pipeline_mode<synchronous>, transform_indices = @transform_3, window_bounds = array<i64: 64, 256>}, {pipeline_mode = #tpu.pipeline_mode<synchronous>, transform_indices = @transform_4, window_bounds = array<i64: 64, 256>}, {pipeline_mode = #tpu.pipeline_mode<synchronous>, transform_indices = @transform_5, window_bounds = array<i64: 1, 256>}, {pipeline_mode = #tpu.pipeline_mode<synchronous>, transform_indices = @transform_6, window_bounds = array<i64: 64, 256>}, {pipeline_mode = #tpu.pipeline_mode<synchronous>, transform_indices = @transform_7, window_bounds = array<i64: 64, 128>}, {pipeline_mode = #tpu.pipeline_mode<synchronous>, transform_indices = @transform_8, window_bounds = array<i64: 1, 128>}, {pipeline_mode = #tpu.pipeline_mode<synchronous>, transform_indices = @transform_9, window_bounds = array<i64: 64, 128>}]} {
    %c0 = arith.constant 0 : index
    %c0_0 = arith.constant 0 : index
    %0 = vector.load %arg1[%c0, %c0_0] : memref<64x4xbf16, #tpu.memory_space<vmem>>, vector<64x4xbf16>
    %c0_1 = arith.constant 0 : index
    %c0_2 = arith.constant 0 : index
    %1 = vector.load %arg2[%c0_1, %c0_2] : memref<4x256xbf16, #tpu.memory_space<vmem>>, vector<4x256xbf16>
    %cst = arith.constant dense<0.000000e+00> : vector<64x256xf32>
    %2 = tpu.matmul %0, %1, %cst {dimension_numbers = #tpu.dot_dimension_numbers<[1], [0], [0], [1], [0, 0, 1, 1], [], []>} : vector<64x4xbf16>, vector<4x256xbf16>, vector<64x256xf32> -> vector<64x256xf32>
    %c0_3 = arith.constant 0 : index
    %c0_4 = arith.constant 0 : index
    %3 = vector.load %arg3[%c0_3, %c0_4] : memref<1x256xf32, #tpu.memory_space<vmem>>, vector<1x256xf32>
    %4 = vector.broadcast %3 : vector<1x256xf32> to vector<64x256xf32>
    %5 = arith.addf %2, %4 : vector<64x256xf32>
    %6 = vector.shape_cast %5 : vector<64x256xf32> to vector<8x8x256xf32>
    %c0_5 = arith.constant 0 : index
    %c0_6 = arith.constant 0 : index
    %c0_7 = arith.constant 0 : index
    %7 = vector.load %arg11[%c0_5, %c0_6, %c0_7] : memref<8x8x256xf32, #tpu.memory_space<vmem>>, vector<8x8x256xf32>
    tpu.vector_store %arg11[%c0_5, %c0_6, %c0_7], %6 {strides = array<i32>} : memref<8x8x256xf32, #tpu.memory_space<vmem>>, vector<8x8x256xf32>,
    %c0_8 = arith.constant 0 : index
    %c0_9 = arith.constant 0 : index
    %8 = vector.load %arg4[%c0_8, %c0_9] : memref<64x256xbf16, #tpu.memory_space<vmem>>, vector<64x256xbf16>
    %cst_10 = arith.constant 0.000000e+00 : f32
    %9 = vector.broadcast %cst_10 : f32 to vector<8x64xf32>
    %c0_i32 = arith.constant 0 : i32
    %c7_i32 = arith.constant 7 : i32
    %10 = arith.subi %c7_i32, %c0_i32 : i32
    %11 = arith.index_cast %c0_i32 : i32 to index
    %c0_11 = arith.constant 0 : index
    %c0_12 = arith.constant 0 : index
    %12 = vector.load %arg11[%11, %c0_11, %c0_12] : memref<8x8x256xf32, #tpu.memory_space<vmem>>, vector<1x8x128xf32>
    %13 = vector.shape_cast %12 : vector<1x8x128xf32> to vector<8x128xf32>
    %14 = arith.index_cast %10 : i32 to index
    %c0_13 = arith.constant 0 : index
    %c128 = arith.constant 128 : index
    %15 = vector.load %arg11[%14, %c0_13, %c128] : memref<8x8x256xf32, #tpu.memory_space<vmem>>, vector<1x8x128xf32>
    %16 = vector.shape_cast %15 : vector<1x8x128xf32> to vector<8x128xf32>
    %17 = tpu.concatenate %13, %16 in 1 : vector<8x128xf32>, vector<8x128xf32> -> vector<8x256xf32>
    %18 = arith.truncf %9 : vector<8x64xf32> to vector<8x64xbf16>
    %cst_14 = arith.constant dense<0.000000e+00> : vector<8x256xf32>
    %19 = tpu.matmul %18, %8, %cst_14 {dimension_numbers = #tpu.dot_dimension_numbers<[1], [0], [0], [1], [0, 0, 1, 1], [], []>} : vector<8x64xbf16>, vector<64x256xbf16>, vector<8x256xf32> -> vector<8x256xf32>
    %20 = arith.addf %17, %19 : vector<8x256xf32>
    %21 = arith.negf %20 : vector<8x256xf32>
    %22 = math.exp %21 : vector<8x256xf32>
    %cst_15 = arith.constant 1.000000e+00 : f32
    %23 = vector.broadcast %cst_15 : f32 to vector<8x256xf32>
    %24 = arith.addf %23, %22 : vector<8x256xf32>
    %25 = arith.divf %23, %24 : vector<8x256xf32>
    %26 = math.tanh %20 : vector<8x256xf32>
    %27 = vector.extract_strided_slice %25 {offsets = [0, 0], sizes = [8, 32], strides = [1, 1]} : vector<8x256xf32> to vector<8x32xf32>
    %28 = vector.extract_strided_slice %25 {offsets = [0, 128], sizes = [8, 32], strides = [1, 1]} : vector<8x256xf32> to vector<8x32xf32>
    %29 = tpu.concatenate %27, %28 in 1 : vector<8x32xf32>, vector<8x32xf32> -> vector<8x64xf32>
    %30 = vector.extract_strided_slice %25 {offsets = [0, 32], sizes = [8, 32], strides = [1, 1]} : vector<8x256xf32> to vector<8x32xf32>
    %31 = vector.extract_strided_slice %25 {offsets = [0, 160], sizes = [8, 32], strides = [1, 1]} : vector<8x256xf32> to vector<8x32xf32>
    %32 = tpu.concatenate %30, %31 in 1 : vector<8x32xf32>, vector<8x32xf32> -> vector<8x64xf32>
    %33 = vector.extract_strided_slice %26 {offsets = [0, 64], sizes = [8, 32], strides = [1, 1]} : vector<8x256xf32> to vector<8x32xf32>
    %34 = vector.extract_strided_slice %26 {offsets = [0, 192], sizes = [8, 32], strides = [1, 1]} : vector<8x256xf32> to vector<8x32xf32>
    %35 = tpu.concatenate %33, %34 in 1 : vector<8x32xf32>, vector<8x32xf32> -> vector<8x64xf32>
    %36 = vector.extract_strided_slice %25 {offsets = [0, 96], sizes = [8, 32], strides = [1, 1]} : vector<8x256xf32> to vector<8x32xf32>
    %37 = vector.extract_strided_slice %25 {offsets = [0, 224], sizes = [8, 32], strides = [1, 1]} : vector<8x256xf32> to vector<8x32xf32>
    %38 = tpu.concatenate %36, %37 in 1 : vector<8x32xf32>, vector<8x32xf32> -> vector<8x64xf32>
    %39 = arith.mulf %32, %9 : vector<8x64xf32>
    %40 = arith.mulf %29, %35 : vector<8x64xf32>
    %41 = arith.addf %39, %40 : vector<8x64xf32>
    %42 = math.tanh %41 : vector<8x64xf32>
    %43 = arith.mulf %38, %42 : vector<8x64xf32>
    %44 = vector.extract_strided_slice %43 {offsets = [0, 0], sizes = [8, 32], strides = [1, 1]} : vector<8x64xf32> to vector<8x32xf32>
    %45 = arith.index_cast %c0_i32 : i32 to index
    %c0_16 = arith.constant 0 : index
    %c0_17 = arith.constant 0 : index
    %46 = vector.load %arg12[%45, %c0_16, %c0_17] : memref<8x8x64xf32, #tpu.memory_space<vmem>>, vector<1x8x32xf32>
    %47 = vector.shape_cast %46 : vector<1x8x32xf32> to vector<8x32xf32>
    %48 = vector.shape_cast %44 : vector<8x32xf32> to vector<1x8x32xf32>
    tpu.vector_store %arg12[%45, %c0_16, %c0_17], %48 {strides = array<i32>} : memref<8x8x64xf32, #tpu.memory_space<vmem>>, vector<1x8x32xf32>,
    %49 = vector.extract_strided_slice %43 {offsets = [0, 32], sizes = [8, 32], strides = [1, 1]} : vector<8x64xf32> to vector<8x32xf32>
    %50 = arith.index_cast %10 : i32 to index
    %c0_18 = arith.constant 0 : index
    %c32 = arith.constant 32 : index
    %51 = vector.load %arg12[%50, %c0_18, %c32] : memref<8x8x64xf32, #tpu.memory_space<vmem>>, vector<1x8x32xf32>
    %52 = vector.shape_cast %51 : vector<1x8x32xf32> to vector<8x32xf32>
    %53 = vector.shape_cast %49 : vector<8x32xf32> to vector<1x8x32xf32>
    tpu.vector_store %arg12[%50, %c0_18, %c32], %53 {strides = array<i32>} : memref<8x8x64xf32, #tpu.memory_space<vmem>>, vector<1x8x32xf32>,
    %c1_i32 = arith.constant 1 : i32
    %c7_i32_19 = arith.constant 7 : i32
    %54 = arith.subi %c7_i32_19, %c1_i32 : i32
    %55 = arith.index_cast %c1_i32 : i32 to index
    %c0_20 = arith.constant 0 : index
    %c0_21 = arith.constant 0 : index
    %56 = vector.load %arg11[%55, %c0_20, %c0_21] : memref<8x8x256xf32, #tpu.memory_space<vmem>>, vector<1x8x128xf32>
    %57 = vector.shape_cast %56 : vector<1x8x128xf32> to vector<8x128xf32>
    %58 = arith.index_cast %54 : i32 to index
    %c0_22 = arith.constant 0 : index
    %c128_23 = arith.constant 128 : index
    %59 = vector.load %arg11[%58, %c0_22, %c128_23] : memref<8x8x256xf32, #tpu.memory_space<vmem>>, vector<1x8x128xf32>
    %60 = vector.shape_cast %59 : vector<1x8x128xf32> to vector<8x128xf32>
    %61 = tpu.concatenate %57, %60 in 1 : vector<8x128xf32>, vector<8x128xf32> -> vector<8x256xf32>
    %62 = arith.truncf %43 : vector<8x64xf32> to vector<8x64xbf16>
    %cst_24 = arith.constant dense<0.000000e+00> : vector<8x256xf32>
    %63 = tpu.matmul %62, %8, %cst_24 {dimension_numbers = #tpu.dot_dimension_numbers<[1], [0], [0], [1], [0, 0, 1, 1], [], []>} : vector<8x64xbf16>, vector<64x256xbf16>, vector<8x256xf32> -> vector<8x256xf32>
    %64 = arith.addf %61, %63 : vector<8x256xf32>
    %65 = arith.negf %64 : vector<8x256xf32>
    %66 = math.exp %65 : vector<8x256xf32>
    %cst_25 = arith.constant 1.000000e+00 : f32
    %67 = vector.broadcast %cst_25 : f32 to vector<8x256xf32>
    %68 = arith.addf %67, %66 : vector<8x256xf32>
    %69 = arith.divf %67, %68 : vector<8x256xf32>
    %70 = math.tanh %64 : vector<8x256xf32>
    %71 = vector.extract_strided_slice %69 {offsets = [0, 0], sizes = [8, 32], strides = [1, 1]} : vector<8x256xf32> to vector<8x32xf32>
    %72 = vector.extract_strided_slice %69 {offsets = [0, 128], sizes = [8, 32], strides = [1, 1]} : vector<8x256xf32> to vector<8x32xf32>
    %73 = tpu.concatenate %71, %72 in 1 : vector<8x32xf32>, vector<8x32xf32> -> vector<8x64xf32>
    %74 = vector.extract_strided_slice %69 {offsets = [0, 32], sizes = [8, 32], strides = [1, 1]} : vector<8x256xf32> to vector<8x32xf32>
    %75 = vector.extract_strided_slice %69 {offsets = [0, 160], sizes = [8, 32], strides = [1, 1]} : vector<8x256xf32> to vector<8x32xf32>
    %76 = tpu.concatenate %74, %75 in 1 : vector<8x32xf32>, vector<8x32xf32> -> vector<8x64xf32>
    %77 = vector.extract_strided_slice %70 {offsets = [0, 64], sizes = [8, 32], strides = [1, 1]} : vector<8x256xf32> to vector<8x32xf32>
    %78 = vector.extract_strided_slice %70 {offsets = [0, 192], sizes = [8, 32], strides = [1, 1]} : vector<8x256xf32> to vector<8x32xf32>
    %79 = tpu.concatenate %77, %78 in 1 : vector<8x32xf32>, vector<8x32xf32> -> vector<8x64xf32>
    %80 = vector.extract_strided_slice %69 {offsets = [0, 96], sizes = [8, 32], strides = [1, 1]} : vector<8x256xf32> to vector<8x32xf32>
    %81 = vector.extract_strided_slice %69 {offsets = [0, 224], sizes = [8, 32], strides = [1, 1]} : vector<8x256xf32> to vector<8x32xf32>
    %82 = tpu.concatenate %80, %81 in 1 : vector<8x32xf32>, vector<8x32xf32> -> vector<8x64xf32>
    %83 = arith.mulf %76, %41 : vector<8x64xf32>
    %84 = arith.mulf %73, %79 : vector<8x64xf32>
    %85 = arith.addf %83, %84 : vector<8x64xf32>
    %86 = math.tanh %85 : vector<8x64xf32>
    %87 = arith.mulf %82, %86 : vector<8x64xf32>
    %88 = vector.extract_strided_slice %87 {offsets = [0, 0], sizes = [8, 32], strides = [1, 1]} : vector<8x64xf32> to vector<8x32xf32>
    %89 = arith.index_cast %c1_i32 : i32 to index
    %c0_26 = arith.constant 0 : index
    %c0_27 = arith.constant 0 : index
    %90 = vector.load %arg12[%89, %c0_26, %c0_27] : memref<8x8x64xf32, #tpu.memory_space<vmem>>, vector<1x8x32xf32>
    %91 = vector.shape_cast %90 : vector<1x8x32xf32> to vector<8x32xf32>
    %92 = vector.shape_cast %88 : vector<8x32xf32> to vector<1x8x32xf32>
    tpu.vector_store %arg12[%89, %c0_26, %c0_27], %92 {strides = array<i32>} : memref<8x8x64xf32, #tpu.memory_space<vmem>>, vector<1x8x32xf32>,
    %93 = vector.extract_strided_slice %87 {offsets = [0, 32], sizes = [8, 32], strides = [1, 1]} : vector<8x64xf32> to vector<8x32xf32>
    %94 = arith.index_cast %54 : i32 to index
    %c0_28 = arith.constant 0 : index
    %c32_29 = arith.constant 32 : index
    %95 = vector.load %arg12[%94, %c0_28, %c32_29] : memref<8x8x64xf32, #tpu.memory_space<vmem>>, vector<1x8x32xf32>
    %96 = vector.shape_cast %95 : vector<1x8x32xf32> to vector<8x32xf32>
    %97 = vector.shape_cast %93 : vector<8x32xf32> to vector<1x8x32xf32>
    tpu.vector_store %arg12[%94, %c0_28, %c32_29], %97 {strides = array<i32>} : memref<8x8x64xf32, #tpu.memory_space<vmem>>, vector<1x8x32xf32>,
    %c2_i32 = arith.constant 2 : i32
    %c7_i32_30 = arith.constant 7 : i32
    %98 = arith.subi %c7_i32_30, %c2_i32 : i32
    %99 = arith.index_cast %c2_i32 : i32 to index
    %c0_31 = arith.constant 0 : index
    %c0_32 = arith.constant 0 : index
    %100 = vector.load %arg11[%99, %c0_31, %c0_32] : memref<8x8x256xf32, #tpu.memory_space<vmem>>, vector<1x8x128xf32>
    %101 = vector.shape_cast %100 : vector<1x8x128xf32> to vector<8x128xf32>
    %102 = arith.index_cast %98 : i32 to index
    %c0_33 = arith.constant 0 : index
    %c128_34 = arith.constant 128 : index
    %103 = vector.load %arg11[%102, %c0_33, %c128_34] : memref<8x8x256xf32, #tpu.memory_space<vmem>>, vector<1x8x128xf32>
    %104 = vector.shape_cast %103 : vector<1x8x128xf32> to vector<8x128xf32>
    %105 = tpu.concatenate %101, %104 in 1 : vector<8x128xf32>, vector<8x128xf32> -> vector<8x256xf32>
    %106 = arith.truncf %87 : vector<8x64xf32> to vector<8x64xbf16>
    %cst_35 = arith.constant dense<0.000000e+00> : vector<8x256xf32>
    %107 = tpu.matmul %106, %8, %cst_35 {dimension_numbers = #tpu.dot_dimension_numbers<[1], [0], [0], [1], [0, 0, 1, 1], [], []>} : vector<8x64xbf16>, vector<64x256xbf16>, vector<8x256xf32> -> vector<8x256xf32>
    %108 = arith.addf %105, %107 : vector<8x256xf32>
    %109 = arith.negf %108 : vector<8x256xf32>
    %110 = math.exp %109 : vector<8x256xf32>
    %cst_36 = arith.constant 1.000000e+00 : f32
    %111 = vector.broadcast %cst_36 : f32 to vector<8x256xf32>
    %112 = arith.addf %111, %110 : vector<8x256xf32>
    %113 = arith.divf %111, %112 : vector<8x256xf32>
    %114 = math.tanh %108 : vector<8x256xf32>
    %115 = vector.extract_strided_slice %113 {offsets = [0, 0], sizes = [8, 32], strides = [1, 1]} : vector<8x256xf32> to vector<8x32xf32>
    %116 = vector.extract_strided_slice %113 {offsets = [0, 128], sizes = [8, 32], strides = [1, 1]} : vector<8x256xf32> to vector<8x32xf32>
    %117 = tpu.concatenate %115, %116 in 1 : vector<8x32xf32>, vector<8x32xf32> -> vector<8x64xf32>
    %118 = vector.extract_strided_slice %113 {offsets = [0, 32], sizes = [8, 32], strides = [1, 1]} : vector<8x256xf32> to vector<8x32xf32>
    %119 = vector.extract_strided_slice %113 {offsets = [0, 160], sizes = [8, 32], strides = [1, 1]} : vector<8x256xf32> to vector<8x32xf32>
    %120 = tpu.concatenate %118, %119 in 1 : vector<8x32xf32>, vector<8x32xf32> -> vector<8x64xf32>
    %121 = vector.extract_strided_slice %114 {offsets = [0, 64], sizes = [8, 32], strides = [1, 1]} : vector<8x256xf32> to vector<8x32xf32>
    %122 = vector.extract_strided_slice %114 {offsets = [0, 192], sizes = [8, 32], strides = [1, 1]} : vector<8x256xf32> to vector<8x32xf32>
    %123 = tpu.concatenate %121, %122 in 1 : vector<8x32xf32>, vector<8x32xf32> -> vector<8x64xf32>
    %124 = vector.extract_strided_slice %113 {offsets = [0, 96], sizes = [8, 32], strides = [1, 1]} : vector<8x256xf32> to vector<8x32xf32>
    %125 = vector.extract_strided_slice %113 {offsets = [0, 224], sizes = [8, 32], strides = [1, 1]} : vector<8x256xf32> to vector<8x32xf32>
    %126 = tpu.concatenate %124, %125 in 1 : vector<8x32xf32>, vector<8x32xf32> -> vector<8x64xf32>
    %127 = arith.mulf %120, %85 : vector<8x64xf32>
    %128 = arith.mulf %117, %123 : vector<8x64xf32>
    %129 = arith.addf %127, %128 : vector<8x64xf32>
    %130 = math.tanh %129 : vector<8x64xf32>
    %131 = arith.mulf %126, %130 : vector<8x64xf32>
    %132 = vector.extract_strided_slice %131 {offsets = [0, 0], sizes = [8, 32], strides = [1, 1]} : vector<8x64xf32> to vector<8x32xf32>
    %133 = arith.index_cast %c2_i32 : i32 to index
    %c0_37 = arith.constant 0 : index
    %c0_38 = arith.constant 0 : index
    %134 = vector.load %arg12[%133, %c0_37, %c0_38] : memref<8x8x64xf32, #tpu.memory_space<vmem>>, vector<1x8x32xf32>
    %135 = vector.shape_cast %134 : vector<1x8x32xf32> to vector<8x32xf32>
    %136 = vector.shape_cast %132 : vector<8x32xf32> to vector<1x8x32xf32>
    tpu.vector_store %arg12[%133, %c0_37, %c0_38], %136 {strides = array<i32>} : memref<8x8x64xf32, #tpu.memory_space<vmem>>, vector<1x8x32xf32>,
    %137 = vector.extract_strided_slice %131 {offsets = [0, 32], sizes = [8, 32], strides = [1, 1]} : vector<8x64xf32> to vector<8x32xf32>
    %138 = arith.index_cast %98 : i32 to index
    %c0_39 = arith.constant 0 : index
    %c32_40 = arith.constant 32 : index
    %139 = vector.load %arg12[%138, %c0_39, %c32_40] : memref<8x8x64xf32, #tpu.memory_space<vmem>>, vector<1x8x32xf32>
    %140 = vector.shape_cast %139 : vector<1x8x32xf32> to vector<8x32xf32>
    %141 = vector.shape_cast %137 : vector<8x32xf32> to vector<1x8x32xf32>
    tpu.vector_store %arg12[%138, %c0_39, %c32_40], %141 {strides = array<i32>} : memref<8x8x64xf32, #tpu.memory_space<vmem>>, vector<1x8x32xf32>,
    %c3_i32 = arith.constant 3 : i32
    %c7_i32_41 = arith.constant 7 : i32
    %142 = arith.subi %c7_i32_41, %c3_i32 : i32
    %143 = arith.index_cast %c3_i32 : i32 to index
    %c0_42 = arith.constant 0 : index
    %c0_43 = arith.constant 0 : index
    %144 = vector.load %arg11[%143, %c0_42, %c0_43] : memref<8x8x256xf32, #tpu.memory_space<vmem>>, vector<1x8x128xf32>
    %145 = vector.shape_cast %144 : vector<1x8x128xf32> to vector<8x128xf32>
    %146 = arith.index_cast %142 : i32 to index
    %c0_44 = arith.constant 0 : index
    %c128_45 = arith.constant 128 : index
    %147 = vector.load %arg11[%146, %c0_44, %c128_45] : memref<8x8x256xf32, #tpu.memory_space<vmem>>, vector<1x8x128xf32>
    %148 = vector.shape_cast %147 : vector<1x8x128xf32> to vector<8x128xf32>
    %149 = tpu.concatenate %145, %148 in 1 : vector<8x128xf32>, vector<8x128xf32> -> vector<8x256xf32>
    %150 = arith.truncf %131 : vector<8x64xf32> to vector<8x64xbf16>
    %cst_46 = arith.constant dense<0.000000e+00> : vector<8x256xf32>
    %151 = tpu.matmul %150, %8, %cst_46 {dimension_numbers = #tpu.dot_dimension_numbers<[1], [0], [0], [1], [0, 0, 1, 1], [], []>} : vector<8x64xbf16>, vector<64x256xbf16>, vector<8x256xf32> -> vector<8x256xf32>
    %152 = arith.addf %149, %151 : vector<8x256xf32>
    %153 = arith.negf %152 : vector<8x256xf32>
    %154 = math.exp %153 : vector<8x256xf32>
    %cst_47 = arith.constant 1.000000e+00 : f32
    %155 = vector.broadcast %cst_47 : f32 to vector<8x256xf32>
    %156 = arith.addf %155, %154 : vector<8x256xf32>
    %157 = arith.divf %155, %156 : vector<8x256xf32>
    %158 = math.tanh %152 : vector<8x256xf32>
    %159 = vector.extract_strided_slice %157 {offsets = [0, 0], sizes = [8, 32], strides = [1, 1]} : vector<8x256xf32> to vector<8x32xf32>
    %160 = vector.extract_strided_slice %157 {offsets = [0, 128], sizes = [8, 32], strides = [1, 1]} : vector<8x256xf32> to vector<8x32xf32>
    %161 = tpu.concatenate %159, %160 in 1 : vector<8x32xf32>, vector<8x32xf32> -> vector<8x64xf32>
    %162 = vector.extract_strided_slice %157 {offsets = [0, 32], sizes = [8, 32], strides = [1, 1]} : vector<8x256xf32> to vector<8x32xf32>
    %163 = vector.extract_strided_slice %157 {offsets = [0, 160], sizes = [8, 32], strides = [1, 1]} : vector<8x256xf32> to vector<8x32xf32>
    %164 = tpu.concatenate %162, %163 in 1 : vector<8x32xf32>, vector<8x32xf32> -> vector<8x64xf32>
    %165 = vector.extract_strided_slice %158 {offsets = [0, 64], sizes = [8, 32], strides = [1, 1]} : vector<8x256xf32> to vector<8x32xf32>
    %166 = vector.extract_strided_slice %158 {offsets = [0, 192], sizes = [8, 32], strides = [1, 1]} : vector<8x256xf32> to vector<8x32xf32>
    %167 = tpu.concatenate %165, %166 in 1 : vector<8x32xf32>, vector<8x32xf32> -> vector<8x64xf32>
    %168 = vector.extract_strided_slice %157 {offsets = [0, 96], sizes = [8, 32], strides = [1, 1]} : vector<8x256xf32> to vector<8x32xf32>
    %169 = vector.extract_strided_slice %157 {offsets = [0, 224], sizes = [8, 32], strides = [1, 1]} : vector<8x256xf32> to vector<8x32xf32>
    %170 = tpu.concatenate %168, %169 in 1 : vector<8x32xf32>, vector<8x32xf32> -> vector<8x64xf32>
    %171 = arith.mulf %164, %129 : vector<8x64xf32>
    %172 = arith.mulf %161, %167 : vector<8x64xf32>
    %173 = arith.addf %171, %172 : vector<8x64xf32>
    %174 = math.tanh %173 : vector<8x64xf32>
    %175 = arith.mulf %170, %174 : vector<8x64xf32>
    %176 = vector.extract_strided_slice %175 {offsets = [0, 0], sizes = [8, 32], strides = [1, 1]} : vector<8x64xf32> to vector<8x32xf32>
    %177 = arith.index_cast %c3_i32 : i32 to index
    %c0_48 = arith.constant 0 : index
    %c0_49 = arith.constant 0 : index
    %178 = vector.load %arg12[%177, %c0_48, %c0_49] : memref<8x8x64xf32, #tpu.memory_space<vmem>>, vector<1x8x32xf32>
    %179 = vector.shape_cast %178 : vector<1x8x32xf32> to vector<8x32xf32>
    %180 = vector.shape_cast %176 : vector<8x32xf32> to vector<1x8x32xf32>
    tpu.vector_store %arg12[%177, %c0_48, %c0_49], %180 {strides = array<i32>} : memref<8x8x64xf32, #tpu.memory_space<vmem>>, vector<1x8x32xf32>,
    %181 = vector.extract_strided_slice %175 {offsets = [0, 32], sizes = [8, 32], strides = [1, 1]} : vector<8x64xf32> to vector<8x32xf32>
    %182 = arith.index_cast %142 : i32 to index
    %c0_50 = arith.constant 0 : index
    %c32_51 = arith.constant 32 : index
    %183 = vector.load %arg12[%182, %c0_50, %c32_51] : memref<8x8x64xf32, #tpu.memory_space<vmem>>, vector<1x8x32xf32>
    %184 = vector.shape_cast %183 : vector<1x8x32xf32> to vector<8x32xf32>
    %185 = vector.shape_cast %181 : vector<8x32xf32> to vector<1x8x32xf32>
    tpu.vector_store %arg12[%182, %c0_50, %c32_51], %185 {strides = array<i32>} : memref<8x8x64xf32, #tpu.memory_space<vmem>>, vector<1x8x32xf32>,
    %c4_i32 = arith.constant 4 : i32
    %c7_i32_52 = arith.constant 7 : i32
    %186 = arith.subi %c7_i32_52, %c4_i32 : i32
    %187 = arith.index_cast %c4_i32 : i32 to index
    %c0_53 = arith.constant 0 : index
    %c0_54 = arith.constant 0 : index
    %188 = vector.load %arg11[%187, %c0_53, %c0_54] : memref<8x8x256xf32, #tpu.memory_space<vmem>>, vector<1x8x128xf32>
    %189 = vector.shape_cast %188 : vector<1x8x128xf32> to vector<8x128xf32>
    %190 = arith.index_cast %186 : i32 to index
    %c0_55 = arith.constant 0 : index
    %c128_56 = arith.constant 128 : index
    %191 = vector.load %arg11[%190, %c0_55, %c128_56] : memref<8x8x256xf32, #tpu.memory_space<vmem>>, vector<1x8x128xf32>
    %192 = vector.shape_cast %191 : vector<1x8x128xf32> to vector<8x128xf32>
    %193 = tpu.concatenate %189, %192 in 1 : vector<8x128xf32>, vector<8x128xf32> -> vector<8x256xf32>
    %194 = arith.truncf %175 : vector<8x64xf32> to vector<8x64xbf16>
    %cst_57 = arith.constant dense<0.000000e+00> : vector<8x256xf32>
    %195 = tpu.matmul %194, %8, %cst_57 {dimension_numbers = #tpu.dot_dimension_numbers<[1], [0], [0], [1], [0, 0, 1, 1], [], []>} : vector<8x64xbf16>, vector<64x256xbf16>, vector<8x256xf32> -> vector<8x256xf32>
    %196 = arith.addf %193, %195 : vector<8x256xf32>
    %197 = arith.negf %196 : vector<8x256xf32>
    %198 = math.exp %197 : vector<8x256xf32>
    %cst_58 = arith.constant 1.000000e+00 : f32
    %199 = vector.broadcast %cst_58 : f32 to vector<8x256xf32>
    %200 = arith.addf %199, %198 : vector<8x256xf32>
    %201 = arith.divf %199, %200 : vector<8x256xf32>
    %202 = math.tanh %196 : vector<8x256xf32>
    %203 = vector.extract_strided_slice %201 {offsets = [0, 0], sizes = [8, 32], strides = [1, 1]} : vector<8x256xf32> to vector<8x32xf32>
    %204 = vector.extract_strided_slice %201 {offsets = [0, 128], sizes = [8, 32], strides = [1, 1]} : vector<8x256xf32> to vector<8x32xf32>
    %205 = tpu.concatenate %203, %204 in 1 : vector<8x32xf32>, vector<8x32xf32> -> vector<8x64xf32>
    %206 = vector.extract_strided_slice %201 {offsets = [0, 32], sizes = [8, 32], strides = [1, 1]} : vector<8x256xf32> to vector<8x32xf32>
    %207 = vector.extract_strided_slice %201 {offsets = [0, 160], sizes = [8, 32], strides = [1, 1]} : vector<8x256xf32> to vector<8x32xf32>
    %208 = tpu.concatenate %206, %207 in 1 : vector<8x32xf32>, vector<8x32xf32> -> vector<8x64xf32>
    %209 = vector.extract_strided_slice %202 {offsets = [0, 64], sizes = [8, 32], strides = [1, 1]} : vector<8x256xf32> to vector<8x32xf32>
    %210 = vector.extract_strided_slice %202 {offsets = [0, 192], sizes = [8, 32], strides = [1, 1]} : vector<8x256xf32> to vector<8x32xf32>
    %211 = tpu.concatenate %209, %210 in 1 : vector<8x32xf32>, vector<8x32xf32> -> vector<8x64xf32>
    %212 = vector.extract_strided_slice %201 {offsets = [0, 96], sizes = [8, 32], strides = [1, 1]} : vector<8x256xf32> to vector<8x32xf32>
    %213 = vector.extract_strided_slice %201 {offsets = [0, 224], sizes = [8, 32], strides = [1, 1]} : vector<8x256xf32> to vector<8x32xf32>
    %214 = tpu.concatenate %212, %213 in 1 : vector<8x32xf32>, vector<8x32xf32> -> vector<8x64xf32>
    %215 = arith.mulf %208, %173 : vector<8x64xf32>
    %216 = arith.mulf %205, %211 : vector<8x64xf32>
    %217 = arith.addf %215, %216 : vector<8x64xf32>
    %218 = math.tanh %217 : vector<8x64xf32>
    %219 = arith.mulf %214, %218 : vector<8x64xf32>
    %220 = vector.extract_strided_slice %219 {offsets = [0, 0], sizes = [8, 32], strides = [1, 1]} : vector<8x64xf32> to vector<8x32xf32>
    %221 = arith.index_cast %c4_i32 : i32 to index
    %c0_59 = arith.constant 0 : index
    %c0_60 = arith.constant 0 : index
    %222 = vector.load %arg12[%221, %c0_59, %c0_60] : memref<8x8x64xf32, #tpu.memory_space<vmem>>, vector<1x8x32xf32>
    %223 = vector.shape_cast %222 : vector<1x8x32xf32> to vector<8x32xf32>
    %224 = vector.shape_cast %220 : vector<8x32xf32> to vector<1x8x32xf32>
    tpu.vector_store %arg12[%221, %c0_59, %c0_60], %224 {strides = array<i32>} : memref<8x8x64xf32, #tpu.memory_space<vmem>>, vector<1x8x32xf32>,
    %225 = vector.extract_strided_slice %219 {offsets = [0, 32], sizes = [8, 32], strides = [1, 1]} : vector<8x64xf32> to vector<8x32xf32>
    %226 = arith.index_cast %186 : i32 to index
    %c0_61 = arith.constant 0 : index
    %c32_62 = arith.constant 32 : index
    %227 = vector.load %arg12[%226, %c0_61, %c32_62] : memref<8x8x64xf32, #tpu.memory_space<vmem>>, vector<1x8x32xf32>
    %228 = vector.shape_cast %227 : vector<1x8x32xf32> to vector<8x32xf32>
    %229 = vector.shape_cast %225 : vector<8x32xf32> to vector<1x8x32xf32>
    tpu.vector_store %arg12[%226, %c0_61, %c32_62], %229 {strides = array<i32>} : memref<8x8x64xf32, #tpu.memory_space<vmem>>, vector<1x8x32xf32>,
    %c5_i32 = arith.constant 5 : i32
    %c7_i32_63 = arith.constant 7 : i32
    %230 = arith.subi %c7_i32_63, %c5_i32 : i32
    %231 = arith.index_cast %c5_i32 : i32 to index
    %c0_64 = arith.constant 0 : index
    %c0_65 = arith.constant 0 : index
    %232 = vector.load %arg11[%231, %c0_64, %c0_65] : memref<8x8x256xf32, #tpu.memory_space<vmem>>, vector<1x8x128xf32>
    %233 = vector.shape_cast %232 : vector<1x8x128xf32> to vector<8x128xf32>
    %234 = arith.index_cast %230 : i32 to index
    %c0_66 = arith.constant 0 : index
    %c128_67 = arith.constant 128 : index
    %235 = vector.load %arg11[%234, %c0_66, %c128_67] : memref<8x8x256xf32, #tpu.memory_space<vmem>>, vector<1x8x128xf32>
    %236 = vector.shape_cast %235 : vector<1x8x128xf32> to vector<8x128xf32>
    %237 = tpu.concatenate %233, %236 in 1 : vector<8x128xf32>, vector<8x128xf32> -> vector<8x256xf32>
    %238 = arith.truncf %219 : vector<8x64xf32> to vector<8x64xbf16>
    %cst_68 = arith.constant dense<0.000000e+00> : vector<8x256xf32>
    %239 = tpu.matmul %238, %8, %cst_68 {dimension_numbers = #tpu.dot_dimension_numbers<[1], [0], [0], [1], [0, 0, 1, 1], [], []>} : vector<8x64xbf16>, vector<64x256xbf16>, vector<8x256xf32> -> vector<8x256xf32>
    %240 = arith.addf %237, %239 : vector<8x256xf32>
    %241 = arith.negf %240 : vector<8x256xf32>
    %242 = math.exp %241 : vector<8x256xf32>
    %cst_69 = arith.constant 1.000000e+00 : f32
    %243 = vector.broadcast %cst_69 : f32 to vector<8x256xf32>
    %244 = arith.addf %243, %242 : vector<8x256xf32>
    %245 = arith.divf %243, %244 : vector<8x256xf32>
    %246 = math.tanh %240 : vector<8x256xf32>
    %247 = vector.extract_strided_slice %245 {offsets = [0, 0], sizes = [8, 32], strides = [1, 1]} : vector<8x256xf32> to vector<8x32xf32>
    %248 = vector.extract_strided_slice %245 {offsets = [0, 128], sizes = [8, 32], strides = [1, 1]} : vector<8x256xf32> to vector<8x32xf32>
    %249 = tpu.concatenate %247, %248 in 1 : vector<8x32xf32>, vector<8x32xf32> -> vector<8x64xf32>
    %250 = vector.extract_strided_slice %245 {offsets = [0, 32], sizes = [8, 32], strides = [1, 1]} : vector<8x256xf32> to vector<8x32xf32>
    %251 = vector.extract_strided_slice %245 {offsets = [0, 160], sizes = [8, 32], strides = [1, 1]} : vector<8x256xf32> to vector<8x32xf32>
    %252 = tpu.concatenate %250, %251 in 1 : vector<8x32xf32>, vector<8x32xf32> -> vector<8x64xf32>
    %253 = vector.extract_strided_slice %246 {offsets = [0, 64], sizes = [8, 32], strides = [1, 1]} : vector<8x256xf32> to vector<8x32xf32>
    %254 = vector.extract_strided_slice %246 {offsets = [0, 192], sizes = [8, 32], strides = [1, 1]} : vector<8x256xf32> to vector<8x32xf32>
    %255 = tpu.concatenate %253, %254 in 1 : vector<8x32xf32>, vector<8x32xf32> -> vector<8x64xf32>
    %256 = vector.extract_strided_slice %245 {offsets = [0, 96], sizes = [8, 32], strides = [1, 1]} : vector<8x256xf32> to vector<8x32xf32>
    %257 = vector.extract_strided_slice %245 {offsets = [0, 224], sizes = [8, 32], strides = [1, 1]} : vector<8x256xf32> to vector<8x32xf32>
    %258 = tpu.concatenate %256, %257 in 1 : vector<8x32xf32>, vector<8x32xf32> -> vector<8x64xf32>
    %259 = arith.mulf %252, %217 : vector<8x64xf32>
    %260 = arith.mulf %249, %255 : vector<8x64xf32>
    %261 = arith.addf %259, %260 : vector<8x64xf32>
    %262 = math.tanh %261 : vector<8x64xf32>
    %263 = arith.mulf %258, %262 : vector<8x64xf32>
    %264 = vector.extract_strided_slice %263 {offsets = [0, 0], sizes = [8, 32], strides = [1, 1]} : vector<8x64xf32> to vector<8x32xf32>
    %265 = arith.index_cast %c5_i32 : i32 to index
    %c0_70 = arith.constant 0 : index
    %c0_71 = arith.constant 0 : index
    %266 = vector.load %arg12[%265, %c0_70, %c0_71] : memref<8x8x64xf32, #tpu.memory_space<vmem>>, vector<1x8x32xf32>
    %267 = vector.shape_cast %266 : vector<1x8x32xf32> to vector<8x32xf32>
    %268 = vector.shape_cast %264 : vector<8x32xf32> to vector<1x8x32xf32>
    tpu.vector_store %arg12[%265, %c0_70, %c0_71], %268 {strides = array<i32>} : memref<8x8x64xf32, #tpu.memory_space<vmem>>, vector<1x8x32xf32>,
    %269 = vector.extract_strided_slice %263 {offsets = [0, 32], sizes = [8, 32], strides = [1, 1]} : vector<8x64xf32> to vector<8x32xf32>
    %270 = arith.index_cast %230 : i32 to index
    %c0_72 = arith.constant 0 : index
    %c32_73 = arith.constant 32 : index
    %271 = vector.load %arg12[%270, %c0_72, %c32_73] : memref<8x8x64xf32, #tpu.memory_space<vmem>>, vector<1x8x32xf32>
    %272 = vector.shape_cast %271 : vector<1x8x32xf32> to vector<8x32xf32>
    %273 = vector.shape_cast %269 : vector<8x32xf32> to vector<1x8x32xf32>
    tpu.vector_store %arg12[%270, %c0_72, %c32_73], %273 {strides = array<i32>} : memref<8x8x64xf32, #tpu.memory_space<vmem>>, vector<1x8x32xf32>,
    %c6_i32 = arith.constant 6 : i32
    %c7_i32_74 = arith.constant 7 : i32
    %274 = arith.subi %c7_i32_74, %c6_i32 : i32
    %275 = arith.index_cast %c6_i32 : i32 to index
    %c0_75 = arith.constant 0 : index
    %c0_76 = arith.constant 0 : index
    %276 = vector.load %arg11[%275, %c0_75, %c0_76] : memref<8x8x256xf32, #tpu.memory_space<vmem>>, vector<1x8x128xf32>
    %277 = vector.shape_cast %276 : vector<1x8x128xf32> to vector<8x128xf32>
    %278 = arith.index_cast %274 : i32 to index
    %c0_77 = arith.constant 0 : index
    %c128_78 = arith.constant 128 : index
    %279 = vector.load %arg11[%278, %c0_77, %c128_78] : memref<8x8x256xf32, #tpu.memory_space<vmem>>, vector<1x8x128xf32>
    %280 = vector.shape_cast %279 : vector<1x8x128xf32> to vector<8x128xf32>
    %281 = tpu.concatenate %277, %280 in 1 : vector<8x128xf32>, vector<8x128xf32> -> vector<8x256xf32>
    %282 = arith.truncf %263 : vector<8x64xf32> to vector<8x64xbf16>
    %cst_79 = arith.constant dense<0.000000e+00> : vector<8x256xf32>
    %283 = tpu.matmul %282, %8, %cst_79 {dimension_numbers = #tpu.dot_dimension_numbers<[1], [0], [0], [1], [0, 0, 1, 1], [], []>} : vector<8x64xbf16>, vector<64x256xbf16>, vector<8x256xf32> -> vector<8x256xf32>
    %284 = arith.addf %281, %283 : vector<8x256xf32>
    %285 = arith.negf %284 : vector<8x256xf32>
    %286 = math.exp %285 : vector<8x256xf32>
    %cst_80 = arith.constant 1.000000e+00 : f32
    %287 = vector.broadcast %cst_80 : f32 to vector<8x256xf32>
    %288 = arith.addf %287, %286 : vector<8x256xf32>
    %289 = arith.divf %287, %288 : vector<8x256xf32>
    %290 = math.tanh %284 : vector<8x256xf32>
    %291 = vector.extract_strided_slice %289 {offsets = [0, 0], sizes = [8, 32], strides = [1, 1]} : vector<8x256xf32> to vector<8x32xf32>
    %292 = vector.extract_strided_slice %289 {offsets = [0, 128], sizes = [8, 32], strides = [1, 1]} : vector<8x256xf32> to vector<8x32xf32>
    %293 = tpu.concatenate %291, %292 in 1 : vector<8x32xf32>, vector<8x32xf32> -> vector<8x64xf32>
    %294 = vector.extract_strided_slice %289 {offsets = [0, 32], sizes = [8, 32], strides = [1, 1]} : vector<8x256xf32> to vector<8x32xf32>
    %295 = vector.extract_strided_slice %289 {offsets = [0, 160], sizes = [8, 32], strides = [1, 1]} : vector<8x256xf32> to vector<8x32xf32>
    %296 = tpu.concatenate %294, %295 in 1 : vector<8x32xf32>, vector<8x32xf32> -> vector<8x64xf32>
    %297 = vector.extract_strided_slice %290 {offsets = [0, 64], sizes = [8, 32], strides = [1, 1]} : vector<8x256xf32> to vector<8x32xf32>
    %298 = vector.extract_strided_slice %290 {offsets = [0, 192], sizes = [8, 32], strides = [1, 1]} : vector<8x256xf32> to vector<8x32xf32>
    %299 = tpu.concatenate %297, %298 in 1 : vector<8x32xf32>, vector<8x32xf32> -> vector<8x64xf32>
    %300 = vector.extract_strided_slice %289 {offsets = [0, 96], sizes = [8, 32], strides = [1, 1]} : vector<8x256xf32> to vector<8x32xf32>
    %301 = vector.extract_strided_slice %289 {offsets = [0, 224], sizes = [8, 32], strides = [1, 1]} : vector<8x256xf32> to vector<8x32xf32>
    %302 = tpu.concatenate %300, %301 in 1 : vector<8x32xf32>, vector<8x32xf32> -> vector<8x64xf32>
    %303 = arith.mulf %296, %261 : vector<8x64xf32>
    %304 = arith.mulf %293, %299 : vector<8x64xf32>
    %305 = arith.addf %303, %304 : vector<8x64xf32>
    %306 = math.tanh %305 : vector<8x64xf32>
    %307 = arith.mulf %302, %306 : vector<8x64xf32>
    %308 = vector.extract_strided_slice %307 {offsets = [0, 0], sizes = [8, 32], strides = [1, 1]} : vector<8x64xf32> to vector<8x32xf32>
    %309 = arith.index_cast %c6_i32 : i32 to index
    %c0_81 = arith.constant 0 : index
    %c0_82 = arith.constant 0 : index
    %310 = vector.load %arg12[%309, %c0_81, %c0_82] : memref<8x8x64xf32, #tpu.memory_space<vmem>>, vector<1x8x32xf32>
    %311 = vector.shape_cast %310 : vector<1x8x32xf32> to vector<8x32xf32>
    %312 = vector.shape_cast %308 : vector<8x32xf32> to vector<1x8x32xf32>
    tpu.vector_store %arg12[%309, %c0_81, %c0_82], %312 {strides = array<i32>} : memref<8x8x64xf32, #tpu.memory_space<vmem>>, vector<1x8x32xf32>,
    %313 = vector.extract_strided_slice %307 {offsets = [0, 32], sizes = [8, 32], strides = [1, 1]} : vector<8x64xf32> to vector<8x32xf32>
    %314 = arith.index_cast %274 : i32 to index
    %c0_83 = arith.constant 0 : index
    %c32_84 = arith.constant 32 : index
    %315 = vector.load %arg12[%314, %c0_83, %c32_84] : memref<8x8x64xf32, #tpu.memory_space<vmem>>, vector<1x8x32xf32>
    %316 = vector.shape_cast %315 : vector<1x8x32xf32> to vector<8x32xf32>
    %317 = vector.shape_cast %313 : vector<8x32xf32> to vector<1x8x32xf32>
    tpu.vector_store %arg12[%314, %c0_83, %c32_84], %317 {strides = array<i32>} : memref<8x8x64xf32, #tpu.memory_space<vmem>>, vector<1x8x32xf32>,
    %c7_i32_85 = arith.constant 7 : i32
    %c7_i32_86 = arith.constant 7 : i32
    %318 = arith.subi %c7_i32_86, %c7_i32_85 : i32
    %319 = arith.index_cast %c7_i32_85 : i32 to index
    %c0_87 = arith.constant 0 : index
    %c0_88 = arith.constant 0 : index
    %320 = vector.load %arg11[%319, %c0_87, %c0_88] : memref<8x8x256xf32, #tpu.memory_space<vmem>>, vector<1x8x128xf32>
    %321 = vector.shape_cast %320 : vector<1x8x128xf32> to vector<8x128xf32>
    %322 = arith.index_cast %318 : i32 to index
    %c0_89 = arith.constant 0 : index
    %c128_90 = arith.constant 128 : index
    %323 = vector.load %arg11[%322, %c0_89, %c128_90] : memref<8x8x256xf32, #tpu.memory_space<vmem>>, vector<1x8x128xf32>
    %324 = vector.shape_cast %323 : vector<1x8x128xf32> to vector<8x128xf32>
    %325 = tpu.concatenate %321, %324 in 1 : vector<8x128xf32>, vector<8x128xf32> -> vector<8x256xf32>
    %326 = arith.truncf %307 : vector<8x64xf32> to vector<8x64xbf16>
    %cst_91 = arith.constant dense<0.000000e+00> : vector<8x256xf32>
    %327 = tpu.matmul %326, %8, %cst_91 {dimension_numbers = #tpu.dot_dimension_numbers<[1], [0], [0], [1], [0, 0, 1, 1], [], []>} : vector<8x64xbf16>, vector<64x256xbf16>, vector<8x256xf32> -> vector<8x256xf32>
    %328 = arith.addf %325, %327 : vector<8x256xf32>
    %329 = arith.negf %328 : vector<8x256xf32>
    %330 = math.exp %329 : vector<8x256xf32>
    %cst_92 = arith.constant 1.000000e+00 : f32
    %331 = vector.broadcast %cst_92 : f32 to vector<8x256xf32>
    %332 = arith.addf %331, %330 : vector<8x256xf32>
    %333 = arith.divf %331, %332 : vector<8x256xf32>
    %334 = math.tanh %328 : vector<8x256xf32>
    %335 = vector.extract_strided_slice %333 {offsets = [0, 0], sizes = [8, 32], strides = [1, 1]} : vector<8x256xf32> to vector<8x32xf32>
    %336 = vector.extract_strided_slice %333 {offsets = [0, 128], sizes = [8, 32], strides = [1, 1]} : vector<8x256xf32> to vector<8x32xf32>
    %337 = tpu.concatenate %335, %336 in 1 : vector<8x32xf32>, vector<8x32xf32> -> vector<8x64xf32>
    %338 = vector.extract_strided_slice %333 {offsets = [0, 32], sizes = [8, 32], strides = [1, 1]} : vector<8x256xf32> to vector<8x32xf32>
    %339 = vector.extract_strided_slice %333 {offsets = [0, 160], sizes = [8, 32], strides = [1, 1]} : vector<8x256xf32> to vector<8x32xf32>
    %340 = tpu.concatenate %338, %339 in 1 : vector<8x32xf32>, vector<8x32xf32> -> vector<8x64xf32>
    %341 = vector.extract_strided_slice %334 {offsets = [0, 64], sizes = [8, 32], strides = [1, 1]} : vector<8x256xf32> to vector<8x32xf32>
    %342 = vector.extract_strided_slice %334 {offsets = [0, 192], sizes = [8, 32], strides = [1, 1]} : vector<8x256xf32> to vector<8x32xf32>
    %343 = tpu.concatenate %341, %342 in 1 : vector<8x32xf32>, vector<8x32xf32> -> vector<8x64xf32>
    %344 = vector.extract_strided_slice %333 {offsets = [0, 96], sizes = [8, 32], strides = [1, 1]} : vector<8x256xf32> to vector<8x32xf32>
    %345 = vector.extract_strided_slice %333 {offsets = [0, 224], sizes = [8, 32], strides = [1, 1]} : vector<8x256xf32> to vector<8x32xf32>
    %346 = tpu.concatenate %344, %345 in 1 : vector<8x32xf32>, vector<8x32xf32> -> vector<8x64xf32>
    %347 = arith.mulf %340, %305 : vector<8x64xf32>
    %348 = arith.mulf %337, %343 : vector<8x64xf32>
    %349 = arith.addf %347, %348 : vector<8x64xf32>
    %350 = math.tanh %349 : vector<8x64xf32>
    %351 = arith.mulf %346, %350 : vector<8x64xf32>
    %352 = vector.extract_strided_slice %351 {offsets = [0, 0], sizes = [8, 32], strides = [1, 1]} : vector<8x64xf32> to vector<8x32xf32>
    %353 = arith.index_cast %c7_i32_85 : i32 to index
    %c0_93 = arith.constant 0 : index
    %c0_94 = arith.constant 0 : index
    %354 = vector.load %arg12[%353, %c0_93, %c0_94] : memref<8x8x64xf32, #tpu.memory_space<vmem>>, vector<1x8x32xf32>
    %355 = vector.shape_cast %354 : vector<1x8x32xf32> to vector<8x32xf32>
    %356 = vector.shape_cast %352 : vector<8x32xf32> to vector<1x8x32xf32>
    tpu.vector_store %arg12[%353, %c0_93, %c0_94], %356 {strides = array<i32>} : memref<8x8x64xf32, #tpu.memory_space<vmem>>, vector<1x8x32xf32>,
    %357 = vector.extract_strided_slice %351 {offsets = [0, 32], sizes = [8, 32], strides = [1, 1]} : vector<8x64xf32> to vector<8x32xf32>
    %358 = arith.index_cast %318 : i32 to index
    %c0_95 = arith.constant 0 : index
    %c32_96 = arith.constant 32 : index
    %359 = vector.load %arg12[%358, %c0_95, %c32_96] : memref<8x8x64xf32, #tpu.memory_space<vmem>>, vector<1x8x32xf32>
    %360 = vector.shape_cast %359 : vector<1x8x32xf32> to vector<8x32xf32>
    %361 = vector.shape_cast %357 : vector<8x32xf32> to vector<1x8x32xf32>
    tpu.vector_store %arg12[%358, %c0_95, %c32_96], %361 {strides = array<i32>} : memref<8x8x64xf32, #tpu.memory_space<vmem>>, vector<1x8x32xf32>,
    %c8_i32 = arith.constant 8 : i32
    %c0_97 = arith.constant 0 : index
    %c0_98 = arith.constant 0 : index
    %c0_99 = arith.constant 0 : index
    %362 = vector.load %arg12[%c0_97, %c0_98, %c0_99] : memref<8x8x64xf32, #tpu.memory_space<vmem>>, vector<8x8x64xf32>
    %363 = vector.shape_cast %362 : vector<8x8x64xf32> to vector<64x64xf32>
    %364 = arith.truncf %363 : vector<64x64xf32> to vector<64x64xbf16>
    %c0_100 = arith.constant 0 : index
    %c0_101 = arith.constant 0 : index
    %365 = vector.load %arg5[%c0_100, %c0_101] : memref<64x256xbf16, #tpu.memory_space<vmem>>, vector<64x256xbf16>
    %cst_102 = arith.constant dense<0.000000e+00> : vector<64x256xf32>
    %366 = tpu.matmul %364, %365, %cst_102 {dimension_numbers = #tpu.dot_dimension_numbers<[1], [0], [0], [1], [0, 0, 1, 1], [], []>} : vector<64x64xbf16>, vector<64x256xbf16>, vector<64x256xf32> -> vector<64x256xf32>
    %c0_103 = arith.constant 0 : index
    %c0_104 = arith.constant 0 : index
    %367 = vector.load %arg6[%c0_103, %c0_104] : memref<1x256xf32, #tpu.memory_space<vmem>>, vector<1x256xf32>
    %368 = vector.broadcast %367 : vector<1x256xf32> to vector<64x256xf32>
    %369 = arith.addf %366, %368 : vector<64x256xf32>
    %370 = vector.shape_cast %369 : vector<64x256xf32> to vector<8x8x256xf32>
    %c0_105 = arith.constant 0 : index
    %c0_106 = arith.constant 0 : index
    %c0_107 = arith.constant 0 : index
    %371 = vector.load %arg11[%c0_105, %c0_106, %c0_107] : memref<8x8x256xf32, #tpu.memory_space<vmem>>, vector<8x8x256xf32>
    tpu.vector_store %arg11[%c0_105, %c0_106, %c0_107], %370 {strides = array<i32>} : memref<8x8x256xf32, #tpu.memory_space<vmem>>, vector<8x8x256xf32>,
    %c0_108 = arith.constant 0 : index
    %c0_109 = arith.constant 0 : index
    %372 = vector.load %arg7[%c0_108, %c0_109] : memref<64x256xbf16, #tpu.memory_space<vmem>>, vector<64x256xbf16>
    %cst_110 = arith.constant 0.000000e+00 : f32
    %373 = vector.broadcast %cst_110 : f32 to vector<8x64xf32>
    %c0_i32_111 = arith.constant 0 : i32
    %c7_i32_112 = arith.constant 7 : i32
    %374 = arith.subi %c7_i32_112, %c0_i32_111 : i32
    %375 = arith.index_cast %c0_i32_111 : i32 to index
    %c0_113 = arith.constant 0 : index
    %c0_114 = arith.constant 0 : index
    %376 = vector.load %arg11[%375, %c0_113, %c0_114] : memref<8x8x256xf32, #tpu.memory_space<vmem>>, vector<1x8x128xf32>
    %377 = vector.shape_cast %376 : vector<1x8x128xf32> to vector<8x128xf32>
    %378 = arith.index_cast %374 : i32 to index
    %c0_115 = arith.constant 0 : index
    %c128_116 = arith.constant 128 : index
    %379 = vector.load %arg11[%378, %c0_115, %c128_116] : memref<8x8x256xf32, #tpu.memory_space<vmem>>, vector<1x8x128xf32>
    %380 = vector.shape_cast %379 : vector<1x8x128xf32> to vector<8x128xf32>
    %381 = tpu.concatenate %377, %380 in 1 : vector<8x128xf32>, vector<8x128xf32> -> vector<8x256xf32>
    %382 = arith.truncf %373 : vector<8x64xf32> to vector<8x64xbf16>
    %cst_117 = arith.constant dense<0.000000e+00> : vector<8x256xf32>
    %383 = tpu.matmul %382, %372, %cst_117 {dimension_numbers = #tpu.dot_dimension_numbers<[1], [0], [0], [1], [0, 0, 1, 1], [], []>} : vector<8x64xbf16>, vector<64x256xbf16>, vector<8x256xf32> -> vector<8x256xf32>
    %384 = arith.addf %381, %383 : vector<8x256xf32>
    %385 = arith.negf %384 : vector<8x256xf32>
    %386 = math.exp %385 : vector<8x256xf32>
    %cst_118 = arith.constant 1.000000e+00 : f32
    %387 = vector.broadcast %cst_118 : f32 to vector<8x256xf32>
    %388 = arith.addf %387, %386 : vector<8x256xf32>
    %389 = arith.divf %387, %388 : vector<8x256xf32>
    %390 = math.tanh %384 : vector<8x256xf32>
    %391 = vector.extract_strided_slice %389 {offsets = [0, 0], sizes = [8, 32], strides = [1, 1]} : vector<8x256xf32> to vector<8x32xf32>
    %392 = vector.extract_strided_slice %389 {offsets = [0, 128], sizes = [8, 32], strides = [1, 1]} : vector<8x256xf32> to vector<8x32xf32>
    %393 = tpu.concatenate %391, %392 in 1 : vector<8x32xf32>, vector<8x32xf32> -> vector<8x64xf32>
    %394 = vector.extract_strided_slice %389 {offsets = [0, 32], sizes = [8, 32], strides = [1, 1]} : vector<8x256xf32> to vector<8x32xf32>
    %395 = vector.extract_strided_slice %389 {offsets = [0, 160], sizes = [8, 32], strides = [1, 1]} : vector<8x256xf32> to vector<8x32xf32>
    %396 = tpu.concatenate %394, %395 in 1 : vector<8x32xf32>, vector<8x32xf32> -> vector<8x64xf32>
    %397 = vector.extract_strided_slice %390 {offsets = [0, 64], sizes = [8, 32], strides = [1, 1]} : vector<8x256xf32> to vector<8x32xf32>
    %398 = vector.extract_strided_slice %390 {offsets = [0, 192], sizes = [8, 32], strides = [1, 1]} : vector<8x256xf32> to vector<8x32xf32>
    %399 = tpu.concatenate %397, %398 in 1 : vector<8x32xf32>, vector<8x32xf32> -> vector<8x64xf32>
    %400 = vector.extract_strided_slice %389 {offsets = [0, 96], sizes = [8, 32], strides = [1, 1]} : vector<8x256xf32> to vector<8x32xf32>
    %401 = vector.extract_strided_slice %389 {offsets = [0, 224], sizes = [8, 32], strides = [1, 1]} : vector<8x256xf32> to vector<8x32xf32>
    %402 = tpu.concatenate %400, %401 in 1 : vector<8x32xf32>, vector<8x32xf32> -> vector<8x64xf32>
    %403 = arith.mulf %396, %373 : vector<8x64xf32>
    %404 = arith.mulf %393, %399 : vector<8x64xf32>
    %405 = arith.addf %403, %404 : vector<8x64xf32>
    %406 = math.tanh %405 : vector<8x64xf32>
    %407 = arith.mulf %402, %406 : vector<8x64xf32>
    %408 = vector.extract_strided_slice %407 {offsets = [0, 0], sizes = [8, 32], strides = [1, 1]} : vector<8x64xf32> to vector<8x32xf32>
    %409 = arith.index_cast %c0_i32_111 : i32 to index
    %c0_119 = arith.constant 0 : index
    %c0_120 = arith.constant 0 : index
    %410 = vector.load %arg12[%409, %c0_119, %c0_120] : memref<8x8x64xf32, #tpu.memory_space<vmem>>, vector<1x8x32xf32>
    %411 = vector.shape_cast %410 : vector<1x8x32xf32> to vector<8x32xf32>
    %412 = vector.shape_cast %408 : vector<8x32xf32> to vector<1x8x32xf32>
    tpu.vector_store %arg12[%409, %c0_119, %c0_120], %412 {strides = array<i32>} : memref<8x8x64xf32, #tpu.memory_space<vmem>>, vector<1x8x32xf32>,
    %413 = vector.extract_strided_slice %407 {offsets = [0, 32], sizes = [8, 32], strides = [1, 1]} : vector<8x64xf32> to vector<8x32xf32>
    %414 = arith.index_cast %374 : i32 to index
    %c0_121 = arith.constant 0 : index
    %c32_122 = arith.constant 32 : index
    %415 = vector.load %arg12[%414, %c0_121, %c32_122] : memref<8x8x64xf32, #tpu.memory_space<vmem>>, vector<1x8x32xf32>
    %416 = vector.shape_cast %415 : vector<1x8x32xf32> to vector<8x32xf32>
    %417 = vector.shape_cast %413 : vector<8x32xf32> to vector<1x8x32xf32>
    tpu.vector_store %arg12[%414, %c0_121, %c32_122], %417 {strides = array<i32>} : memref<8x8x64xf32, #tpu.memory_space<vmem>>, vector<1x8x32xf32>,
    %c1_i32_123 = arith.constant 1 : i32
    %c7_i32_124 = arith.constant 7 : i32
    %418 = arith.subi %c7_i32_124, %c1_i32_123 : i32
    %419 = arith.index_cast %c1_i32_123 : i32 to index
    %c0_125 = arith.constant 0 : index
    %c0_126 = arith.constant 0 : index
    %420 = vector.load %arg11[%419, %c0_125, %c0_126] : memref<8x8x256xf32, #tpu.memory_space<vmem>>, vector<1x8x128xf32>
    %421 = vector.shape_cast %420 : vector<1x8x128xf32> to vector<8x128xf32>
    %422 = arith.index_cast %418 : i32 to index
    %c0_127 = arith.constant 0 : index
    %c128_128 = arith.constant 128 : index
    %423 = vector.load %arg11[%422, %c0_127, %c128_128] : memref<8x8x256xf32, #tpu.memory_space<vmem>>, vector<1x8x128xf32>
    %424 = vector.shape_cast %423 : vector<1x8x128xf32> to vector<8x128xf32>
    %425 = tpu.concatenate %421, %424 in 1 : vector<8x128xf32>, vector<8x128xf32> -> vector<8x256xf32>
    %426 = arith.truncf %407 : vector<8x64xf32> to vector<8x64xbf16>
    %cst_129 = arith.constant dense<0.000000e+00> : vector<8x256xf32>
    %427 = tpu.matmul %426, %372, %cst_129 {dimension_numbers = #tpu.dot_dimension_numbers<[1], [0], [0], [1], [0, 0, 1, 1], [], []>} : vector<8x64xbf16>, vector<64x256xbf16>, vector<8x256xf32> -> vector<8x256xf32>
    %428 = arith.addf %425, %427 : vector<8x256xf32>
    %429 = arith.negf %428 : vector<8x256xf32>
    %430 = math.exp %429 : vector<8x256xf32>
    %cst_130 = arith.constant 1.000000e+00 : f32
    %431 = vector.broadcast %cst_130 : f32 to vector<8x256xf32>
    %432 = arith.addf %431, %430 : vector<8x256xf32>
    %433 = arith.divf %431, %432 : vector<8x256xf32>
    %434 = math.tanh %428 : vector<8x256xf32>
    %435 = vector.extract_strided_slice %433 {offsets = [0, 0], sizes = [8, 32], strides = [1, 1]} : vector<8x256xf32> to vector<8x32xf32>
    %436 = vector.extract_strided_slice %433 {offsets = [0, 128], sizes = [8, 32], strides = [1, 1]} : vector<8x256xf32> to vector<8x32xf32>
    %437 = tpu.concatenate %435, %436 in 1 : vector<8x32xf32>, vector<8x32xf32> -> vector<8x64xf32>
    %438 = vector.extract_strided_slice %433 {offsets = [0, 32], sizes = [8, 32], strides = [1, 1]} : vector<8x256xf32> to vector<8x32xf32>
    %439 = vector.extract_strided_slice %433 {offsets = [0, 160], sizes = [8, 32], strides = [1, 1]} : vector<8x256xf32> to vector<8x32xf32>
    %440 = tpu.concatenate %438, %439 in 1 : vector<8x32xf32>, vector<8x32xf32> -> vector<8x64xf32>
    %441 = vector.extract_strided_slice %434 {offsets = [0, 64], sizes = [8, 32], strides = [1, 1]} : vector<8x256xf32> to vector<8x32xf32>
    %442 = vector.extract_strided_slice %434 {offsets = [0, 192], sizes = [8, 32], strides = [1, 1]} : vector<8x256xf32> to vector<8x32xf32>
    %443 = tpu.concatenate %441, %442 in 1 : vector<8x32xf32>, vector<8x32xf32> -> vector<8x64xf32>
    %444 = vector.extract_strided_slice %433 {offsets = [0, 96], sizes = [8, 32], strides = [1, 1]} : vector<8x256xf32> to vector<8x32xf32>
    %445 = vector.extract_strided_slice %433 {offsets = [0, 224], sizes = [8, 32], strides = [1, 1]} : vector<8x256xf32> to vector<8x32xf32>
    %446 = tpu.concatenate %444, %445 in 1 : vector<8x32xf32>, vector<8x32xf32> -> vector<8x64xf32>
    %447 = arith.mulf %440, %405 : vector<8x64xf32>
    %448 = arith.mulf %437, %443 : vector<8x64xf32>
    %449 = arith.addf %447, %448 : vector<8x64xf32>
    %450 = math.tanh %449 : vector<8x64xf32>
    %451 = arith.mulf %446, %450 : vector<8x64xf32>
    %452 = vector.extract_strided_slice %451 {offsets = [0, 0], sizes = [8, 32], strides = [1, 1]} : vector<8x64xf32> to vector<8x32xf32>
    %453 = arith.index_cast %c1_i32_123 : i32 to index
    %c0_131 = arith.constant 0 : index
    %c0_132 = arith.constant 0 : index
    %454 = vector.load %arg12[%453, %c0_131, %c0_132] : memref<8x8x64xf32, #tpu.memory_space<vmem>>, vector<1x8x32xf32>
    %455 = vector.shape_cast %454 : vector<1x8x32xf32> to vector<8x32xf32>
    %456 = vector.shape_cast %452 : vector<8x32xf32> to vector<1x8x32xf32>
    tpu.vector_store %arg12[%453, %c0_131, %c0_132], %456 {strides = array<i32>} : memref<8x8x64xf32, #tpu.memory_space<vmem>>, vector<1x8x32xf32>,
    %457 = vector.extract_strided_slice %451 {offsets = [0, 32], sizes = [8, 32], strides = [1, 1]} : vector<8x64xf32> to vector<8x32xf32>
    %458 = arith.index_cast %418 : i32 to index
    %c0_133 = arith.constant 0 : index
    %c32_134 = arith.constant 32 : index
    %459 = vector.load %arg12[%458, %c0_133, %c32_134] : memref<8x8x64xf32, #tpu.memory_space<vmem>>, vector<1x8x32xf32>
    %460 = vector.shape_cast %459 : vector<1x8x32xf32> to vector<8x32xf32>
    %461 = vector.shape_cast %457 : vector<8x32xf32> to vector<1x8x32xf32>
    tpu.vector_store %arg12[%458, %c0_133, %c32_134], %461 {strides = array<i32>} : memref<8x8x64xf32, #tpu.memory_space<vmem>>, vector<1x8x32xf32>,
    %c2_i32_135 = arith.constant 2 : i32
    %c7_i32_136 = arith.constant 7 : i32
    %462 = arith.subi %c7_i32_136, %c2_i32_135 : i32
    %463 = arith.index_cast %c2_i32_135 : i32 to index
    %c0_137 = arith.constant 0 : index
    %c0_138 = arith.constant 0 : index
    %464 = vector.load %arg11[%463, %c0_137, %c0_138] : memref<8x8x256xf32, #tpu.memory_space<vmem>>, vector<1x8x128xf32>
    %465 = vector.shape_cast %464 : vector<1x8x128xf32> to vector<8x128xf32>
    %466 = arith.index_cast %462 : i32 to index
    %c0_139 = arith.constant 0 : index
    %c128_140 = arith.constant 128 : index
    %467 = vector.load %arg11[%466, %c0_139, %c128_140] : memref<8x8x256xf32, #tpu.memory_space<vmem>>, vector<1x8x128xf32>
    %468 = vector.shape_cast %467 : vector<1x8x128xf32> to vector<8x128xf32>
    %469 = tpu.concatenate %465, %468 in 1 : vector<8x128xf32>, vector<8x128xf32> -> vector<8x256xf32>
    %470 = arith.truncf %451 : vector<8x64xf32> to vector<8x64xbf16>
    %cst_141 = arith.constant dense<0.000000e+00> : vector<8x256xf32>
    %471 = tpu.matmul %470, %372, %cst_141 {dimension_numbers = #tpu.dot_dimension_numbers<[1], [0], [0], [1], [0, 0, 1, 1], [], []>} : vector<8x64xbf16>, vector<64x256xbf16>, vector<8x256xf32> -> vector<8x256xf32>
    %472 = arith.addf %469, %471 : vector<8x256xf32>
    %473 = arith.negf %472 : vector<8x256xf32>
    %474 = math.exp %473 : vector<8x256xf32>
    %cst_142 = arith.constant 1.000000e+00 : f32
    %475 = vector.broadcast %cst_142 : f32 to vector<8x256xf32>
    %476 = arith.addf %475, %474 : vector<8x256xf32>
    %477 = arith.divf %475, %476 : vector<8x256xf32>
    %478 = math.tanh %472 : vector<8x256xf32>
    %479 = vector.extract_strided_slice %477 {offsets = [0, 0], sizes = [8, 32], strides = [1, 1]} : vector<8x256xf32> to vector<8x32xf32>
    %480 = vector.extract_strided_slice %477 {offsets = [0, 128], sizes = [8, 32], strides = [1, 1]} : vector<8x256xf32> to vector<8x32xf32>
    %481 = tpu.concatenate %479, %480 in 1 : vector<8x32xf32>, vector<8x32xf32> -> vector<8x64xf32>
    %482 = vector.extract_strided_slice %477 {offsets = [0, 32], sizes = [8, 32], strides = [1, 1]} : vector<8x256xf32> to vector<8x32xf32>
    %483 = vector.extract_strided_slice %477 {offsets = [0, 160], sizes = [8, 32], strides = [1, 1]} : vector<8x256xf32> to vector<8x32xf32>
    %484 = tpu.concatenate %482, %483 in 1 : vector<8x32xf32>, vector<8x32xf32> -> vector<8x64xf32>
    %485 = vector.extract_strided_slice %478 {offsets = [0, 64], sizes = [8, 32], strides = [1, 1]} : vector<8x256xf32> to vector<8x32xf32>
    %486 = vector.extract_strided_slice %478 {offsets = [0, 192], sizes = [8, 32], strides = [1, 1]} : vector<8x256xf32> to vector<8x32xf32>
    %487 = tpu.concatenate %485, %486 in 1 : vector<8x32xf32>, vector<8x32xf32> -> vector<8x64xf32>
    %488 = vector.extract_strided_slice %477 {offsets = [0, 96], sizes = [8, 32], strides = [1, 1]} : vector<8x256xf32> to vector<8x32xf32>
    %489 = vector.extract_strided_slice %477 {offsets = [0, 224], sizes = [8, 32], strides = [1, 1]} : vector<8x256xf32> to vector<8x32xf32>
    %490 = tpu.concatenate %488, %489 in 1 : vector<8x32xf32>, vector<8x32xf32> -> vector<8x64xf32>
    %491 = arith.mulf %484, %449 : vector<8x64xf32>
    %492 = arith.mulf %481, %487 : vector<8x64xf32>
    %493 = arith.addf %491, %492 : vector<8x64xf32>
    %494 = math.tanh %493 : vector<8x64xf32>
    %495 = arith.mulf %490, %494 : vector<8x64xf32>
    %496 = vector.extract_strided_slice %495 {offsets = [0, 0], sizes = [8, 32], strides = [1, 1]} : vector<8x64xf32> to vector<8x32xf32>
    %497 = arith.index_cast %c2_i32_135 : i32 to index
    %c0_143 = arith.constant 0 : index
    %c0_144 = arith.constant 0 : index
    %498 = vector.load %arg12[%497, %c0_143, %c0_144] : memref<8x8x64xf32, #tpu.memory_space<vmem>>, vector<1x8x32xf32>
    %499 = vector.shape_cast %498 : vector<1x8x32xf32> to vector<8x32xf32>
    %500 = vector.shape_cast %496 : vector<8x32xf32> to vector<1x8x32xf32>
    tpu.vector_store %arg12[%497, %c0_143, %c0_144], %500 {strides = array<i32>} : memref<8x8x64xf32, #tpu.memory_space<vmem>>, vector<1x8x32xf32>,
    %501 = vector.extract_strided_slice %495 {offsets = [0, 32], sizes = [8, 32], strides = [1, 1]} : vector<8x64xf32> to vector<8x32xf32>
    %502 = arith.index_cast %462 : i32 to index
    %c0_145 = arith.constant 0 : index
    %c32_146 = arith.constant 32 : index
    %503 = vector.load %arg12[%502, %c0_145, %c32_146] : memref<8x8x64xf32, #tpu.memory_space<vmem>>, vector<1x8x32xf32>
    %504 = vector.shape_cast %503 : vector<1x8x32xf32> to vector<8x32xf32>
    %505 = vector.shape_cast %501 : vector<8x32xf32> to vector<1x8x32xf32>
    tpu.vector_store %arg12[%502, %c0_145, %c32_146], %505 {strides = array<i32>} : memref<8x8x64xf32, #tpu.memory_space<vmem>>, vector<1x8x32xf32>,
    %c3_i32_147 = arith.constant 3 : i32
    %c7_i32_148 = arith.constant 7 : i32
    %506 = arith.subi %c7_i32_148, %c3_i32_147 : i32
    %507 = arith.index_cast %c3_i32_147 : i32 to index
    %c0_149 = arith.constant 0 : index
    %c0_150 = arith.constant 0 : index
    %508 = vector.load %arg11[%507, %c0_149, %c0_150] : memref<8x8x256xf32, #tpu.memory_space<vmem>>, vector<1x8x128xf32>
    %509 = vector.shape_cast %508 : vector<1x8x128xf32> to vector<8x128xf32>
    %510 = arith.index_cast %506 : i32 to index
    %c0_151 = arith.constant 0 : index
    %c128_152 = arith.constant 128 : index
    %511 = vector.load %arg11[%510, %c0_151, %c128_152] : memref<8x8x256xf32, #tpu.memory_space<vmem>>, vector<1x8x128xf32>
    %512 = vector.shape_cast %511 : vector<1x8x128xf32> to vector<8x128xf32>
    %513 = tpu.concatenate %509, %512 in 1 : vector<8x128xf32>, vector<8x128xf32> -> vector<8x256xf32>
    %514 = arith.truncf %495 : vector<8x64xf32> to vector<8x64xbf16>
    %cst_153 = arith.constant dense<0.000000e+00> : vector<8x256xf32>
    %515 = tpu.matmul %514, %372, %cst_153 {dimension_numbers = #tpu.dot_dimension_numbers<[1], [0], [0], [1], [0, 0, 1, 1], [], []>} : vector<8x64xbf16>, vector<64x256xbf16>, vector<8x256xf32> -> vector<8x256xf32>
    %516 = arith.addf %513, %515 : vector<8x256xf32>
    %517 = arith.negf %516 : vector<8x256xf32>
    %518 = math.exp %517 : vector<8x256xf32>
    %cst_154 = arith.constant 1.000000e+00 : f32
    %519 = vector.broadcast %cst_154 : f32 to vector<8x256xf32>
    %520 = arith.addf %519, %518 : vector<8x256xf32>
    %521 = arith.divf %519, %520 : vector<8x256xf32>
    %522 = math.tanh %516 : vector<8x256xf32>
    %523 = vector.extract_strided_slice %521 {offsets = [0, 0], sizes = [8, 32], strides = [1, 1]} : vector<8x256xf32> to vector<8x32xf32>
    %524 = vector.extract_strided_slice %521 {offsets = [0, 128], sizes = [8, 32], strides = [1, 1]} : vector<8x256xf32> to vector<8x32xf32>
    %525 = tpu.concatenate %523, %524 in 1 : vector<8x32xf32>, vector<8x32xf32> -> vector<8x64xf32>
    %526 = vector.extract_strided_slice %521 {offsets = [0, 32], sizes = [8, 32], strides = [1, 1]} : vector<8x256xf32> to vector<8x32xf32>
    %527 = vector.extract_strided_slice %521 {offsets = [0, 160], sizes = [8, 32], strides = [1, 1]} : vector<8x256xf32> to vector<8x32xf32>
    %528 = tpu.concatenate %526, %527 in 1 : vector<8x32xf32>, vector<8x32xf32> -> vector<8x64xf32>
    %529 = vector.extract_strided_slice %522 {offsets = [0, 64], sizes = [8, 32], strides = [1, 1]} : vector<8x256xf32> to vector<8x32xf32>
    %530 = vector.extract_strided_slice %522 {offsets = [0, 192], sizes = [8, 32], strides = [1, 1]} : vector<8x256xf32> to vector<8x32xf32>
    %531 = tpu.concatenate %529, %530 in 1 : vector<8x32xf32>, vector<8x32xf32> -> vector<8x64xf32>
    %532 = vector.extract_strided_slice %521 {offsets = [0, 96], sizes = [8, 32], strides = [1, 1]} : vector<8x256xf32> to vector<8x32xf32>
    %533 = vector.extract_strided_slice %521 {offsets = [0, 224], sizes = [8, 32], strides = [1, 1]} : vector<8x256xf32> to vector<8x32xf32>
    %534 = tpu.concatenate %532, %533 in 1 : vector<8x32xf32>, vector<8x32xf32> -> vector<8x64xf32>
    %535 = arith.mulf %528, %493 : vector<8x64xf32>
    %536 = arith.mulf %525, %531 : vector<8x64xf32>
    %537 = arith.addf %535, %536 : vector<8x64xf32>
    %538 = math.tanh %537 : vector<8x64xf32>
    %539 = arith.mulf %534, %538 : vector<8x64xf32>
    %540 = vector.extract_strided_slice %539 {offsets = [0, 0], sizes = [8, 32], strides = [1, 1]} : vector<8x64xf32> to vector<8x32xf32>
    %541 = arith.index_cast %c3_i32_147 : i32 to index
    %c0_155 = arith.constant 0 : index
    %c0_156 = arith.constant 0 : index
    %542 = vector.load %arg12[%541, %c0_155, %c0_156] : memref<8x8x64xf32, #tpu.memory_space<vmem>>, vector<1x8x32xf32>
    %543 = vector.shape_cast %542 : vector<1x8x32xf32> to vector<8x32xf32>
    %544 = vector.shape_cast %540 : vector<8x32xf32> to vector<1x8x32xf32>
    tpu.vector_store %arg12[%541, %c0_155, %c0_156], %544 {strides = array<i32>} : memref<8x8x64xf32, #tpu.memory_space<vmem>>, vector<1x8x32xf32>,
    %545 = vector.extract_strided_slice %539 {offsets = [0, 32], sizes = [8, 32], strides = [1, 1]} : vector<8x64xf32> to vector<8x32xf32>
    %546 = arith.index_cast %506 : i32 to index
    %c0_157 = arith.constant 0 : index
    %c32_158 = arith.constant 32 : index
    %547 = vector.load %arg12[%546, %c0_157, %c32_158] : memref<8x8x64xf32, #tpu.memory_space<vmem>>, vector<1x8x32xf32>
    %548 = vector.shape_cast %547 : vector<1x8x32xf32> to vector<8x32xf32>
    %549 = vector.shape_cast %545 : vector<8x32xf32> to vector<1x8x32xf32>
    tpu.vector_store %arg12[%546, %c0_157, %c32_158], %549 {strides = array<i32>} : memref<8x8x64xf32, #tpu.memory_space<vmem>>, vector<1x8x32xf32>,
    %c4_i32_159 = arith.constant 4 : i32
    %c7_i32_160 = arith.constant 7 : i32
    %550 = arith.subi %c7_i32_160, %c4_i32_159 : i32
    %551 = arith.index_cast %c4_i32_159 : i32 to index
    %c0_161 = arith.constant 0 : index
    %c0_162 = arith.constant 0 : index
    %552 = vector.load %arg11[%551, %c0_161, %c0_162] : memref<8x8x256xf32, #tpu.memory_space<vmem>>, vector<1x8x128xf32>
    %553 = vector.shape_cast %552 : vector<1x8x128xf32> to vector<8x128xf32>
    %554 = arith.index_cast %550 : i32 to index
    %c0_163 = arith.constant 0 : index
    %c128_164 = arith.constant 128 : index
    %555 = vector.load %arg11[%554, %c0_163, %c128_164] : memref<8x8x256xf32, #tpu.memory_space<vmem>>, vector<1x8x128xf32>
    %556 = vector.shape_cast %555 : vector<1x8x128xf32> to vector<8x128xf32>
    %557 = tpu.concatenate %553, %556 in 1 : vector<8x128xf32>, vector<8x128xf32> -> vector<8x256xf32>
    %558 = arith.truncf %539 : vector<8x64xf32> to vector<8x64xbf16>
    %cst_165 = arith.constant dense<0.000000e+00> : vector<8x256xf32>
    %559 = tpu.matmul %558, %372, %cst_165 {dimension_numbers = #tpu.dot_dimension_numbers<[1], [0], [0], [1], [0, 0, 1, 1], [], []>} : vector<8x64xbf16>, vector<64x256xbf16>, vector<8x256xf32> -> vector<8x256xf32>
    %560 = arith.addf %557, %559 : vector<8x256xf32>
    %561 = arith.negf %560 : vector<8x256xf32>
    %562 = math.exp %561 : vector<8x256xf32>
    %cst_166 = arith.constant 1.000000e+00 : f32
    %563 = vector.broadcast %cst_166 : f32 to vector<8x256xf32>
    %564 = arith.addf %563, %562 : vector<8x256xf32>
    %565 = arith.divf %563, %564 : vector<8x256xf32>
    %566 = math.tanh %560 : vector<8x256xf32>
    %567 = vector.extract_strided_slice %565 {offsets = [0, 0], sizes = [8, 32], strides = [1, 1]} : vector<8x256xf32> to vector<8x32xf32>
    %568 = vector.extract_strided_slice %565 {offsets = [0, 128], sizes = [8, 32], strides = [1, 1]} : vector<8x256xf32> to vector<8x32xf32>
    %569 = tpu.concatenate %567, %568 in 1 : vector<8x32xf32>, vector<8x32xf32> -> vector<8x64xf32>
    %570 = vector.extract_strided_slice %565 {offsets = [0, 32], sizes = [8, 32], strides = [1, 1]} : vector<8x256xf32> to vector<8x32xf32>
    %571 = vector.extract_strided_slice %565 {offsets = [0, 160], sizes = [8, 32], strides = [1, 1]} : vector<8x256xf32> to vector<8x32xf32>
    %572 = tpu.concatenate %570, %571 in 1 : vector<8x32xf32>, vector<8x32xf32> -> vector<8x64xf32>
    %573 = vector.extract_strided_slice %566 {offsets = [0, 64], sizes = [8, 32], strides = [1, 1]} : vector<8x256xf32> to vector<8x32xf32>
    %574 = vector.extract_strided_slice %566 {offsets = [0, 192], sizes = [8, 32], strides = [1, 1]} : vector<8x256xf32> to vector<8x32xf32>
    %575 = tpu.concatenate %573, %574 in 1 : vector<8x32xf32>, vector<8x32xf32> -> vector<8x64xf32>
    %576 = vector.extract_strided_slice %565 {offsets = [0, 96], sizes = [8, 32], strides = [1, 1]} : vector<8x256xf32> to vector<8x32xf32>
    %577 = vector.extract_strided_slice %565 {offsets = [0, 224], sizes = [8, 32], strides = [1, 1]} : vector<8x256xf32> to vector<8x32xf32>
    %578 = tpu.concatenate %576, %577 in 1 : vector<8x32xf32>, vector<8x32xf32> -> vector<8x64xf32>
    %579 = arith.mulf %572, %537 : vector<8x64xf32>
    %580 = arith.mulf %569, %575 : vector<8x64xf32>
    %581 = arith.addf %579, %580 : vector<8x64xf32>
    %582 = math.tanh %581 : vector<8x64xf32>
    %583 = arith.mulf %578, %582 : vector<8x64xf32>
    %584 = vector.extract_strided_slice %583 {offsets = [0, 0], sizes = [8, 32], strides = [1, 1]} : vector<8x64xf32> to vector<8x32xf32>
    %585 = arith.index_cast %c4_i32_159 : i32 to index
    %c0_167 = arith.constant 0 : index
    %c0_168 = arith.constant 0 : index
    %586 = vector.load %arg12[%585, %c0_167, %c0_168] : memref<8x8x64xf32, #tpu.memory_space<vmem>>, vector<1x8x32xf32>
    %587 = vector.shape_cast %586 : vector<1x8x32xf32> to vector<8x32xf32>
    %588 = vector.shape_cast %584 : vector<8x32xf32> to vector<1x8x32xf32>
    tpu.vector_store %arg12[%585, %c0_167, %c0_168], %588 {strides = array<i32>} : memref<8x8x64xf32, #tpu.memory_space<vmem>>, vector<1x8x32xf32>,
    %589 = vector.extract_strided_slice %583 {offsets = [0, 32], sizes = [8, 32], strides = [1, 1]} : vector<8x64xf32> to vector<8x32xf32>
    %590 = arith.index_cast %550 : i32 to index
    %c0_169 = arith.constant 0 : index
    %c32_170 = arith.constant 32 : index
    %591 = vector.load %arg12[%590, %c0_169, %c32_170] : memref<8x8x64xf32, #tpu.memory_space<vmem>>, vector<1x8x32xf32>
    %592 = vector.shape_cast %591 : vector<1x8x32xf32> to vector<8x32xf32>
    %593 = vector.shape_cast %589 : vector<8x32xf32> to vector<1x8x32xf32>
    tpu.vector_store %arg12[%590, %c0_169, %c32_170], %593 {strides = array<i32>} : memref<8x8x64xf32, #tpu.memory_space<vmem>>, vector<1x8x32xf32>,
    %c5_i32_171 = arith.constant 5 : i32
    %c7_i32_172 = arith.constant 7 : i32
    %594 = arith.subi %c7_i32_172, %c5_i32_171 : i32
    %595 = arith.index_cast %c5_i32_171 : i32 to index
    %c0_173 = arith.constant 0 : index
    %c0_174 = arith.constant 0 : index
    %596 = vector.load %arg11[%595, %c0_173, %c0_174] : memref<8x8x256xf32, #tpu.memory_space<vmem>>, vector<1x8x128xf32>
    %597 = vector.shape_cast %596 : vector<1x8x128xf32> to vector<8x128xf32>
    %598 = arith.index_cast %594 : i32 to index
    %c0_175 = arith.constant 0 : index
    %c128_176 = arith.constant 128 : index
    %599 = vector.load %arg11[%598, %c0_175, %c128_176] : memref<8x8x256xf32, #tpu.memory_space<vmem>>, vector<1x8x128xf32>
    %600 = vector.shape_cast %599 : vector<1x8x128xf32> to vector<8x128xf32>
    %601 = tpu.concatenate %597, %600 in 1 : vector<8x128xf32>, vector<8x128xf32> -> vector<8x256xf32>
    %602 = arith.truncf %583 : vector<8x64xf32> to vector<8x64xbf16>
    %cst_177 = arith.constant dense<0.000000e+00> : vector<8x256xf32>
    %603 = tpu.matmul %602, %372, %cst_177 {dimension_numbers = #tpu.dot_dimension_numbers<[1], [0], [0], [1], [0, 0, 1, 1], [], []>} : vector<8x64xbf16>, vector<64x256xbf16>, vector<8x256xf32> -> vector<8x256xf32>
    %604 = arith.addf %601, %603 : vector<8x256xf32>
    %605 = arith.negf %604 : vector<8x256xf32>
    %606 = math.exp %605 : vector<8x256xf32>
    %cst_178 = arith.constant 1.000000e+00 : f32
    %607 = vector.broadcast %cst_178 : f32 to vector<8x256xf32>
    %608 = arith.addf %607, %606 : vector<8x256xf32>
    %609 = arith.divf %607, %608 : vector<8x256xf32>
    %610 = math.tanh %604 : vector<8x256xf32>
    %611 = vector.extract_strided_slice %609 {offsets = [0, 0], sizes = [8, 32], strides = [1, 1]} : vector<8x256xf32> to vector<8x32xf32>
    %612 = vector.extract_strided_slice %609 {offsets = [0, 128], sizes = [8, 32], strides = [1, 1]} : vector<8x256xf32> to vector<8x32xf32>
    %613 = tpu.concatenate %611, %612 in 1 : vector<8x32xf32>, vector<8x32xf32> -> vector<8x64xf32>
    %614 = vector.extract_strided_slice %609 {offsets = [0, 32], sizes = [8, 32], strides = [1, 1]} : vector<8x256xf32> to vector<8x32xf32>
    %615 = vector.extract_strided_slice %609 {offsets = [0, 160], sizes = [8, 32], strides = [1, 1]} : vector<8x256xf32> to vector<8x32xf32>
    %616 = tpu.concatenate %614, %615 in 1 : vector<8x32xf32>, vector<8x32xf32> -> vector<8x64xf32>
    %617 = vector.extract_strided_slice %610 {offsets = [0, 64], sizes = [8, 32], strides = [1, 1]} : vector<8x256xf32> to vector<8x32xf32>
    %618 = vector.extract_strided_slice %610 {offsets = [0, 192], sizes = [8, 32], strides = [1, 1]} : vector<8x256xf32> to vector<8x32xf32>
    %619 = tpu.concatenate %617, %618 in 1 : vector<8x32xf32>, vector<8x32xf32> -> vector<8x64xf32>
    %620 = vector.extract_strided_slice %609 {offsets = [0, 96], sizes = [8, 32], strides = [1, 1]} : vector<8x256xf32> to vector<8x32xf32>
    %621 = vector.extract_strided_slice %609 {offsets = [0, 224], sizes = [8, 32], strides = [1, 1]} : vector<8x256xf32> to vector<8x32xf32>
    %622 = tpu.concatenate %620, %621 in 1 : vector<8x32xf32>, vector<8x32xf32> -> vector<8x64xf32>
    %623 = arith.mulf %616, %581 : vector<8x64xf32>
    %624 = arith.mulf %613, %619 : vector<8x64xf32>
    %625 = arith.addf %623, %624 : vector<8x64xf32>
    %626 = math.tanh %625 : vector<8x64xf32>
    %627 = arith.mulf %622, %626 : vector<8x64xf32>
    %628 = vector.extract_strided_slice %627 {offsets = [0, 0], sizes = [8, 32], strides = [1, 1]} : vector<8x64xf32> to vector<8x32xf32>
    %629 = arith.index_cast %c5_i32_171 : i32 to index
    %c0_179 = arith.constant 0 : index
    %c0_180 = arith.constant 0 : index
    %630 = vector.load %arg12[%629, %c0_179, %c0_180] : memref<8x8x64xf32, #tpu.memory_space<vmem>>, vector<1x8x32xf32>
    %631 = vector.shape_cast %630 : vector<1x8x32xf32> to vector<8x32xf32>
    %632 = vector.shape_cast %628 : vector<8x32xf32> to vector<1x8x32xf32>
    tpu.vector_store %arg12[%629, %c0_179, %c0_180], %632 {strides = array<i32>} : memref<8x8x64xf32, #tpu.memory_space<vmem>>, vector<1x8x32xf32>,
    %633 = vector.extract_strided_slice %627 {offsets = [0, 32], sizes = [8, 32], strides = [1, 1]} : vector<8x64xf32> to vector<8x32xf32>
    %634 = arith.index_cast %594 : i32 to index
    %c0_181 = arith.constant 0 : index
    %c32_182 = arith.constant 32 : index
    %635 = vector.load %arg12[%634, %c0_181, %c32_182] : memref<8x8x64xf32, #tpu.memory_space<vmem>>, vector<1x8x32xf32>
    %636 = vector.shape_cast %635 : vector<1x8x32xf32> to vector<8x32xf32>
    %637 = vector.shape_cast %633 : vector<8x32xf32> to vector<1x8x32xf32>
    tpu.vector_store %arg12[%634, %c0_181, %c32_182], %637 {strides = array<i32>} : memref<8x8x64xf32, #tpu.memory_space<vmem>>, vector<1x8x32xf32>,
    %c6_i32_183 = arith.constant 6 : i32
    %c7_i32_184 = arith.constant 7 : i32
    %638 = arith.subi %c7_i32_184, %c6_i32_183 : i32
    %639 = arith.index_cast %c6_i32_183 : i32 to index
    %c0_185 = arith.constant 0 : index
    %c0_186 = arith.constant 0 : index
    %640 = vector.load %arg11[%639, %c0_185, %c0_186] : memref<8x8x256xf32, #tpu.memory_space<vmem>>, vector<1x8x128xf32>
    %641 = vector.shape_cast %640 : vector<1x8x128xf32> to vector<8x128xf32>
    %642 = arith.index_cast %638 : i32 to index
    %c0_187 = arith.constant 0 : index
    %c128_188 = arith.constant 128 : index
    %643 = vector.load %arg11[%642, %c0_187, %c128_188] : memref<8x8x256xf32, #tpu.memory_space<vmem>>, vector<1x8x128xf32>
    %644 = vector.shape_cast %643 : vector<1x8x128xf32> to vector<8x128xf32>
    %645 = tpu.concatenate %641, %644 in 1 : vector<8x128xf32>, vector<8x128xf32> -> vector<8x256xf32>
    %646 = arith.truncf %627 : vector<8x64xf32> to vector<8x64xbf16>
    %cst_189 = arith.constant dense<0.000000e+00> : vector<8x256xf32>
    %647 = tpu.matmul %646, %372, %cst_189 {dimension_numbers = #tpu.dot_dimension_numbers<[1], [0], [0], [1], [0, 0, 1, 1], [], []>} : vector<8x64xbf16>, vector<64x256xbf16>, vector<8x256xf32> -> vector<8x256xf32>
    %648 = arith.addf %645, %647 : vector<8x256xf32>
    %649 = arith.negf %648 : vector<8x256xf32>
    %650 = math.exp %649 : vector<8x256xf32>
    %cst_190 = arith.constant 1.000000e+00 : f32
    %651 = vector.broadcast %cst_190 : f32 to vector<8x256xf32>
    %652 = arith.addf %651, %650 : vector<8x256xf32>
    %653 = arith.divf %651, %652 : vector<8x256xf32>
    %654 = math.tanh %648 : vector<8x256xf32>
    %655 = vector.extract_strided_slice %653 {offsets = [0, 0], sizes = [8, 32], strides = [1, 1]} : vector<8x256xf32> to vector<8x32xf32>
    %656 = vector.extract_strided_slice %653 {offsets = [0, 128], sizes = [8, 32], strides = [1, 1]} : vector<8x256xf32> to vector<8x32xf32>
    %657 = tpu.concatenate %655, %656 in 1 : vector<8x32xf32>, vector<8x32xf32> -> vector<8x64xf32>
    %658 = vector.extract_strided_slice %653 {offsets = [0, 32], sizes = [8, 32], strides = [1, 1]} : vector<8x256xf32> to vector<8x32xf32>
    %659 = vector.extract_strided_slice %653 {offsets = [0, 160], sizes = [8, 32], strides = [1, 1]} : vector<8x256xf32> to vector<8x32xf32>
    %660 = tpu.concatenate %658, %659 in 1 : vector<8x32xf32>, vector<8x32xf32> -> vector<8x64xf32>
    %661 = vector.extract_strided_slice %654 {offsets = [0, 64], sizes = [8, 32], strides = [1, 1]} : vector<8x256xf32> to vector<8x32xf32>
    %662 = vector.extract_strided_slice %654 {offsets = [0, 192], sizes = [8, 32], strides = [1, 1]} : vector<8x256xf32> to vector<8x32xf32>
    %663 = tpu.concatenate %661, %662 in 1 : vector<8x32xf32>, vector<8x32xf32> -> vector<8x64xf32>
    %664 = vector.extract_strided_slice %653 {offsets = [0, 96], sizes = [8, 32], strides = [1, 1]} : vector<8x256xf32> to vector<8x32xf32>
    %665 = vector.extract_strided_slice %653 {offsets = [0, 224], sizes = [8, 32], strides = [1, 1]} : vector<8x256xf32> to vector<8x32xf32>
    %666 = tpu.concatenate %664, %665 in 1 : vector<8x32xf32>, vector<8x32xf32> -> vector<8x64xf32>
    %667 = arith.mulf %660, %625 : vector<8x64xf32>
    %668 = arith.mulf %657, %663 : vector<8x64xf32>
    %669 = arith.addf %667, %668 : vector<8x64xf32>
    %670 = math.tanh %669 : vector<8x64xf32>
    %671 = arith.mulf %666, %670 : vector<8x64xf32>
    %672 = vector.extract_strided_slice %671 {offsets = [0, 0], sizes = [8, 32], strides = [1, 1]} : vector<8x64xf32> to vector<8x32xf32>
    %673 = arith.index_cast %c6_i32_183 : i32 to index
    %c0_191 = arith.constant 0 : index
    %c0_192 = arith.constant 0 : index
    %674 = vector.load %arg12[%673, %c0_191, %c0_192] : memref<8x8x64xf32, #tpu.memory_space<vmem>>, vector<1x8x32xf32>
    %675 = vector.shape_cast %674 : vector<1x8x32xf32> to vector<8x32xf32>
    %676 = vector.shape_cast %672 : vector<8x32xf32> to vector<1x8x32xf32>
    tpu.vector_store %arg12[%673, %c0_191, %c0_192], %676 {strides = array<i32>} : memref<8x8x64xf32, #tpu.memory_space<vmem>>, vector<1x8x32xf32>,
    %677 = vector.extract_strided_slice %671 {offsets = [0, 32], sizes = [8, 32], strides = [1, 1]} : vector<8x64xf32> to vector<8x32xf32>
    %678 = arith.index_cast %638 : i32 to index
    %c0_193 = arith.constant 0 : index
    %c32_194 = arith.constant 32 : index
    %679 = vector.load %arg12[%678, %c0_193, %c32_194] : memref<8x8x64xf32, #tpu.memory_space<vmem>>, vector<1x8x32xf32>
    %680 = vector.shape_cast %679 : vector<1x8x32xf32> to vector<8x32xf32>
    %681 = vector.shape_cast %677 : vector<8x32xf32> to vector<1x8x32xf32>
    tpu.vector_store %arg12[%678, %c0_193, %c32_194], %681 {strides = array<i32>} : memref<8x8x64xf32, #tpu.memory_space<vmem>>, vector<1x8x32xf32>,
    %c7_i32_195 = arith.constant 7 : i32
    %c7_i32_196 = arith.constant 7 : i32
    %682 = arith.subi %c7_i32_196, %c7_i32_195 : i32
    %683 = arith.index_cast %c7_i32_195 : i32 to index
    %c0_197 = arith.constant 0 : index
    %c0_198 = arith.constant 0 : index
    %684 = vector.load %arg11[%683, %c0_197, %c0_198] : memref<8x8x256xf32, #tpu.memory_space<vmem>>, vector<1x8x128xf32>
    %685 = vector.shape_cast %684 : vector<1x8x128xf32> to vector<8x128xf32>
    %686 = arith.index_cast %682 : i32 to index
    %c0_199 = arith.constant 0 : index
    %c128_200 = arith.constant 128 : index
    %687 = vector.load %arg11[%686, %c0_199, %c128_200] : memref<8x8x256xf32, #tpu.memory_space<vmem>>, vector<1x8x128xf32>
    %688 = vector.shape_cast %687 : vector<1x8x128xf32> to vector<8x128xf32>
    %689 = tpu.concatenate %685, %688 in 1 : vector<8x128xf32>, vector<8x128xf32> -> vector<8x256xf32>
    %690 = arith.truncf %671 : vector<8x64xf32> to vector<8x64xbf16>
    %cst_201 = arith.constant dense<0.000000e+00> : vector<8x256xf32>
    %691 = tpu.matmul %690, %372, %cst_201 {dimension_numbers = #tpu.dot_dimension_numbers<[1], [0], [0], [1], [0, 0, 1, 1], [], []>} : vector<8x64xbf16>, vector<64x256xbf16>, vector<8x256xf32> -> vector<8x256xf32>
    %692 = arith.addf %689, %691 : vector<8x256xf32>
    %693 = arith.negf %692 : vector<8x256xf32>
    %694 = math.exp %693 : vector<8x256xf32>
    %cst_202 = arith.constant 1.000000e+00 : f32
    %695 = vector.broadcast %cst_202 : f32 to vector<8x256xf32>
    %696 = arith.addf %695, %694 : vector<8x256xf32>
    %697 = arith.divf %695, %696 : vector<8x256xf32>
    %698 = math.tanh %692 : vector<8x256xf32>
    %699 = vector.extract_strided_slice %697 {offsets = [0, 0], sizes = [8, 32], strides = [1, 1]} : vector<8x256xf32> to vector<8x32xf32>
    %700 = vector.extract_strided_slice %697 {offsets = [0, 128], sizes = [8, 32], strides = [1, 1]} : vector<8x256xf32> to vector<8x32xf32>
    %701 = tpu.concatenate %699, %700 in 1 : vector<8x32xf32>, vector<8x32xf32> -> vector<8x64xf32>
    %702 = vector.extract_strided_slice %697 {offsets = [0, 32], sizes = [8, 32], strides = [1, 1]} : vector<8x256xf32> to vector<8x32xf32>
    %703 = vector.extract_strided_slice %697 {offsets = [0, 160], sizes = [8, 32], strides = [1, 1]} : vector<8x256xf32> to vector<8x32xf32>
    %704 = tpu.concatenate %702, %703 in 1 : vector<8x32xf32>, vector<8x32xf32> -> vector<8x64xf32>
    %705 = vector.extract_strided_slice %698 {offsets = [0, 64], sizes = [8, 32], strides = [1, 1]} : vector<8x256xf32> to vector<8x32xf32>
    %706 = vector.extract_strided_slice %698 {offsets = [0, 192], sizes = [8, 32], strides = [1, 1]} : vector<8x256xf32> to vector<8x32xf32>
    %707 = tpu.concatenate %705, %706 in 1 : vector<8x32xf32>, vector<8x32xf32> -> vector<8x64xf32>
    %708 = vector.extract_strided_slice %697 {offsets = [0, 96], sizes = [8, 32], strides = [1, 1]} : vector<8x256xf32> to vector<8x32xf32>
    %709 = vector.extract_strided_slice %697 {offsets = [0, 224], sizes = [8, 32], strides = [1, 1]} : vector<8x256xf32> to vector<8x32xf32>
    %710 = tpu.concatenate %708, %709 in 1 : vector<8x32xf32>, vector<8x32xf32> -> vector<8x64xf32>
    %711 = arith.mulf %704, %669 : vector<8x64xf32>
    %712 = arith.mulf %701, %707 : vector<8x64xf32>
    %713 = arith.addf %711, %712 : vector<8x64xf32>
    %714 = math.tanh %713 : vector<8x64xf32>
    %715 = arith.mulf %710, %714 : vector<8x64xf32>
    %716 = vector.extract_strided_slice %715 {offsets = [0, 0], sizes = [8, 32], strides = [1, 1]} : vector<8x64xf32> to vector<8x32xf32>
    %717 = arith.index_cast %c7_i32_195 : i32 to index
    %c0_203 = arith.constant 0 : index
    %c0_204 = arith.constant 0 : index
    %718 = vector.load %arg12[%717, %c0_203, %c0_204] : memref<8x8x64xf32, #tpu.memory_space<vmem>>, vector<1x8x32xf32>
    %719 = vector.shape_cast %718 : vector<1x8x32xf32> to vector<8x32xf32>
    %720 = vector.shape_cast %716 : vector<8x32xf32> to vector<1x8x32xf32>
    tpu.vector_store %arg12[%717, %c0_203, %c0_204], %720 {strides = array<i32>} : memref<8x8x64xf32, #tpu.memory_space<vmem>>, vector<1x8x32xf32>,
    %721 = vector.extract_strided_slice %715 {offsets = [0, 32], sizes = [8, 32], strides = [1, 1]} : vector<8x64xf32> to vector<8x32xf32>
    %722 = arith.index_cast %682 : i32 to index
    %c0_205 = arith.constant 0 : index
    %c32_206 = arith.constant 32 : index
    %723 = vector.load %arg12[%722, %c0_205, %c32_206] : memref<8x8x64xf32, #tpu.memory_space<vmem>>, vector<1x8x32xf32>
    %724 = vector.shape_cast %723 : vector<1x8x32xf32> to vector<8x32xf32>
    %725 = vector.shape_cast %721 : vector<8x32xf32> to vector<1x8x32xf32>
    tpu.vector_store %arg12[%722, %c0_205, %c32_206], %725 {strides = array<i32>} : memref<8x8x64xf32, #tpu.memory_space<vmem>>, vector<1x8x32xf32>,
    %c8_i32_207 = arith.constant 8 : i32
    %c0_208 = arith.constant 0 : index
    %c0_209 = arith.constant 0 : index
    %c0_210 = arith.constant 0 : index
    %726 = vector.load %arg12[%c0_208, %c0_209, %c0_210] : memref<8x8x64xf32, #tpu.memory_space<vmem>>, vector<8x8x64xf32>
    %727 = vector.shape_cast %726 : vector<8x8x64xf32> to vector<64x64xf32>
    %728 = arith.truncf %727 : vector<64x64xf32> to vector<64x64xbf16>
    %c0_211 = arith.constant 0 : index
    %c0_212 = arith.constant 0 : index
    %729 = vector.load %arg8[%c0_211, %c0_212] : memref<64x128xbf16, #tpu.memory_space<vmem>>, vector<64x128xbf16>
    %cst_213 = arith.constant dense<0.000000e+00> : vector<64x128xf32>
    %730 = tpu.matmul %728, %729, %cst_213 {dimension_numbers = #tpu.dot_dimension_numbers<[1], [0], [0], [1], [0, 0, 1, 1], [], []>} : vector<64x64xbf16>, vector<64x128xbf16>, vector<64x128xf32> -> vector<64x128xf32>
    %c0_214 = arith.constant 0 : index
    %c0_215 = arith.constant 0 : index
    %731 = vector.load %arg9[%c0_214, %c0_215] : memref<1x128xf32, #tpu.memory_space<vmem>>, vector<1x128xf32>
    %732 = vector.broadcast %731 : vector<1x128xf32> to vector<64x128xf32>
    %733 = arith.addf %730, %732 : vector<64x128xf32>
    %c0_216 = arith.constant 0 : index
    %c0_217 = arith.constant 0 : index
    %734 = vector.load %arg10[%c0_216, %c0_217] : memref<64x128xf32, #tpu.memory_space<vmem>>, vector<64x128xf32>
    tpu.vector_store %arg10[%c0_216, %c0_217], %733 {strides = array<i32>} : memref<64x128xf32, #tpu.memory_space<vmem>>, vector<64x128xf32>,
    return
  }
  func.func @transform_0(%arg0: i32) -> (i32, i32) {
    %c0_i32 = arith.constant 0 : i32
    %c0_i32_0 = arith.constant 0 : i32
    %c0_i32_1 = arith.constant 0 : i32
    return %c0_i32, %c0_i32_0 : i32, i32
  }
  func.func @transform_1(%arg0: i32) -> (i32, i32) {
    %c0_i32 = arith.constant 0 : i32
    %c0_i32_0 = arith.constant 0 : i32
    %c0_i32_1 = arith.constant 0 : i32
    return %c0_i32, %c0_i32_0 : i32, i32
  }
  func.func @transform_2(%arg0: i32) -> (i32, i32) {
    %c0_i32 = arith.constant 0 : i32
    %c0_i32_0 = arith.constant 0 : i32
    %c0_i32_1 = arith.constant 0 : i32
    return %c0_i32, %c0_i32_0 : i32, i32
  }
  func.func @transform_3(%arg0: i32) -> (i32, i32) {
    %c0_i32 = arith.constant 0 : i32
    %c0_i32_0 = arith.constant 0 : i32
    %c0_i32_1 = arith.constant 0 : i32
    return %c0_i32, %c0_i32_0 : i32, i32
  }
  func.func @transform_4(%arg0: i32) -> (i32, i32) {
    %c0_i32 = arith.constant 0 : i32
    %c0_i32_0 = arith.constant 0 : i32
    %c0_i32_1 = arith.constant 0 : i32
    return %c0_i32, %c0_i32_0 : i32, i32
  }
  func.func @transform_5(%arg0: i32) -> (i32, i32) {
    %c0_i32 = arith.constant 0 : i32
    %c0_i32_0 = arith.constant 0 : i32
    %c0_i32_1 = arith.constant 0 : i32
    return %c0_i32, %c0_i32_0 : i32, i32
  }
  func.func @transform_6(%arg0: i32) -> (i32, i32) {
    %c0_i32 = arith.constant 0 : i32
    %c0_i32_0 = arith.constant 0 : i32
    %c0_i32_1 = arith.constant 0 : i32
    return %c0_i32, %c0_i32_0 : i32, i32
  }
  func.func @transform_7(%arg0: i32) -> (i32, i32) {
    %c0_i32 = arith.constant 0 : i32
    %c0_i32_0 = arith.constant 0 : i32
    %c0_i32_1 = arith.constant 0 : i32
    return %c0_i32, %c0_i32_0 : i32, i32
  }
  func.func @transform_8(%arg0: i32) -> (i32, i32) {
    %c0_i32 = arith.constant 0 : i32
    %c0_i32_0 = arith.constant 0 : i32
    %c0_i32_1 = arith.constant 0 : i32
    return %c0_i32, %c0_i32_0 : i32, i32
  }
  func.func @transform_9(%arg0: i32) -> (i32, i32) {
    %c0_i32 = arith.constant 0 : i32
    %c0_i32_0 = arith.constant 0 : i32
    %c0_i32_1 = arith.constant 0 : i32
    return %c0_i32, %c0_i32_0 : i32, i32
  }
}

</mosaic_0001>

<llo_original>
// kernel: tg_rnn_forward.1
$region0: #{tg_rnn_forward.1}
  #allocation0 [shape = 'u32[]', space=smem, size = 0x4, offset = 0x4, fixed_abs, tag = 'smem constant byte address 0x4 - core index']
  #allocation1 [shape = 'u32[72,128]{1,0:T(1,128)}', space=vmem, size = 0x9000, scoped, tag = 'internal scratch']
  #allocation2 [shape = 'f32[8,8,256]{2,1,0:T(8,128)}', space=vmem, size = 0x10000, scoped, tag = 'scratch operand']
  #allocation3 [shape = 'f32[8,8,64]{2,1,0:T(8,128)}', space=vmem, size = 0x8000, scoped, tag = 'scratch operand']
  %s0 = inlined_call_operand.vmem [shape: bf16[64,4], index: 0, kind: input, shape index: {}]
  %s1 = inlined_call_operand.vmem [shape: bf16[4,256], index: 1, kind: input, shape index: {}]
  %s2 = inlined_call_operand.vmem [shape: f32[1,256], index: 2, kind: input, shape index: {}]
  %s3 = inlined_call_operand.vmem [shape: bf16[64,256], index: 3, kind: input, shape index: {}]
  %s4 = inlined_call_operand.hbm [shape: bf16[64,256], index: 4, kind: input, shape index: {}]
  %s5 = inlined_call_operand.vmem [shape: f32[1,256], index: 5, kind: input, shape index: {}]
  %s6 = inlined_call_operand.vmem [shape: bf16[64,256], index: 6, kind: input, shape index: {}]
  %s7 = inlined_call_operand.vmem [shape: bf16[64,128], index: 7, kind: input, shape index: {}]
  %s8 = inlined_call_operand.vmem [shape: f32[1,128], index: 8, kind: input, shape index: {}]
  %s9 = inlined_call_operand.vmem [shape: f32[64,128], index: 9, kind: output, shape index: {}]
  %s10 = sld [smem:[#allocation0]]
  $region50: #{tg_rnn_forward.1} parent=0
    _
  %s12 = ssub.s32 1, %s10
  %s13 = scalar_select 0, %s12, %s10
  $region1: #{tg_rnn_forward.1} parent=0
    #allocation4 [shape = 'u8[32768]{0}', space=vmem, size = 0x8000, scoped, tag = 'input window, operand 4, single buffered']
    #allocation5 [shape = 's32[1]{0}', space=sflag, size = 0x4, scoped, tag = 'scoped memory for tg_rnn_forward.1']
    %14 = vsyncpa [#allocation5], 0
    // Predicated region
    $region2: #{tg_rnn_forward.1} parent=1 // pred_check
      _
    $region3: #{tg_rnn_forward.1} parent=1 // pred_check_branch
      %16 = sbr.rel (0) target = $region5
    $region4: #{tg_rnn_forward.1} parent=1 // pred_region
      _
    $region5: #{tg_rnn_forward.1} parent=1 // pred_fallthru
      _
    // Predicated region
    $region6: #{tg_rnn_forward.1} parent=1 // pred_check
      _
    $region7: #{tg_rnn_forward.1} parent=1 // pred_check_branch
      %18 = sbr.rel (0) target = $region9
    $region8: #{tg_rnn_forward.1} parent=1 // pred_region
      _
    $region9: #{tg_rnn_forward.1} parent=1 // pred_fallthru
      _
    // Predicated region
    $region10: #{tg_rnn_forward.1} parent=1 // pred_check
      _
    $region11: #{tg_rnn_forward.1} parent=1 // pred_check_branch
      %20 = sbr.rel (0) target = $region13
    $region12: #{tg_rnn_forward.1} parent=1 // pred_region
      _
    $region13: #{tg_rnn_forward.1} parent=1 // pred_fallthru
      _
    // Predicated region
    $region14: #{tg_rnn_forward.1} parent=1 // pred_check
      _
    $region15: #{tg_rnn_forward.1} parent=1 // pred_check_branch
      %22 = sbr.rel (0) target = $region17
    $region16: #{tg_rnn_forward.1} parent=1 // pred_region
      _
    $region17: #{tg_rnn_forward.1} parent=1 // pred_fallthru
      _
    // Predicated region
    $region18: #{tg_rnn_forward.1} parent=1 // pred_check
      _
    $region19: #{tg_rnn_forward.1} parent=1 // pred_check_branch
      %24 = sbr.rel (0) target = $region21
    $region20: #{tg_rnn_forward.1} parent=1 // pred_region
      %26 = vsyncadd [#allocation5], 0
      %s27 = sshll.u32 %s4, 4
      %s28 = int_to_ptr.hbm [resolvable:$true] %s27
      %s29 = sshll.u32 [#allocation4], 4
      %s30 = int_to_ptr.vmem [resolvable:$true] %s29
      %35 = dma.hbm_to_vmem [thread:$0]  %s28, 1024, %s30, [#allocation5], 128, 128, 8
    $region21: #{tg_rnn_forward.1} parent=1 // pred_fallthru
      _
    // Predicated region
    $region22: #{tg_rnn_forward.1} parent=1 // pred_check
      _
    $region23: #{tg_rnn_forward.1} parent=1 // pred_check_branch
      %37 = sbr.rel (0) target = $region25
    $region24: #{tg_rnn_forward.1} parent=1 // pred_region
      _
    $region25: #{tg_rnn_forward.1} parent=1 // pred_fallthru
      _
    // Predicated region
    $region26: #{tg_rnn_forward.1} parent=1 // pred_check
      _
    $region27: #{tg_rnn_forward.1} parent=1 // pred_check_branch
      %39 = sbr.rel (0) target = $region29
    $region28: #{tg_rnn_forward.1} parent=1 // pred_region
      _
    $region29: #{tg_rnn_forward.1} parent=1 // pred_fallthru
      _
    // Predicated region
    $region30: #{tg_rnn_forward.1} parent=1 // pred_check
      _
    $region31: #{tg_rnn_forward.1} parent=1 // pred_check_branch
      %41 = sbr.rel (0) target = $region33
    $region32: #{tg_rnn_forward.1} parent=1 // pred_region
      _
    $region33: #{tg_rnn_forward.1} parent=1 // pred_fallthru
      _
    // Predicated region
    $region34: #{tg_rnn_forward.1} parent=1 // pred_check
      _
    $region35: #{tg_rnn_forward.1} parent=1 // pred_check_branch
      %43 = sbr.rel (0) target = $region37
    $region36: #{tg_rnn_forward.1} parent=1 // pred_region
      _
    $region37: #{tg_rnn_forward.1} parent=1 // pred_fallthru
      _
    // Predicated region
    $region38: #{tg_rnn_forward.1} parent=1 // pred_check
      _
    $region39: #{tg_rnn_forward.1} parent=1 // pred_check_branch
      %45 = sbr.rel (0) target = $region41
    $region40: #{tg_rnn_forward.1} parent=1 // pred_region
      %47 = dma.done [#allocation5], 1024
    $region41: #{tg_rnn_forward.1} parent=1 // pred_fallthru
      _
    %v49 = vld [vmem:[%s0] sm:$0xf]
    %v50 = vld [vmem:[%s0 + $0x4] sm:$0xf]
    %v51 = vld [vmem:[%s0 + $0x8] sm:$0xf]
    %v52 = vld [vmem:[%s0 + $0xc] sm:$0xf]
    %v53 = vld [vmem:[%s0 + $0x10] sm:$0xf]
    %v54 = vld [vmem:[%s0 + $0x14] sm:$0xf]
    %v55 = vld [vmem:[%s0 + $0x18] sm:$0xf]
    %v56 = vld [vmem:[%s0 + $0x1c] sm:$0xf]
    %v57 = vld [vmem:[%s1] sm:$0xf]
    %v58 = vld [vmem:[%s2] sm:$0x3]
    %v60 = vperm.slane %v58, 0
    %v61 = vperm.slane %v58, 1
    %v72 = vunpack.c.l.b16 %v49
    %v73 = vunpack.c.l.b16 %v50
    %v74 = vunpack.c.l.b16 %v51
    %v75 = vunpack.c.l.b16 %v52
    %v76 = vunpack.c.l.b16 %v53
    %v77 = vunpack.c.l.b16 %v54
    %v78 = vunpack.c.l.b16 %v55
    %v79 = vunpack.c.l.b16 %v56
    %v80 = vpack.c.b16 %v73, %v72
    %v81 = vpack.c.b16 %v75, %v74
    %v82 = vpack.c.b16 %v77, %v76
    %v83 = vpack.c.b16 %v79, %v78
    %85 = vst [vmem:[#allocation1] ss:$4 sm:$0xff] %v57
    %v86 = vld.sshfl [vmem:[#allocation1] sm:$0xff pattern:$0x73625140]
    %v87 = vld.sshfl [vmem:[#allocation1 + $0x8] sm:$0xff pattern:$0x73625140]
    %vm88 = vcmask 31744
    %v90 = vsel %vm88, %v80, 0
    %v93 = vsel %vm88, %v81, 0
    %v96 = vsel %vm88, %v82, 0
    %v99 = vsel %vm88, %v83, 0
    %vm101 = vcmask 1041408
    %v102 = vsel %vm101, %v86, 0
    %v104 = vsel %vm101, %v87, 0
    %106 = vmatpush.bf16.msra.mxu0 0
    %107 = vmatpush.bf16.msra.mxu0 0
    %108 = vmatpush.bf16.msra.mxu0 0
    %109 = vmatpush.bf16.msra.mxu0 0
    %110 = vmatpush.bf16.msra.mxu0 0
    %111 = vmatpush.bf16.msra.mxu0 0
    %112 = vmatpush.bf16.msra.mxu0 0
    %113 = vmatpush.bf16.msra.mxu0 %v102
    %114 = vmatmul.bf16.gmra.mxu0 %v90
    %v115 = vpop.f32.mrf.mxu0
    %v116 = vadd.f32 %v60, %v115
    %v117 = vpop.f32.mrf.mxu0
    %v118 = vadd.f32 %v60, %v117
    %119 = vmatmul.bf16.gmra.mxu0 %v93
    %v120 = vpop.f32.mrf.mxu0
    %v121 = vadd.f32 %v60, %v120
    %v122 = vpop.f32.mrf.mxu0
    %v123 = vadd.f32 %v60, %v122
    %124 = vmatmul.bf16.gmra.mxu0 %v96
    %v125 = vpop.f32.mrf.mxu0
    %v126 = vadd.f32 %v60, %v125
    %v127 = vpop.f32.mrf.mxu0
    %v128 = vadd.f32 %v60, %v127
    %129 = vmatmul.bf16.gmra.mxu0 %v99
    %v130 = vpop.f32.mrf.mxu0
    %v131 = vadd.f32 %v60, %v130
    %v132 = vpop.f32.mrf.mxu0
    %v133 = vadd.f32 %v60, %v132
    %134 = vdwg.mxu0
    %135 = vmatpush.bf16.msra.mxu0 0
    %136 = vmatpush.bf16.msra.mxu0 0
    %137 = vmatpush.bf16.msra.mxu0 0
    %138 = vmatpush.bf16.msra.mxu0 0
    %139 = vmatpush.bf16.msra.mxu0 0
    %140 = vmatpush.bf16.msra.mxu0 0
    %141 = vmatpush.bf16.msra.mxu0 0
    %142 = vmatpush.bf16.msra.mxu0 %v104
    %143 = vmatmul.bf16.gmra.mxu0 %v90
    %v144 = vpop.f32.mrf.mxu0
    %v145 = vadd.f32 %v61, %v144
    %v146 = vpop.f32.mrf.mxu0
    %v147 = vadd.f32 %v61, %v146
    %148 = vmatmul.bf16.gmra.mxu0 %v93
    %v149 = vpop.f32.mrf.mxu0
    %v150 = vadd.f32 %v61, %v149
    %v151 = vpop.f32.mrf.mxu0
    %v152 = vadd.f32 %v61, %v151
    %153 = vmatmul.bf16.gmra.mxu0 %v96
    %v154 = vpop.f32.mrf.mxu0
    %v155 = vadd.f32 %v61, %v154
    %v156 = vpop.f32.mrf.mxu0
    %v157 = vadd.f32 %v61, %v156
    %158 = vmatmul.bf16.gmra.mxu0 %v99
    %v159 = vpop.f32.mrf.mxu0
    %v160 = vadd.f32 %v61, %v159
    %v161 = vpop.f32.mrf.mxu0
    %v162 = vadd.f32 %v61, %v161
    %163 = vdwg.mxu0
    %164 = vst [vmem:[#allocation2] sm:$0xff] %v116
    %165 = vst [vmem:[#allocation2 + $0x8] sm:$0xff] %v145
    %166 = vst [vmem:[#allocation2 + $0x10] sm:$0xff] %v118
    %167 = vst [vmem:[#allocation2 + $0x18] sm:$0xff] %v147
    %168 = vst [vmem:[#allocation2 + $0x20] sm:$0xff] %v121
    %169 = vst [vmem:[#allocation2 + $0x28] sm:$0xff] %v150
    %170 = vst [vmem:[#allocation2 + $0x30] sm:$0xff] %v123
    %171 = vst [vmem:[#allocation2 + $0x38] sm:$0xff] %v152
    %172 = vst [vmem:[#allocation2 + $0x40] sm:$0xff] %v126
    %173 = vst [vmem:[#allocation2 + $0x48] sm:$0xff] %v155
    %174 = vst [vmem:[#allocation2 + $0x50] sm:$0xff] %v128
    %175 = vst [vmem:[#allocation2 + $0x58] sm:$0xff] %v157
    %176 = vst [vmem:[#allocation2 + $0x60] sm:$0xff] %v131
    %177 = vst [vmem:[#allocation2 + $0x68] sm:$0xff] %v160
    %178 = vst [vmem:[#allocation2 + $0x70] sm:$0xff] %v133
    %179 = vst [vmem:[#allocation2 + $0x78] sm:$0xff] %v162
    %v180 = vld [vmem:[%s3] sm:$0xff]
    %v181 = vld [vmem:[%s3 + $0x8] sm:$0xff]
    %v182 = vld [vmem:[%s3 + $0x10] sm:$0xff]
    %v183 = vld [vmem:[%s3 + $0x18] sm:$0xff]
    %v184 = vld [vmem:[%s3 + $0x20] sm:$0xff]
    %v185 = vld [vmem:[%s3 + $0x28] sm:$0xff]
    %v186 = vld [vmem:[%s3 + $0x30] sm:$0xff]
    %v187 = vld [vmem:[%s3 + $0x38] sm:$0xff]
    %v188 = vld [vmem:[#allocation2] sm:$0xff]
    %s189 = scalar_lea.vmem [#allocation2], 112
    %v190 = vld [vmem:[%s189 + $0x8] sm:$0xff]
    %v199 = vunpack.c.l.b16 %v180
    %v200 = vunpack.c.h.b16 %v180
    %v201 = vunpack.c.l.b16 %v181
    %v202 = vunpack.c.h.b16 %v181
    %v203 = vunpack.c.l.b16 %v182
    %v204 = vunpack.c.h.b16 %v182
    %v205 = vunpack.c.l.b16 %v183
    %v206 = vunpack.c.h.b16 %v183
    %v207 = vunpack.c.l.b16 %v184
    %v208 = vunpack.c.h.b16 %v184
    %v209 = vunpack.c.l.b16 %v185
    %v210 = vunpack.c.h.b16 %v185
    %v211 = vunpack.c.l.b16 %v186
    %v212 = vunpack.c.h.b16 %v186
    %v213 = vunpack.c.l.b16 %v187
    %v214 = vunpack.c.h.b16 %v187
    %v215 = vpack.c.b16 %v201, %v199
    %v216 = vpack.c.b16 %v202, %v200
    %v217 = vpack.c.b16 %v205, %v203
    %v218 = vpack.c.b16 %v206, %v204
    %v219 = vpack.c.b16 %v209, %v207
    %v220 = vpack.c.b16 %v210, %v208
    %v221 = vpack.c.b16 %v213, %v211
    %v222 = vpack.c.b16 %v214, %v212
    %vm231 = vcmask 523264
    %v233 = vsel %vm231, 0, 0
    %235 = vmatpush.bf16.msra.mxu0 0
    %236 = vmatpush.bf16.msra.mxu0 0
    %237 = vmatpush.bf16.msra.mxu0 0
    %238 = vmatpush.bf16.msra.mxu0 0
    %239 = vmatpush.bf16.msra.mxu0 %v221
    %240 = vmatpush.bf16.msra.mxu0 %v219
    %241 = vmatpush.bf16.msra.mxu0 %v217
    %242 = vmatpush.bf16.msra.mxu0 %v215
    %243 = vmatmul.bf16.gmra.mxu0 %v233
    %v244 = vpop.f32.mrf.mxu0
    %v245 = vadd.f32 0.0, %v244
    %v246 = vpop.f32.mrf.mxu0
    %247 = vdwg.mxu0
    %248 = vmatpush.bf16.msra.mxu0 0
    %249 = vmatpush.bf16.msra.mxu0 0
    %250 = vmatpush.bf16.msra.mxu0 0
    %251 = vmatpush.bf16.msra.mxu0 0
    %252 = vmatpush.bf16.msra.mxu0 %v222
    %253 = vmatpush.bf16.msra.mxu0 %v220
    %254 = vmatpush.bf16.msra.mxu0 %v218
    %255 = vmatpush.bf16.msra.mxu0 %v216
    %256 = vmatmul.bf16.gmra.mxu0 %v233
    %v257 = vpop.f32.mrf.mxu0
    %v258 = vadd.f32 0.0, %v257
    %v259 = vpop.f32.mrf.mxu0
    %260 = vdwg.mxu0
    %v261 = vadd.f32 %v188, %v245
    %v262 = vadd.f32 %v190, %v258
    %v263 = vxor.u32 %v261, 2147483648
    %v264 = vxor.u32 %v262, 2147483648
    %v265 = vmul.f32 %v263, 1.442695
    %v266 = vpow.pop %v265
    %v267 = vmul.f32 %v264, 1.442695
    %v268 = vpow.pop %v267
    %v269 = vadd.f32 %v266, 1.0
    %v270 = vadd.f32 %v268, 1.0
    %v271 = vrcp.pop %v269
    %v272 = vmul.f32 %v269, %v271
    %v273 = vsub.f32 1.0, %v272
    %v274 = vmul.f32 %v271, %v273
    %v275 = vadd.f32 %v271, %v274
    %vm276 = vweird.f32 %v269
    %vm277 = vweird.f32 %v271
    %vm278 = vmor %vm276, %vm277
    %v279 = vsel %vm278, %v271, %v275
    %v280 = vand.u32 2147483647, %v269
    %vm281 = vcmp.eq.f32.partialorder %v280, 8.507059e+37
    %v282 = vand.u32 %v269, 2147483648
    %v283 = vor.u32 1.1754944e-38, %v282
    %v284 = vsel %vm281, %v283, %v279
    %v285 = vmul.f32 1.0, %v284
    %v286 = vrcp.pop %v270
    %v287 = vmul.f32 %v270, %v286
    %v288 = vsub.f32 1.0, %v287
    %v289 = vmul.f32 %v286, %v288
    %v290 = vadd.f32 %v286, %v289
    %vm291 = vweird.f32 %v270
    %vm292 = vweird.f32 %v286
    %vm293 = vmor %vm291, %vm292
    %v294 = vsel %vm293, %v286, %v290
    %v295 = vand.u32 2147483647, %v270
    %vm296 = vcmp.eq.f32.partialorder %v295, 8.507059e+37
    %v297 = vand.u32 %v270, 2147483648
    %v298 = vor.u32 1.1754944e-38, %v297
    %v299 = vsel %vm296, %v298, %v294
    %v300 = vmul.f32 1.0, %v299
    %v301 = vtanh.pop %v261
    %v302 = vtanh.pop %v262
    %304 = vrot.lane.b32.xlu0 %v300, 32
    %v305 = vpop.permute.xlu0 %304
    %vm307 = vcmask 261120
    %v308 = vsel %vm307, %v285, %v305
    %310 = vrot.lane.b32.xlu0 %v285, 96
    %v311 = vpop.permute.xlu0 %310
    %v313 = vsel %vm307, %v311, %v300
    %315 = vrot.lane.b32.xlu0 %v301, 64
    %v316 = vpop.permute.xlu0 %315
    %319 = vrot.lane.b32.xlu0 %v302, 96
    %v320 = vpop.permute.xlu0 %319
    %v322 = vsel %vm307, %v316, %v320
    %323 = vrot.lane.b32.xlu0 %v285, 32
    %v324 = vpop.permute.xlu0 %323
    %326 = vrot.lane.b32.xlu0 %v300, 64
    %v327 = vpop.permute.xlu0 %326
    %v329 = vsel %vm307, %v324, %v327
    %v330 = vmul.f32 %v313, 0.0
    %v331 = vmul.f32 %v308, %v322
    %v332 = vadd.f32 %v330, %v331
    %v333 = vtanh.pop %v332
    %v334 = vmul.f32 %v329, %v333
    %335 = vst.msk [vmem:[#allocation3] sm:$0xff] %vm307, %v334
    %s336 = scalar_lea.vmem [#allocation3], 56
    %vm337 = vcmask 523520
    %338 = vst.msk [vmem:[%s336] sm:$0xff] %vm337, %v334
    %s339 = scalar_lea.vmem [#allocation2], 16
    %v340 = vld [vmem:[%s339] sm:$0xff]
    %s341 = scalar_lea.vmem [#allocation2], 96
    %v342 = vld [vmem:[%s341 + $0x8] sm:$0xff]
    %v343 = vpack.c.bf16 %v334, %v334
    %v345 = vsel %vm231, %v343, 0
    %347 = vmatpush.bf16.msra.mxu0 0
    %348 = vmatpush.bf16.msra.mxu0 0
    %349 = vmatpush.bf16.msra.mxu0 0
    %350 = vmatpush.bf16.msra.mxu0 0
    %351 = vmatpush.bf16.msra.mxu0 %v221
    %352 = vmatpush.bf16.msra.mxu0 %v219
    %353 = vmatpush.bf16.msra.mxu0 %v217
    %354 = vmatpush.bf16.msra.mxu0 %v215
    %355 = vmatmul.bf16.gmra.mxu0 %v345
    %v356 = vpop.f32.mrf.mxu0
    %v357 = vadd.f32 0.0, %v356
    %v358 = vpop.f32.mrf.mxu0
    %359 = vdwg.mxu0
    %360 = vmatpush.bf16.msra.mxu0 0
    %361 = vmatpush.bf16.msra.mxu0 0
    %362 = vmatpush.bf16.msra.mxu0 0
    %363 = vmatpush.bf16.msra.mxu0 0
    %364 = vmatpush.bf16.msra.mxu0 %v222
    %365 = vmatpush.bf16.msra.mxu0 %v220
    %366 = vmatpush.bf16.msra.mxu0 %v218
    %367 = vmatpush.bf16.msra.mxu0 %v216
    %368 = vmatmul.bf16.gmra.mxu0 %v345
    %v369 = vpop.f32.mrf.mxu0
    %v370 = vadd.f32 0.0, %v369
    %v371 = vpop.f32.mrf.mxu0
    %372 = vdwg.mxu0
    %v373 = vadd.f32 %v340, %v357
    %v374 = vadd.f32 %v342, %v370
    %v375 = vxor.u32 %v373, 2147483648
    %v376 = vxor.u32 %v374, 2147483648
    %v377 = vmul.f32 %v375, 1.442695
    %v378 = vpow.pop %v377
    %v379 = vmul.f32 %v376, 1.442695
    %v380 = vpow.pop %v379
    %v381 = vadd.f32 %v378, 1.0
    %v382 = vadd.f32 %v380, 1.0
    %v383 = vrcp.pop %v381
    %v384 = vmul.f32 %v381, %v383
    %v385 = vsub.f32 1.0, %v384
    %v386 = vmul.f32 %v383, %v385
    %v387 = vadd.f32 %v383, %v386
    %vm388 = vweird.f32 %v381
    %vm389 = vweird.f32 %v383
    %vm390 = vmor %vm388, %vm389
    %v391 = vsel %vm390, %v383, %v387
    %v392 = vand.u32 2147483647, %v381
    %vm393 = vcmp.eq.f32.partialorder %v392, 8.507059e+37
    %v394 = vand.u32 %v381, 2147483648
    %v395 = vor.u32 1.1754944e-38, %v394
    %v396 = vsel %vm393, %v395, %v391
    %v397 = vmul.f32 1.0, %v396
    %v398 = vrcp.pop %v382
    %v399 = vmul.f32 %v382, %v398
    %v400 = vsub.f32 1.0, %v399
    %v401 = vmul.f32 %v398, %v400
    %v402 = vadd.f32 %v398, %v401
    %vm403 = vweird.f32 %v382
    %vm404 = vweird.f32 %v398
    %vm405 = vmor %vm403, %vm404
    %v406 = vsel %vm405, %v398, %v402
    %v407 = vand.u32 2147483647, %v382
    %vm408 = vcmp.eq.f32.partialorder %v407, 8.507059e+37
    %v409 = vand.u32 %v382, 2147483648
    %v410 = vor.u32 1.1754944e-38, %v409
    %v411 = vsel %vm408, %v410, %v406
    %v412 = vmul.f32 1.0, %v411
    %v413 = vtanh.pop %v373
    %v414 = vtanh.pop %v374
    %416 = vrot.lane.b32.xlu0 %v412, 32
    %v417 = vpop.permute.xlu0 %416
    %v419 = vsel %vm307, %v397, %v417
    %421 = vrot.lane.b32.xlu0 %v397, 96
    %v422 = vpop.permute.xlu0 %421
    %v424 = vsel %vm307, %v422, %v412
    %426 = vrot.lane.b32.xlu0 %v413, 64
    %v427 = vpop.permute.xlu0 %426
    %430 = vrot.lane.b32.xlu0 %v414, 96
    %v431 = vpop.permute.xlu0 %430
    %v433 = vsel %vm307, %v427, %v431
    %434 = vrot.lane.b32.xlu0 %v397, 32
    %v435 = vpop.permute.xlu0 %434
    %437 = vrot.lane.b32.xlu0 %v412, 64
    %v438 = vpop.permute.xlu0 %437
    %v440 = vsel %vm307, %v435, %v438
    %v441 = vmul.f32 %v424, %v332
    %v442 = vmul.f32 %v419, %v433
    %v443 = vadd.f32 %v441, %v442
    %v444 = vtanh.pop %v443
    %v445 = vmul.f32 %v440, %v444
    %s446 = scalar_lea.vmem [#allocation3], 8
    %447 = vst.msk [vmem:[%s446] sm:$0xff] %vm307, %v445
    %s448 = scalar_lea.vmem [#allocation3], 48
    %449 = vst.msk [vmem:[%s448] sm:$0xff] %vm337, %v445
    %s450 = scalar_lea.vmem [#allocation2], 32
    %v451 = vld [vmem:[%s450] sm:$0xff]
    %s452 = scalar_lea.vmem [#allocation2], 80
    %v453 = vld [vmem:[%s452 + $0x8] sm:$0xff]
    %v454 = vpack.c.bf16 %v445, %v445
    %v456 = vsel %vm231, %v454, 0
    %458 = vmatpush.bf16.msra.mxu0 0
    %459 = vmatpush.bf16.msra.mxu0 0
    %460 = vmatpush.bf16.msra.mxu0 0
    %461 = vmatpush.bf16.msra.mxu0 0
    %462 = vmatpush.bf16.msra.mxu0 %v221
    %463 = vmatpush.bf16.msra.mxu0 %v219
    %464 = vmatpush.bf16.msra.mxu0 %v217
    %465 = vmatpush.bf16.msra.mxu0 %v215
    %466 = vmatmul.bf16.gmra.mxu0 %v456
    %v467 = vpop.f32.mrf.mxu0
    %v468 = vadd.f32 0.0, %v467
    %v469 = vpop.f32.mrf.mxu0
    %470 = vdwg.mxu0
    %471 = vmatpush.bf16.msra.mxu0 0
    %472 = vmatpush.bf16.msra.mxu0 0
    %473 = vmatpush.bf16.msra.mxu0 0
    %474 = vmatpush.bf16.msra.mxu0 0
    %475 = vmatpush.bf16.msra.mxu0 %v222
    %476 = vmatpush.bf16.msra.mxu0 %v220
    %477 = vmatpush.bf16.msra.mxu0 %v218
    %478 = vmatpush.bf16.msra.mxu0 %v216
    %479 = vmatmul.bf16.gmra.mxu0 %v456
    %v480 = vpop.f32.mrf.mxu0
    %v481 = vadd.f32 0.0, %v480
    %v482 = vpop.f32.mrf.mxu0
    %483 = vdwg.mxu0
    %v484 = vadd.f32 %v451, %v468
    %v485 = vadd.f32 %v453, %v481
    %v486 = vxor.u32 %v484, 2147483648
    %v487 = vxor.u32 %v485, 2147483648
    %v488 = vmul.f32 %v486, 1.442695
    %v489 = vpow.pop %v488
    %v490 = vmul.f32 %v487, 1.442695
    %v491 = vpow.pop %v490
    %v492 = vadd.f32 %v489, 1.0
    %v493 = vadd.f32 %v491, 1.0
    %v494 = vrcp.pop %v492
    %v495 = vmul.f32 %v492, %v494
    %v496 = vsub.f32 1.0, %v495
    %v497 = vmul.f32 %v494, %v496
    %v498 = vadd.f32 %v494, %v497
    %vm499 = vweird.f32 %v492
    %vm500 = vweird.f32 %v494
    %vm501 = vmor %vm499, %vm500
    %v502 = vsel %vm501, %v494, %v498
    %v503 = vand.u32 2147483647, %v492
    %vm504 = vcmp.eq.f32.partialorder %v503, 8.507059e+37
    %v505 = vand.u32 %v492, 2147483648
    %v506 = vor.u32 1.1754944e-38, %v505
    %v507 = vsel %vm504, %v506, %v502
    %v508 = vmul.f32 1.0, %v507
    %v509 = vrcp.pop %v493
    %v510 = vmul.f32 %v493, %v509
    %v511 = vsub.f32 1.0, %v510
    %v512 = vmul.f32 %v509, %v511
    %v513 = vadd.f32 %v509, %v512
    %vm514 = vweird.f32 %v493
    %vm515 = vweird.f32 %v509
    %vm516 = vmor %vm514, %vm515
    %v517 = vsel %vm516, %v509, %v513
    %v518 = vand.u32 2147483647, %v493
    %vm519 = vcmp.eq.f32.partialorder %v518, 8.507059e+37
    %v520 = vand.u32 %v493, 2147483648
    %v521 = vor.u32 1.1754944e-38, %v520
    %v522 = vsel %vm519, %v521, %v517
    %v523 = vmul.f32 1.0, %v522
    %v524 = vtanh.pop %v484
    %v525 = vtanh.pop %v485
    %527 = vrot.lane.b32.xlu0 %v523, 32
    %v528 = vpop.permute.xlu0 %527
    %v530 = vsel %vm307, %v508, %v528
    %532 = vrot.lane.b32.xlu0 %v508, 96
    %v533 = vpop.permute.xlu0 %532
    %v535 = vsel %vm307, %v533, %v523
    %537 = vrot.lane.b32.xlu0 %v524, 64
    %v538 = vpop.permute.xlu0 %537
    %541 = vrot.lane.b32.xlu0 %v525, 96
    %v542 = vpop.permute.xlu0 %541
    %v544 = vsel %vm307, %v538, %v542
    %545 = vrot.lane.b32.xlu0 %v508, 32
    %v546 = vpop.permute.xlu0 %545
    %548 = vrot.lane.b32.xlu0 %v523, 64
    %v549 = vpop.permute.xlu0 %548
    %v551 = vsel %vm307, %v546, %v549
    %v552 = vmul.f32 %v535, %v443
    %v553 = vmul.f32 %v530, %v544
    %v554 = vadd.f32 %v552, %v553
    %v555 = vtanh.pop %v554
    %v556 = vmul.f32 %v551, %v555
    %s557 = scalar_lea.vmem [#allocation3], 16
    %558 = vst.msk [vmem:[%s557] sm:$0xff] %vm307, %v556
    %s559 = scalar_lea.vmem [#allocation3], 40
    %560 = vst.msk [vmem:[%s559] sm:$0xff] %vm337, %v556
    %s561 = scalar_lea.vmem [#allocation2], 48
    %v562 = vld [vmem:[%s561] sm:$0xff]
    %s563 = scalar_lea.vmem [#allocation2], 64
    %v564 = vld [vmem:[%s563 + $0x8] sm:$0xff]
    %v565 = vpack.c.bf16 %v556, %v556
    %v567 = vsel %vm231, %v565, 0
    %569 = vmatpush.bf16.msra.mxu0 0
    %570 = vmatpush.bf16.msra.mxu0 0
    %571 = vmatpush.bf16.msra.mxu0 0
    %572 = vmatpush.bf16.msra.mxu0 0
    %573 = vmatpush.bf16.msra.mxu0 %v221
    %574 = vmatpush.bf16.msra.mxu0 %v219
    %575 = vmatpush.bf16.msra.mxu0 %v217
    %576 = vmatpush.bf16.msra.mxu0 %v215
    %577 = vmatmul.bf16.gmra.mxu0 %v567
    %v578 = vpop.f32.mrf.mxu0
    %v579 = vadd.f32 0.0, %v578
    %v580 = vpop.f32.mrf.mxu0
    %581 = vdwg.mxu0
    %582 = vmatpush.bf16.msra.mxu0 0
    %583 = vmatpush.bf16.msra.mxu0 0
    %584 = vmatpush.bf16.msra.mxu0 0
    %585 = vmatpush.bf16.msra.mxu0 0
    %586 = vmatpush.bf16.msra.mxu0 %v222
    %587 = vmatpush.bf16.msra.mxu0 %v220
    %588 = vmatpush.bf16.msra.mxu0 %v218
    %589 = vmatpush.bf16.msra.mxu0 %v216
    %590 = vmatmul.bf16.gmra.mxu0 %v567
    %v591 = vpop.f32.mrf.mxu0
    %v592 = vadd.f32 0.0, %v591
    %v593 = vpop.f32.mrf.mxu0
    %594 = vdwg.mxu0
    %v595 = vadd.f32 %v562, %v579
    %v596 = vadd.f32 %v564, %v592
    %v597 = vxor.u32 %v595, 2147483648
    %v598 = vxor.u32 %v596, 2147483648
    %v599 = vmul.f32 %v597, 1.442695
    %v600 = vpow.pop %v599
    %v601 = vmul.f32 %v598, 1.442695
    %v602 = vpow.pop %v601
    %v603 = vadd.f32 %v600, 1.0
    %v604 = vadd.f32 %v602, 1.0
    %v605 = vrcp.pop %v603
    %v606 = vmul.f32 %v603, %v605
    %v607 = vsub.f32 1.0, %v606
    %v608 = vmul.f32 %v605, %v607
    %v609 = vadd.f32 %v605, %v608
    %vm610 = vweird.f32 %v603
    %vm611 = vweird.f32 %v605
    %vm612 = vmor %vm610, %vm611
    %v613 = vsel %vm612, %v605, %v609
    %v614 = vand.u32 2147483647, %v603
    %vm615 = vcmp.eq.f32.partialorder %v614, 8.507059e+37
    %v616 = vand.u32 %v603, 2147483648
    %v617 = vor.u32 1.1754944e-38, %v616
    %v618 = vsel %vm615, %v617, %v613
    %v619 = vmul.f32 1.0, %v618
    %v620 = vrcp.pop %v604
    %v621 = vmul.f32 %v604, %v620
    %v622 = vsub.f32 1.0, %v621
    %v623 = vmul.f32 %v620, %v622
    %v624 = vadd.f32 %v620, %v623
    %vm625 = vweird.f32 %v604
    %vm626 = vweird.f32 %v620
    %vm627 = vmor %vm625, %vm626
    %v628 = vsel %vm627, %v620, %v624
    %v629 = vand.u32 2147483647, %v604
    %vm630 = vcmp.eq.f32.partialorder %v629, 8.507059e+37
    %v631 = vand.u32 %v604, 2147483648
    %v632 = vor.u32 1.1754944e-38, %v631
    %v633 = vsel %vm630, %v632, %v628
    %v634 = vmul.f32 1.0, %v633
    %v635 = vtanh.pop %v595
    %v636 = vtanh.pop %v596
    %638 = vrot.lane.b32.xlu0 %v634, 32
    %v639 = vpop.permute.xlu0 %638
    %v641 = vsel %vm307, %v619, %v639
    %643 = vrot.lane.b32.xlu0 %v619, 96
    %v644 = vpop.permute.xlu0 %643
    %v646 = vsel %vm307, %v644, %v634
    %648 = vrot.lane.b32.xlu0 %v635, 64
    %v649 = vpop.permute.xlu0 %648
    %652 = vrot.lane.b32.xlu0 %v636, 96
    %v653 = vpop.permute.xlu0 %652
    %v655 = vsel %vm307, %v649, %v653
    %656 = vrot.lane.b32.xlu0 %v619, 32
    %v657 = vpop.permute.xlu0 %656
    %659 = vrot.lane.b32.xlu0 %v634, 64
    %v660 = vpop.permute.xlu0 %659
    %v662 = vsel %vm307, %v657, %v660
    %v663 = vmul.f32 %v646, %v554
    %v664 = vmul.f32 %v641, %v655
    %v665 = vadd.f32 %v663, %v664
    %v666 = vtanh.pop %v665
    %v667 = vmul.f32 %v662, %v666
    %s668 = scalar_lea.vmem [#allocation3], 24
    %669 = vst.msk [vmem:[%s668] sm:$0xff] %vm307, %v667
    %s670 = scalar_lea.vmem [#allocation3], 32
    %671 = vst.msk [vmem:[%s670] sm:$0xff] %vm337, %v667
    %v672 = vld [vmem:[%s563] sm:$0xff]
    %v673 = vld [vmem:[%s561 + $0x8] sm:$0xff]
    %v674 = vpack.c.bf16 %v667, %v667
    %v676 = vsel %vm231, %v674, 0
    %678 = vmatpush.bf16.msra.mxu0 0
    %679 = vmatpush.bf16.msra.mxu0 0
    %680 = vmatpush.bf16.msra.mxu0 0
    %681 = vmatpush.bf16.msra.mxu0 0
    %682 = vmatpush.bf16.msra.mxu0 %v221
    %683 = vmatpush.bf16.msra.mxu0 %v219
    %684 = vmatpush.bf16.msra.mxu0 %v217
    %685 = vmatpush.bf16.msra.mxu0 %v215
    %686 = vmatmul.bf16.gmra.mxu0 %v676
    %v687 = vpop.f32.mrf.mxu0
    %v688 = vadd.f32 0.0, %v687
    %v689 = vpop.f32.mrf.mxu0
    %690 = vdwg.mxu0
    %691 = vmatpush.bf16.msra.mxu0 0
    %692 = vmatpush.bf16.msra.mxu0 0
    %693 = vmatpush.bf16.msra.mxu0 0
    %694 = vmatpush.bf16.msra.mxu0 0
    %695 = vmatpush.bf16.msra.mxu0 %v222
    %696 = vmatpush.bf16.msra.mxu0 %v220
    %697 = vmatpush.bf16.msra.mxu0 %v218
    %698 = vmatpush.bf16.msra.mxu0 %v216
    %699 = vmatmul.bf16.gmra.mxu0 %v676
    %v700 = vpop.f32.mrf.mxu0
    %v701 = vadd.f32 0.0, %v700
    %v702 = vpop.f32.mrf.mxu0
    %703 = vdwg.mxu0
    %v704 = vadd.f32 %v672, %v688
    %v705 = vadd.f32 %v673, %v701
    %v706 = vxor.u32 %v704, 2147483648
    %v707 = vxor.u32 %v705, 2147483648
    %v708 = vmul.f32 %v706, 1.442695
    %v709 = vpow.pop %v708
    %v710 = vmul.f32 %v707, 1.442695
    %v711 = vpow.pop %v710
    %v712 = vadd.f32 %v709, 1.0
    %v713 = vadd.f32 %v711, 1.0
    %v714 = vrcp.pop %v712
    %v715 = vmul.f32 %v712, %v714
    %v716 = vsub.f32 1.0, %v715
    %v717 = vmul.f32 %v714, %v716
    %v718 = vadd.f32 %v714, %v717
    %vm719 = vweird.f32 %v712
    %vm720 = vweird.f32 %v714
    %vm721 = vmor %vm719, %vm720
    %v722 = vsel %vm721, %v714, %v718
    %v723 = vand.u32 2147483647, %v712
    %vm724 = vcmp.eq.f32.partialorder %v723, 8.507059e+37
    %v725 = vand.u32 %v712, 2147483648
    %v726 = vor.u32 1.1754944e-38, %v725
    %v727 = vsel %vm724, %v726, %v722
    %v728 = vmul.f32 1.0, %v727
    %v729 = vrcp.pop %v713
    %v730 = vmul.f32 %v713, %v729
    %v731 = vsub.f32 1.0, %v730
    %v732 = vmul.f32 %v729, %v731
    %v733 = vadd.f32 %v729, %v732
    %vm734 = vweird.f32 %v713
    %vm735 = vweird.f32 %v729
    %vm736 = vmor %vm734, %vm735
    %v737 = vsel %vm736, %v729, %v733
    %v738 = vand.u32 2147483647, %v713
    %vm739 = vcmp.eq.f32.partialorder %v738, 8.507059e+37
    %v740 = vand.u32 %v713, 2147483648
    %v741 = vor.u32 1.1754944e-38, %v740
    %v742 = vsel %vm739, %v741, %v737
    %v743 = vmul.f32 1.0, %v742
    %v744 = vtanh.pop %v704
    %v745 = vtanh.pop %v705
    %747 = vrot.lane.b32.xlu0 %v743, 32
    %v748 = vpop.permute.xlu0 %747
    %v750 = vsel %vm307, %v728, %v748
    %752 = vrot.lane.b32.xlu0 %v728, 96
    %v753 = vpop.permute.xlu0 %752
    %v755 = vsel %vm307, %v753, %v743
    %757 = vrot.lane.b32.xlu0 %v744, 64
    %v758 = vpop.permute.xlu0 %757
    %761 = vrot.lane.b32.xlu0 %v745, 96
    %v762 = vpop.permute.xlu0 %761
    %v764 = vsel %vm307, %v758, %v762
    %765 = vrot.lane.b32.xlu0 %v728, 32
    %v766 = vpop.permute.xlu0 %765
    %768 = vrot.lane.b32.xlu0 %v743, 64
    %v769 = vpop.permute.xlu0 %768
    %v771 = vsel %vm307, %v766, %v769
    %v772 = vmul.f32 %v755, %v665
    %v773 = vmul.f32 %v750, %v764
    %v774 = vadd.f32 %v772, %v773
    %v775 = vtanh.pop %v774
    %v776 = vmul.f32 %v771, %v775
    %777 = vst.msk [vmem:[%s670] sm:$0xff] %vm307, %v776
    %778 = vst.msk [vmem:[%s668] sm:$0xff] %vm337, %v776
    %v779 = vld [vmem:[%s452] sm:$0xff]
    %v780 = vld [vmem:[%s450 + $0x8] sm:$0xff]
    %v781 = vpack.c.bf16 %v776, %v776
    %v783 = vsel %vm231, %v781, 0
    %785 = vmatpush.bf16.msra.mxu0 0
    %786 = vmatpush.bf16.msra.mxu0 0
    %787 = vmatpush.bf16.msra.mxu0 0
    %788 = vmatpush.bf16.msra.mxu0 0
    %789 = vmatpush.bf16.msra.mxu0 %v221
    %790 = vmatpush.bf16.msra.mxu0 %v219
    %791 = vmatpush.bf16.msra.mxu0 %v217
    %792 = vmatpush.bf16.msra.mxu0 %v215
    %793 = vmatmul.bf16.gmra.mxu0 %v783
    %v794 = vpop.f32.mrf.mxu0
    %v795 = vadd.f32 0.0, %v794
    %v796 = vpop.f32.mrf.mxu0
    %797 = vdwg.mxu0
    %798 = vmatpush.bf16.msra.mxu0 0
    %799 = vmatpush.bf16.msra.mxu0 0
    %800 = vmatpush.bf16.msra.mxu0 0
    %801 = vmatpush.bf16.msra.mxu0 0
    %802 = vmatpush.bf16.msra.mxu0 %v222
    %803 = vmatpush.bf16.msra.mxu0 %v220
    %804 = vmatpush.bf16.msra.mxu0 %v218
    %805 = vmatpush.bf16.msra.mxu0 %v216
    %806 = vmatmul.bf16.gmra.mxu0 %v783
    %v807 = vpop.f32.mrf.mxu0
    %v808 = vadd.f32 0.0, %v807
    %v809 = vpop.f32.mrf.mxu0
    %810 = vdwg.mxu0
    %v811 = vadd.f32 %v779, %v795
    %v812 = vadd.f32 %v780, %v808
    %v813 = vxor.u32 %v811, 2147483648
    %v814 = vxor.u32 %v812, 2147483648
    %v815 = vmul.f32 %v813, 1.442695
    %v816 = vpow.pop %v815
    %v817 = vmul.f32 %v814, 1.442695
    %v818 = vpow.pop %v817
    %v819 = vadd.f32 %v816, 1.0
    %v820 = vadd.f32 %v818, 1.0
    %v821 = vrcp.pop %v819
    %v822 = vmul.f32 %v819, %v821
    %v823 = vsub.f32 1.0, %v822
    %v824 = vmul.f32 %v821, %v823
    %v825 = vadd.f32 %v821, %v824
    %vm826 = vweird.f32 %v819
    %vm827 = vweird.f32 %v821
    %vm828 = vmor %vm826, %vm827
    %v829 = vsel %vm828, %v821, %v825
    %v830 = vand.u32 2147483647, %v819
    %vm831 = vcmp.eq.f32.partialorder %v830, 8.507059e+37
    %v832 = vand.u32 %v819, 2147483648
    %v833 = vor.u32 1.1754944e-38, %v832
    %v834 = vsel %vm831, %v833, %v829
    %v835 = vmul.f32 1.0, %v834
    %v836 = vrcp.pop %v820
    %v837 = vmul.f32 %v820, %v836
    %v838 = vsub.f32 1.0, %v837
    %v839 = vmul.f32 %v836, %v838
    %v840 = vadd.f32 %v836, %v839
    %vm841 = vweird.f32 %v820
    %vm842 = vweird.f32 %v836
    %vm843 = vmor %vm841, %vm842
    %v844 = vsel %vm843, %v836, %v840
    %v845 = vand.u32 2147483647, %v820
    %vm846 = vcmp.eq.f32.partialorder %v845, 8.507059e+37
    %v847 = vand.u32 %v820, 2147483648
    %v848 = vor.u32 1.1754944e-38, %v847
    %v849 = vsel %vm846, %v848, %v844
    %v850 = vmul.f32 1.0, %v849
    %v851 = vtanh.pop %v811
    %v852 = vtanh.pop %v812
    %854 = vrot.lane.b32.xlu0 %v850, 32
    %v855 = vpop.permute.xlu0 %854
    %v857 = vsel %vm307, %v835, %v855
    %859 = vrot.lane.b32.xlu0 %v835, 96
    %v860 = vpop.permute.xlu0 %859
    %v862 = vsel %vm307, %v860, %v850
    %864 = vrot.lane.b32.xlu0 %v851, 64
    %v865 = vpop.permute.xlu0 %864
    %868 = vrot.lane.b32.xlu0 %v852, 96
    %v869 = vpop.permute.xlu0 %868
    %v871 = vsel %vm307, %v865, %v869
    %872 = vrot.lane.b32.xlu0 %v835, 32
    %v873 = vpop.permute.xlu0 %872
    %875 = vrot.lane.b32.xlu0 %v850, 64
    %v876 = vpop.permute.xlu0 %875
    %v878 = vsel %vm307, %v873, %v876
    %v879 = vmul.f32 %v862, %v774
    %v880 = vmul.f32 %v857, %v871
    %v881 = vadd.f32 %v879, %v880
    %v882 = vtanh.pop %v881
    %v883 = vmul.f32 %v878, %v882
    %884 = vst.msk [vmem:[%s559] sm:$0xff] %vm307, %v883
    %885 = vst.msk [vmem:[%s557] sm:$0xff] %vm337, %v883
    %v886 = vld [vmem:[%s341] sm:$0xff]
    %v887 = vld [vmem:[%s339 + $0x8] sm:$0xff]
    %v888 = vpack.c.bf16 %v883, %v883
    %v890 = vsel %vm231, %v888, 0
    %892 = vmatpush.bf16.msra.mxu0 0
    %893 = vmatpush.bf16.msra.mxu0 0
    %894 = vmatpush.bf16.msra.mxu0 0
    %895 = vmatpush.bf16.msra.mxu0 0
    %896 = vmatpush.bf16.msra.mxu0 %v221
    %897 = vmatpush.bf16.msra.mxu0 %v219
    %898 = vmatpush.bf16.msra.mxu0 %v217
    %899 = vmatpush.bf16.msra.mxu0 %v215
    %900 = vmatmul.bf16.gmra.mxu0 %v890
    %v901 = vpop.f32.mrf.mxu0
    %v902 = vadd.f32 0.0, %v901
    %v903 = vpop.f32.mrf.mxu0
    %904 = vdwg.mxu0
    %905 = vmatpush.bf16.msra.mxu0 0
    %906 = vmatpush.bf16.msra.mxu0 0
    %907 = vmatpush.bf16.msra.mxu0 0
    %908 = vmatpush.bf16.msra.mxu0 0
    %909 = vmatpush.bf16.msra.mxu0 %v222
    %910 = vmatpush.bf16.msra.mxu0 %v220
    %911 = vmatpush.bf16.msra.mxu0 %v218
    %912 = vmatpush.bf16.msra.mxu0 %v216
    %913 = vmatmul.bf16.gmra.mxu0 %v890
    %v914 = vpop.f32.mrf.mxu0
    %v915 = vadd.f32 0.0, %v914
    %v916 = vpop.f32.mrf.mxu0
    %917 = vdwg.mxu0
    %v918 = vadd.f32 %v886, %v902
    %v919 = vadd.f32 %v887, %v915
    %v920 = vxor.u32 %v918, 2147483648
    %v921 = vxor.u32 %v919, 2147483648
    %v922 = vmul.f32 %v920, 1.442695
    %v923 = vpow.pop %v922
    %v924 = vmul.f32 %v921, 1.442695
    %v925 = vpow.pop %v924
    %v926 = vadd.f32 %v923, 1.0
    %v927 = vadd.f32 %v925, 1.0
    %v928 = vrcp.pop %v926
    %v929 = vmul.f32 %v926, %v928
    %v930 = vsub.f32 1.0, %v929
    %v931 = vmul.f32 %v928, %v930
    %v932 = vadd.f32 %v928, %v931
    %vm933 = vweird.f32 %v926
    %vm934 = vweird.f32 %v928
    %vm935 = vmor %vm933, %vm934
    %v936 = vsel %vm935, %v928, %v932
    %v937 = vand.u32 2147483647, %v926
    %vm938 = vcmp.eq.f32.partialorder %v937, 8.507059e+37
    %v939 = vand.u32 %v926, 2147483648
    %v940 = vor.u32 1.1754944e-38, %v939
    %v941 = vsel %vm938, %v940, %v936
    %v942 = vmul.f32 1.0, %v941
    %v943 = vrcp.pop %v927
    %v944 = vmul.f32 %v927, %v943
    %v945 = vsub.f32 1.0, %v944
    %v946 = vmul.f32 %v943, %v945
    %v947 = vadd.f32 %v943, %v946
    %vm948 = vweird.f32 %v927
    %vm949 = vweird.f32 %v943
    %vm950 = vmor %vm948, %vm949
    %v951 = vsel %vm950, %v943, %v947
    %v952 = vand.u32 2147483647, %v927
    %vm953 = vcmp.eq.f32.partialorder %v952, 8.507059e+37
    %v954 = vand.u32 %v927, 2147483648
    %v955 = vor.u32 1.1754944e-38, %v954
    %v956 = vsel %vm953, %v955, %v951
    %v957 = vmul.f32 1.0, %v956
    %v958 = vtanh.pop %v918
    %v959 = vtanh.pop %v919
    %961 = vrot.lane.b32.xlu0 %v957, 32
    %v962 = vpop.permute.xlu0 %961
    %v964 = vsel %vm307, %v942, %v962
    %966 = vrot.lane.b32.xlu0 %v942, 96
    %v967 = vpop.permute.xlu0 %966
    %v969 = vsel %vm307, %v967, %v957
    %971 = vrot.lane.b32.xlu0 %v958, 64
    %v972 = vpop.permute.xlu0 %971
    %975 = vrot.lane.b32.xlu0 %v959, 96
    %v976 = vpop.permute.xlu0 %975
    %v978 = vsel %vm307, %v972, %v976
    %979 = vrot.lane.b32.xlu0 %v942, 32
    %v980 = vpop.permute.xlu0 %979
    %982 = vrot.lane.b32.xlu0 %v957, 64
    %v983 = vpop.permute.xlu0 %982
    %v985 = vsel %vm307, %v980, %v983
    %v986 = vmul.f32 %v969, %v881
    %v987 = vmul.f32 %v964, %v978
    %v988 = vadd.f32 %v986, %v987
    %v989 = vtanh.pop %v988
    %v990 = vmul.f32 %v985, %v989
    %991 = vst.msk [vmem:[%s448] sm:$0xff] %vm307, %v990
    %992 = vst.msk [vmem:[%s446] sm:$0xff] %vm337, %v990
    %v993 = vld [vmem:[%s189] sm:$0xff]
    %v994 = vld [vmem:[#allocation2 + $0x8] sm:$0xff]
    %v995 = vpack.c.bf16 %v990, %v990
    %v997 = vsel %vm231, %v995, 0
    %999 = vmatpush.bf16.msra.mxu0 0
    %1000 = vmatpush.bf16.msra.mxu0 0
    %1001 = vmatpush.bf16.msra.mxu0 0
    %1002 = vmatpush.bf16.msra.mxu0 0
    %1003 = vmatpush.bf16.msra.mxu0 %v221
    %1004 = vmatpush.bf16.msra.mxu0 %v219
    %1005 = vmatpush.bf16.msra.mxu0 %v217
    %1006 = vmatpush.bf16.msra.mxu0 %v215
    %1007 = vmatmul.bf16.gmra.mxu0 %v997
    %v1008 = vpop.f32.mrf.mxu0
    %v1009 = vadd.f32 0.0, %v1008
    %v1010 = vpop.f32.mrf.mxu0
    %1011 = vdwg.mxu0
    %1012 = vmatpush.bf16.msra.mxu0 0
    %1013 = vmatpush.bf16.msra.mxu0 0
    %1014 = vmatpush.bf16.msra.mxu0 0
    %1015 = vmatpush.bf16.msra.mxu0 0
    %1016 = vmatpush.bf16.msra.mxu0 %v222
    %1017 = vmatpush.bf16.msra.mxu0 %v220
    %1018 = vmatpush.bf16.msra.mxu0 %v218
    %1019 = vmatpush.bf16.msra.mxu0 %v216
    %1020 = vmatmul.bf16.gmra.mxu0 %v997
    %v1021 = vpop.f32.mrf.mxu0
    %v1022 = vadd.f32 0.0, %v1021
    %v1023 = vpop.f32.mrf.mxu0
    %1024 = vdwg.mxu0
    %v1025 = vadd.f32 %v993, %v1009
    %v1026 = vadd.f32 %v994, %v1022
    %v1027 = vxor.u32 %v1025, 2147483648
    %v1028 = vxor.u32 %v1026, 2147483648
    %v1029 = vmul.f32 %v1027, 1.442695
    %v1030 = vpow.pop %v1029
    %v1031 = vmul.f32 %v1028, 1.442695
    %v1032 = vpow.pop %v1031
    %v1033 = vadd.f32 %v1030, 1.0
    %v1034 = vadd.f32 %v1032, 1.0
    %v1035 = vrcp.pop %v1033
    %v1036 = vmul.f32 %v1033, %v1035
    %v1037 = vsub.f32 1.0, %v1036
    %v1038 = vmul.f32 %v1035, %v1037
    %v1039 = vadd.f32 %v1035, %v1038
    %vm1040 = vweird.f32 %v1033
    %vm1041 = vweird.f32 %v1035
    %vm1042 = vmor %vm1040, %vm1041
    %v1043 = vsel %vm1042, %v1035, %v1039
    %v1044 = vand.u32 2147483647, %v1033
    %vm1045 = vcmp.eq.f32.partialorder %v1044, 8.507059e+37
    %v1046 = vand.u32 %v1033, 2147483648
    %v1047 = vor.u32 1.1754944e-38, %v1046
    %v1048 = vsel %vm1045, %v1047, %v1043
    %v1049 = vmul.f32 1.0, %v1048
    %v1050 = vrcp.pop %v1034
    %v1051 = vmul.f32 %v1034, %v1050
    %v1052 = vsub.f32 1.0, %v1051
    %v1053 = vmul.f32 %v1050, %v1052
    %v1054 = vadd.f32 %v1050, %v1053
    %vm1055 = vweird.f32 %v1034
    %vm1056 = vweird.f32 %v1050
    %vm1057 = vmor %vm1055, %vm1056
    %v1058 = vsel %vm1057, %v1050, %v1054
    %v1059 = vand.u32 2147483647, %v1034
    %vm1060 = vcmp.eq.f32.partialorder %v1059, 8.507059e+37
    %v1061 = vand.u32 %v1034, 2147483648
    %v1062 = vor.u32 1.1754944e-38, %v1061
    %v1063 = vsel %vm1060, %v1062, %v1058
    %v1064 = vmul.f32 1.0, %v1063
    %v1065 = vtanh.pop %v1025
    %v1066 = vtanh.pop %v1026
    %1068 = vrot.lane.b32.xlu0 %v1064, 32
    %v1069 = vpop.permute.xlu0 %1068
    %v1071 = vsel %vm307, %v1049, %v1069
    %1073 = vrot.lane.b32.xlu0 %v1049, 96
    %v1074 = vpop.permute.xlu0 %1073
    %v1076 = vsel %vm307, %v1074, %v1064
    %1078 = vrot.lane.b32.xlu0 %v1065, 64
    %v1079 = vpop.permute.xlu0 %1078
    %1082 = vrot.lane.b32.xlu0 %v1066, 96
    %v1083 = vpop.permute.xlu0 %1082
    %v1085 = vsel %vm307, %v1079, %v1083
    %1086 = vrot.lane.b32.xlu0 %v1049, 32
    %v1087 = vpop.permute.xlu0 %1086
    %1089 = vrot.lane.b32.xlu0 %v1064, 64
    %v1090 = vpop.permute.xlu0 %1089
    %v1092 = vsel %vm307, %v1087, %v1090
    %v1093 = vmul.f32 %v1076, %v988
    %v1094 = vmul.f32 %v1071, %v1085
    %v1095 = vadd.f32 %v1093, %v1094
    %v1096 = vtanh.pop %v1095
    %v1097 = vmul.f32 %v1092, %v1096
    %1098 = vst.msk [vmem:[%s336] sm:$0xff] %vm307, %v1097
    %1099 = vst.msk [vmem:[#allocation3] sm:$0xff] %vm337, %v1097
    %v1100 = vld [vmem:[#allocation3] sm:$0xff]
    %v1101 = vld [vmem:[#allocation3 + $0x8] sm:$0xff]
    %v1102 = vld [vmem:[#allocation3 + $0x10] sm:$0xff]
    %v1103 = vld [vmem:[#allocation3 + $0x18] sm:$0xff]
    %v1104 = vld [vmem:[#allocation3 + $0x20] sm:$0xff]
    %v1105 = vld [vmem:[#allocation3 + $0x28] sm:$0xff]
    %v1106 = vld [vmem:[#allocation3 + $0x30] sm:$0xff]
    %v1107 = vld [vmem:[#allocation3 + $0x38] sm:$0xff]
    %v1108 = vpack.c.bf16 %v1101, %v1100
    %v1109 = vpack.c.bf16 %v1103, %v1102
    %v1110 = vpack.c.bf16 %v1105, %v1104
    %v1111 = vpack.c.bf16 %v1107, %v1106
    %v1112 = vld [vmem:[#allocation4] sm:$0xff]
    %v1113 = vld [vmem:[#allocation4 + $0x8] sm:$0xff]
    %v1114 = vld [vmem:[#allocation4 + $0x10] sm:$0xff]
    %v1115 = vld [vmem:[#allocation4 + $0x18] sm:$0xff]
    %v1116 = vld [vmem:[#allocation4 + $0x20] sm:$0xff]
    %v1117 = vld [vmem:[#allocation4 + $0x28] sm:$0xff]
    %v1118 = vld [vmem:[#allocation4 + $0x30] sm:$0xff]
    %v1119 = vld [vmem:[#allocation4 + $0x38] sm:$0xff]
    %v1120 = vld [vmem:[%s5] sm:$0x3]
    %v1122 = vperm.slane %v1120, 0
    %v1123 = vperm.slane %v1120, 1
    %v1134 = vunpack.c.l.b16 %v1112
    %v1135 = vunpack.c.h.b16 %v1112
    %v1136 = vunpack.c.l.b16 %v1113
    %v1137 = vunpack.c.h.b16 %v1113
    %v1138 = vunpack.c.l.b16 %v1114
    %v1139 = vunpack.c.h.b16 %v1114
    %v1140 = vunpack.c.l.b16 %v1115
    %v1141 = vunpack.c.h.b16 %v1115
    %v1142 = vunpack.c.l.b16 %v1116
    %v1143 = vunpack.c.h.b16 %v1116
    %v1144 = vunpack.c.l.b16 %v1117
    %v1145 = vunpack.c.h.b16 %v1117
    %v1146 = vunpack.c.l.b16 %v1118
    %v1147 = vunpack.c.h.b16 %v1118
    %v1148 = vunpack.c.l.b16 %v1119
    %v1149 = vunpack.c.h.b16 %v1119
    %v1150 = vpack.c.b16 %v1136, %v1134
    %v1151 = vpack.c.b16 %v1137, %v1135
    %v1152 = vpack.c.b16 %v1140, %v1138
    %v1153 = vpack.c.b16 %v1141, %v1139
    %v1154 = vpack.c.b16 %v1144, %v1142
    %v1155 = vpack.c.b16 %v1145, %v1143
    %v1156 = vpack.c.b16 %v1148, %v1146
    %v1157 = vpack.c.b16 %v1149, %v1147
    %v1167 = vsel %vm231, %v1108, 0
    %v1170 = vsel %vm231, %v1109, 0
    %v1173 = vsel %vm231, %v1110, 0
    %v1176 = vsel %vm231, %v1111, 0
    %1178 = vmatpush.bf16.msra.mxu0 0
    %1179 = vmatpush.bf16.msra.mxu0 0
    %1180 = vmatpush.bf16.msra.mxu0 0
    %1181 = vmatpush.bf16.msra.mxu0 0
    %1182 = vmatpush.bf16.msra.mxu0 %v1156
    %1183 = vmatpush.bf16.msra.mxu0 %v1154
    %1184 = vmatpush.bf16.msra.mxu0 %v1152
    %1185 = vmatpush.bf16.msra.mxu0 %v1150
    %1186 = vmatmul.bf16.gmra.mxu0 %v1167
    %v1187 = vpop.f32.mrf.mxu0
    %v1188 = vadd.f32 %v1122, %v1187
    %v1189 = vpop.f32.mrf.mxu0
    %v1190 = vadd.f32 %v1122, %v1189
    %1191 = vmatmul.bf16.gmra.mxu0 %v1170
    %v1192 = vpop.f32.mrf.mxu0
    %v1193 = vadd.f32 %v1122, %v1192
    %v1194 = vpop.f32.mrf.mxu0
    %v1195 = vadd.f32 %v1122, %v1194
    %1196 = vmatmul.bf16.gmra.mxu0 %v1173
    %v1197 = vpop.f32.mrf.mxu0
    %v1198 = vadd.f32 %v1122, %v1197
    %v1199 = vpop.f32.mrf.mxu0
    %v1200 = vadd.f32 %v1122, %v1199
    %1201 = vmatmul.bf16.gmra.mxu0 %v1176
    %v1202 = vpop.f32.mrf.mxu0
    %v1203 = vadd.f32 %v1122, %v1202
    %v1204 = vpop.f32.mrf.mxu0
    %v1205 = vadd.f32 %v1122, %v1204
    %1206 = vdwg.mxu0
    %1207 = vmatpush.bf16.msra.mxu0 0
    %1208 = vmatpush.bf16.msra.mxu0 0
    %1209 = vmatpush.bf16.msra.mxu0 0
    %1210 = vmatpush.bf16.msra.mxu0 0
    %1211 = vmatpush.bf16.msra.mxu0 %v1157
    %1212 = vmatpush.bf16.msra.mxu0 %v1155
    %1213 = vmatpush.bf16.msra.mxu0 %v1153
    %1214 = vmatpush.bf16.msra.mxu0 %v1151
    %1215 = vmatmul.bf16.gmra.mxu0 %v1167
    %v1216 = vpop.f32.mrf.mxu0
    %v1217 = vadd.f32 %v1123, %v1216
    %v1218 = vpop.f32.mrf.mxu0
    %v1219 = vadd.f32 %v1123, %v1218
    %1220 = vmatmul.bf16.gmra.mxu0 %v1170
    %v1221 = vpop.f32.mrf.mxu0
    %v1222 = vadd.f32 %v1123, %v1221
    %v1223 = vpop.f32.mrf.mxu0
    %v1224 = vadd.f32 %v1123, %v1223
    %1225 = vmatmul.bf16.gmra.mxu0 %v1173
    %v1226 = vpop.f32.mrf.mxu0
    %v1227 = vadd.f32 %v1123, %v1226
    %v1228 = vpop.f32.mrf.mxu0
    %v1229 = vadd.f32 %v1123, %v1228
    %1230 = vmatmul.bf16.gmra.mxu0 %v1176
    %v1231 = vpop.f32.mrf.mxu0
    %v1232 = vadd.f32 %v1123, %v1231
    %v1233 = vpop.f32.mrf.mxu0
    %v1234 = vadd.f32 %v1123, %v1233
    %1235 = vdwg.mxu0
    %1236 = vst [vmem:[#allocation2] sm:$0xff] %v1188
    %1237 = vst [vmem:[#allocation2 + $0x8] sm:$0xff] %v1217
    %1238 = vst [vmem:[#allocation2 + $0x10] sm:$0xff] %v1190
    %1239 = vst [vmem:[#allocation2 + $0x18] sm:$0xff] %v1219
    %1240 = vst [vmem:[#allocation2 + $0x20] sm:$0xff] %v1193
    %1241 = vst [vmem:[#allocation2 + $0x28] sm:$0xff] %v1222
    %1242 = vst [vmem:[#allocation2 + $0x30] sm:$0xff] %v1195
    %1243 = vst [vmem:[#allocation2 + $0x38] sm:$0xff] %v1224
    %1244 = vst [vmem:[#allocation2 + $0x40] sm:$0xff] %v1198
    %1245 = vst [vmem:[#allocation2 + $0x48] sm:$0xff] %v1227
    %1246 = vst [vmem:[#allocation2 + $0x50] sm:$0xff] %v1200
    %1247 = vst [vmem:[#allocation2 + $0x58] sm:$0xff] %v1229
    %1248 = vst [vmem:[#allocation2 + $0x60] sm:$0xff] %v1203
    %1249 = vst [vmem:[#allocation2 + $0x68] sm:$0xff] %v1232
    %1250 = vst [vmem:[#allocation2 + $0x70] sm:$0xff] %v1205
    %1251 = vst [vmem:[#allocation2 + $0x78] sm:$0xff] %v1234
    %v1252 = vld [vmem:[%s6] sm:$0xff]
    %v1253 = vld [vmem:[%s6 + $0x8] sm:$0xff]
    %v1254 = vld [vmem:[%s6 + $0x10] sm:$0xff]
    %v1255 = vld [vmem:[%s6 + $0x18] sm:$0xff]
    %v1256 = vld [vmem:[%s6 + $0x20] sm:$0xff]
    %v1257 = vld [vmem:[%s6 + $0x28] sm:$0xff]
    %v1258 = vld [vmem:[%s6 + $0x30] sm:$0xff]
    %v1259 = vld [vmem:[%s6 + $0x38] sm:$0xff]
    %v1260 = vld [vmem:[#allocation2] sm:$0xff]
    %v1261 = vld [vmem:[%s189 + $0x8] sm:$0xff]
    %v1270 = vunpack.c.l.b16 %v1252
    %v1271 = vunpack.c.h.b16 %v1252
    %v1272 = vunpack.c.l.b16 %v1253
    %v1273 = vunpack.c.h.b16 %v1253
    %v1274 = vunpack.c.l.b16 %v1254
    %v1275 = vunpack.c.h.b16 %v1254
    %v1276 = vunpack.c.l.b16 %v1255
    %v1277 = vunpack.c.h.b16 %v1255
    %v1278 = vunpack.c.l.b16 %v1256
    %v1279 = vunpack.c.h.b16 %v1256
    %v1280 = vunpack.c.l.b16 %v1257
    %v1281 = vunpack.c.h.b16 %v1257
    %v1282 = vunpack.c.l.b16 %v1258
    %v1283 = vunpack.c.h.b16 %v1258
    %v1284 = vunpack.c.l.b16 %v1259
    %v1285 = vunpack.c.h.b16 %v1259
    %v1286 = vpack.c.b16 %v1272, %v1270
    %v1287 = vpack.c.b16 %v1273, %v1271
    %v1288 = vpack.c.b16 %v1276, %v1274
    %v1289 = vpack.c.b16 %v1277, %v1275
    %v1290 = vpack.c.b16 %v1280, %v1278
    %v1291 = vpack.c.b16 %v1281, %v1279
    %v1292 = vpack.c.b16 %v1284, %v1282
    %v1293 = vpack.c.b16 %v1285, %v1283
    %1302 = vmatpush.bf16.msra.mxu0 0
    %1303 = vmatpush.bf16.msra.mxu0 0
    %1304 = vmatpush.bf16.msra.mxu0 0
    %1305 = vmatpush.bf16.msra.mxu0 0
    %1306 = vmatpush.bf16.msra.mxu0 %v1292
    %1307 = vmatpush.bf16.msra.mxu0 %v1290
    %1308 = vmatpush.bf16.msra.mxu0 %v1288
    %1309 = vmatpush.bf16.msra.mxu0 %v1286
    %1310 = vmatmul.bf16.gmra.mxu0 %v233
    %v1311 = vpop.f32.mrf.mxu0
    %v1312 = vadd.f32 0.0, %v1311
    %v1313 = vpop.f32.mrf.mxu0
    %1314 = vdwg.mxu0
    %1315 = vmatpush.bf16.msra.mxu0 0
    %1316 = vmatpush.bf16.msra.mxu0 0
    %1317 = vmatpush.bf16.msra.mxu0 0
    %1318 = vmatpush.bf16.msra.mxu0 0
    %1319 = vmatpush.bf16.msra.mxu0 %v1293
    %1320 = vmatpush.bf16.msra.mxu0 %v1291
    %1321 = vmatpush.bf16.msra.mxu0 %v1289
    %1322 = vmatpush.bf16.msra.mxu0 %v1287
    %1323 = vmatmul.bf16.gmra.mxu0 %v233
    %v1324 = vpop.f32.mrf.mxu0
    %v1325 = vadd.f32 0.0, %v1324
    %v1326 = vpop.f32.mrf.mxu0
    %1327 = vdwg.mxu0
    %v1328 = vadd.f32 %v1260, %v1312
    %v1329 = vadd.f32 %v1261, %v1325
    %v1330 = vxor.u32 %v1328, 2147483648
    %v1331 = vxor.u32 %v1329, 2147483648
    %v1332 = vmul.f32 %v1330, 1.442695
    %v1333 = vpow.pop %v1332
    %v1334 = vmul.f32 %v1331, 1.442695
    %v1335 = vpow.pop %v1334
    %v1336 = vadd.f32 %v1333, 1.0
    %v1337 = vadd.f32 %v1335, 1.0
    %v1338 = vrcp.pop %v1336
    %v1339 = vmul.f32 %v1336, %v1338
    %v1340 = vsub.f32 1.0, %v1339
    %v1341 = vmul.f32 %v1338, %v1340
    %v1342 = vadd.f32 %v1338, %v1341
    %vm1343 = vweird.f32 %v1336
    %vm1344 = vweird.f32 %v1338
    %vm1345 = vmor %vm1343, %vm1344
    %v1346 = vsel %vm1345, %v1338, %v1342
    %v1347 = vand.u32 2147483647, %v1336
    %vm1348 = vcmp.eq.f32.partialorder %v1347, 8.507059e+37
    %v1349 = vand.u32 %v1336, 2147483648
    %v1350 = vor.u32 1.1754944e-38, %v1349
    %v1351 = vsel %vm1348, %v1350, %v1346
    %v1352 = vmul.f32 1.0, %v1351
    %v1353 = vrcp.pop %v1337
    %v1354 = vmul.f32 %v1337, %v1353
    %v1355 = vsub.f32 1.0, %v1354
    %v1356 = vmul.f32 %v1353, %v1355
    %v1357 = vadd.f32 %v1353, %v1356
    %vm1358 = vweird.f32 %v1337
    %vm1359 = vweird.f32 %v1353
    %vm1360 = vmor %vm1358, %vm1359
    %v1361 = vsel %vm1360, %v1353, %v1357
    %v1362 = vand.u32 2147483647, %v1337
    %vm1363 = vcmp.eq.f32.partialorder %v1362, 8.507059e+37
    %v1364 = vand.u32 %v1337, 2147483648
    %v1365 = vor.u32 1.1754944e-38, %v1364
    %v1366 = vsel %vm1363, %v1365, %v1361
    %v1367 = vmul.f32 1.0, %v1366
    %v1368 = vtanh.pop %v1328
    %v1369 = vtanh.pop %v1329
    %1371 = vrot.lane.b32.xlu0 %v1367, 32
    %v1372 = vpop.permute.xlu0 %1371
    %v1374 = vsel %vm307, %v1352, %v1372
    %1376 = vrot.lane.b32.xlu0 %v1352, 96
    %v1377 = vpop.permute.xlu0 %1376
    %v1379 = vsel %vm307, %v1377, %v1367
    %1381 = vrot.lane.b32.xlu0 %v1368, 64
    %v1382 = vpop.permute.xlu0 %1381
    %1385 = vrot.lane.b32.xlu0 %v1369, 96
    %v1386 = vpop.permute.xlu0 %1385
    %v1388 = vsel %vm307, %v1382, %v1386
    %1389 = vrot.lane.b32.xlu0 %v1352, 32
    %v1390 = vpop.permute.xlu0 %1389
    %1392 = vrot.lane.b32.xlu0 %v1367, 64
    %v1393 = vpop.permute.xlu0 %1392
    %v1395 = vsel %vm307, %v1390, %v1393
    %v1396 = vmul.f32 %v1379, 0.0
    %v1397 = vmul.f32 %v1374, %v1388
    %v1398 = vadd.f32 %v1396, %v1397
    %v1399 = vtanh.pop %v1398
    %v1400 = vmul.f32 %v1395, %v1399
    %1401 = vst.msk [vmem:[#allocation3] sm:$0xff] %vm307, %v1400
    %1402 = vst.msk [vmem:[%s336] sm:$0xff] %vm337, %v1400
    %v1403 = vld [vmem:[%s339] sm:$0xff]
    %v1404 = vld [vmem:[%s341 + $0x8] sm:$0xff]
    %v1405 = vpack.c.bf16 %v1400, %v1400
    %v1407 = vsel %vm231, %v1405, 0
    %1409 = vmatpush.bf16.msra.mxu0 0
    %1410 = vmatpush.bf16.msra.mxu0 0
    %1411 = vmatpush.bf16.msra.mxu0 0
    %1412 = vmatpush.bf16.msra.mxu0 0
    %1413 = vmatpush.bf16.msra.mxu0 %v1292
    %1414 = vmatpush.bf16.msra.mxu0 %v1290
    %1415 = vmatpush.bf16.msra.mxu0 %v1288
    %1416 = vmatpush.bf16.msra.mxu0 %v1286
    %1417 = vmatmul.bf16.gmra.mxu0 %v1407
    %v1418 = vpop.f32.mrf.mxu0
    %v1419 = vadd.f32 0.0, %v1418
    %v1420 = vpop.f32.mrf.mxu0
    %1421 = vdwg.mxu0
    %1422 = vmatpush.bf16.msra.mxu0 0
    %1423 = vmatpush.bf16.msra.mxu0 0
    %1424 = vmatpush.bf16.msra.mxu0 0
    %1425 = vmatpush.bf16.msra.mxu0 0
    %1426 = vmatpush.bf16.msra.mxu0 %v1293
    %1427 = vmatpush.bf16.msra.mxu0 %v1291
    %1428 = vmatpush.bf16.msra.mxu0 %v1289
    %1429 = vmatpush.bf16.msra.mxu0 %v1287
    %1430 = vmatmul.bf16.gmra.mxu0 %v1407
    %v1431 = vpop.f32.mrf.mxu0
    %v1432 = vadd.f32 0.0, %v1431
    %v1433 = vpop.f32.mrf.mxu0
    %1434 = vdwg.mxu0
    %v1435 = vadd.f32 %v1403, %v1419
    %v1436 = vadd.f32 %v1404, %v1432
    %v1437 = vxor.u32 %v1435, 2147483648
    %v1438 = vxor.u32 %v1436, 2147483648
    %v1439 = vmul.f32 %v1437, 1.442695
    %v1440 = vpow.pop %v1439
    %v1441 = vmul.f32 %v1438, 1.442695
    %v1442 = vpow.pop %v1441
    %v1443 = vadd.f32 %v1440, 1.0
    %v1444 = vadd.f32 %v1442, 1.0
    %v1445 = vrcp.pop %v1443
    %v1446 = vmul.f32 %v1443, %v1445
    %v1447 = vsub.f32 1.0, %v1446
    %v1448 = vmul.f32 %v1445, %v1447
    %v1449 = vadd.f32 %v1445, %v1448
    %vm1450 = vweird.f32 %v1443
    %vm1451 = vweird.f32 %v1445
    %vm1452 = vmor %vm1450, %vm1451
    %v1453 = vsel %vm1452, %v1445, %v1449
    %v1454 = vand.u32 2147483647, %v1443
    %vm1455 = vcmp.eq.f32.partialorder %v1454, 8.507059e+37
    %v1456 = vand.u32 %v1443, 2147483648
    %v1457 = vor.u32 1.1754944e-38, %v1456
    %v1458 = vsel %vm1455, %v1457, %v1453
    %v1459 = vmul.f32 1.0, %v1458
    %v1460 = vrcp.pop %v1444
    %v1461 = vmul.f32 %v1444, %v1460
    %v1462 = vsub.f32 1.0, %v1461
    %v1463 = vmul.f32 %v1460, %v1462
    %v1464 = vadd.f32 %v1460, %v1463
    %vm1465 = vweird.f32 %v1444
    %vm1466 = vweird.f32 %v1460
    %vm1467 = vmor %vm1465, %vm1466
    %v1468 = vsel %vm1467, %v1460, %v1464
    %v1469 = vand.u32 2147483647, %v1444
    %vm1470 = vcmp.eq.f32.partialorder %v1469, 8.507059e+37
    %v1471 = vand.u32 %v1444, 2147483648
    %v1472 = vor.u32 1.1754944e-38, %v1471
    %v1473 = vsel %vm1470, %v1472, %v1468
    %v1474 = vmul.f32 1.0, %v1473
    %v1475 = vtanh.pop %v1435
    %v1476 = vtanh.pop %v1436
    %1478 = vrot.lane.b32.xlu0 %v1474, 32
    %v1479 = vpop.permute.xlu0 %1478
    %v1481 = vsel %vm307, %v1459, %v1479
    %1483 = vrot.lane.b32.xlu0 %v1459, 96
    %v1484 = vpop.permute.xlu0 %1483
    %v1486 = vsel %vm307, %v1484, %v1474
    %1488 = vrot.lane.b32.xlu0 %v1475, 64
    %v1489 = vpop.permute.xlu0 %1488
    %1492 = vrot.lane.b32.xlu0 %v1476, 96
    %v1493 = vpop.permute.xlu0 %1492
    %v1495 = vsel %vm307, %v1489, %v1493
    %1496 = vrot.lane.b32.xlu0 %v1459, 32
    %v1497 = vpop.permute.xlu0 %1496
    %1499 = vrot.lane.b32.xlu0 %v1474, 64
    %v1500 = vpop.permute.xlu0 %1499
    %v1502 = vsel %vm307, %v1497, %v1500
    %v1503 = vmul.f32 %v1486, %v1398
    %v1504 = vmul.f32 %v1481, %v1495
    %v1505 = vadd.f32 %v1503, %v1504
    %v1506 = vtanh.pop %v1505
    %v1507 = vmul.f32 %v1502, %v1506
    %1508 = vst.msk [vmem:[%s446] sm:$0xff] %vm307, %v1507
    %1509 = vst.msk [vmem:[%s448] sm:$0xff] %vm337, %v1507
    %v1510 = vld [vmem:[%s450] sm:$0xff]
    %v1511 = vld [vmem:[%s452 + $0x8] sm:$0xff]
    %v1512 = vpack.c.bf16 %v1507, %v1507
    %v1514 = vsel %vm231, %v1512, 0
    %1516 = vmatpush.bf16.msra.mxu0 0
    %1517 = vmatpush.bf16.msra.mxu0 0
    %1518 = vmatpush.bf16.msra.mxu0 0
    %1519 = vmatpush.bf16.msra.mxu0 0
    %1520 = vmatpush.bf16.msra.mxu0 %v1292
    %1521 = vmatpush.bf16.msra.mxu0 %v1290
    %1522 = vmatpush.bf16.msra.mxu0 %v1288
    %1523 = vmatpush.bf16.msra.mxu0 %v1286
    %1524 = vmatmul.bf16.gmra.mxu0 %v1514
    %v1525 = vpop.f32.mrf.mxu0
    %v1526 = vadd.f32 0.0, %v1525
    %v1527 = vpop.f32.mrf.mxu0
    %1528 = vdwg.mxu0
    %1529 = vmatpush.bf16.msra.mxu0 0
    %1530 = vmatpush.bf16.msra.mxu0 0
    %1531 = vmatpush.bf16.msra.mxu0 0
    %1532 = vmatpush.bf16.msra.mxu0 0
    %1533 = vmatpush.bf16.msra.mxu0 %v1293
    %1534 = vmatpush.bf16.msra.mxu0 %v1291
    %1535 = vmatpush.bf16.msra.mxu0 %v1289
    %1536 = vmatpush.bf16.msra.mxu0 %v1287
    %1537 = vmatmul.bf16.gmra.mxu0 %v1514
    %v1538 = vpop.f32.mrf.mxu0
    %v1539 = vadd.f32 0.0, %v1538
    %v1540 = vpop.f32.mrf.mxu0
    %1541 = vdwg.mxu0
    %v1542 = vadd.f32 %v1510, %v1526
    %v1543 = vadd.f32 %v1511, %v1539
    %v1544 = vxor.u32 %v1542, 2147483648
    %v1545 = vxor.u32 %v1543, 2147483648
    %v1546 = vmul.f32 %v1544, 1.442695
    %v1547 = vpow.pop %v1546
    %v1548 = vmul.f32 %v1545, 1.442695
    %v1549 = vpow.pop %v1548
    %v1550 = vadd.f32 %v1547, 1.0
    %v1551 = vadd.f32 %v1549, 1.0
    %v1552 = vrcp.pop %v1550
    %v1553 = vmul.f32 %v1550, %v1552
    %v1554 = vsub.f32 1.0, %v1553
    %v1555 = vmul.f32 %v1552, %v1554
    %v1556 = vadd.f32 %v1552, %v1555
    %vm1557 = vweird.f32 %v1550
    %vm1558 = vweird.f32 %v1552
    %vm1559 = vmor %vm1557, %vm1558
    %v1560 = vsel %vm1559, %v1552, %v1556
    %v1561 = vand.u32 2147483647, %v1550
    %vm1562 = vcmp.eq.f32.partialorder %v1561, 8.507059e+37
    %v1563 = vand.u32 %v1550, 2147483648
    %v1564 = vor.u32 1.1754944e-38, %v1563
    %v1565 = vsel %vm1562, %v1564, %v1560
    %v1566 = vmul.f32 1.0, %v1565
    %v1567 = vrcp.pop %v1551
    %v1568 = vmul.f32 %v1551, %v1567
    %v1569 = vsub.f32 1.0, %v1568
    %v1570 = vmul.f32 %v1567, %v1569
    %v1571 = vadd.f32 %v1567, %v1570
    %vm1572 = vweird.f32 %v1551
    %vm1573 = vweird.f32 %v1567
    %vm1574 = vmor %vm1572, %vm1573
    %v1575 = vsel %vm1574, %v1567, %v1571
    %v1576 = vand.u32 2147483647, %v1551
    %vm1577 = vcmp.eq.f32.partialorder %v1576, 8.507059e+37
    %v1578 = vand.u32 %v1551, 2147483648
    %v1579 = vor.u32 1.1754944e-38, %v1578
    %v1580 = vsel %vm1577, %v1579, %v1575
    %v1581 = vmul.f32 1.0, %v1580
    %v1582 = vtanh.pop %v1542
    %v1583 = vtanh.pop %v1543
    %1585 = vrot.lane.b32.xlu0 %v1581, 32
    %v1586 = vpop.permute.xlu0 %1585
    %v1588 = vsel %vm307, %v1566, %v1586
    %1590 = vrot.lane.b32.xlu0 %v1566, 96
    %v1591 = vpop.permute.xlu0 %1590
    %v1593 = vsel %vm307, %v1591, %v1581
    %1595 = vrot.lane.b32.xlu0 %v1582, 64
    %v1596 = vpop.permute.xlu0 %1595
    %1599 = vrot.lane.b32.xlu0 %v1583, 96
    %v1600 = vpop.permute.xlu0 %1599
    %v1602 = vsel %vm307, %v1596, %v1600
    %1603 = vrot.lane.b32.xlu0 %v1566, 32
    %v1604 = vpop.permute.xlu0 %1603
    %1606 = vrot.lane.b32.xlu0 %v1581, 64
    %v1607 = vpop.permute.xlu0 %1606
    %v1609 = vsel %vm307, %v1604, %v1607
    %v1610 = vmul.f32 %v1593, %v1505
    %v1611 = vmul.f32 %v1588, %v1602
    %v1612 = vadd.f32 %v1610, %v1611
    %v1613 = vtanh.pop %v1612
    %v1614 = vmul.f32 %v1609, %v1613
    %1615 = vst.msk [vmem:[%s557] sm:$0xff] %vm307, %v1614
    %1616 = vst.msk [vmem:[%s559] sm:$0xff] %vm337, %v1614
    %v1617 = vld [vmem:[%s561] sm:$0xff]
    %v1618 = vld [vmem:[%s563 + $0x8] sm:$0xff]
    %v1619 = vpack.c.bf16 %v1614, %v1614
    %v1621 = vsel %vm231, %v1619, 0
    %1623 = vmatpush.bf16.msra.mxu0 0
    %1624 = vmatpush.bf16.msra.mxu0 0
    %1625 = vmatpush.bf16.msra.mxu0 0
    %1626 = vmatpush.bf16.msra.mxu0 0
    %1627 = vmatpush.bf16.msra.mxu0 %v1292
    %1628 = vmatpush.bf16.msra.mxu0 %v1290
    %1629 = vmatpush.bf16.msra.mxu0 %v1288
    %1630 = vmatpush.bf16.msra.mxu0 %v1286
    %1631 = vmatmul.bf16.gmra.mxu0 %v1621
    %v1632 = vpop.f32.mrf.mxu0
    %v1633 = vadd.f32 0.0, %v1632
    %v1634 = vpop.f32.mrf.mxu0
    %1635 = vdwg.mxu0
    %1636 = vmatpush.bf16.msra.mxu0 0
    %1637 = vmatpush.bf16.msra.mxu0 0
    %1638 = vmatpush.bf16.msra.mxu0 0
    %1639 = vmatpush.bf16.msra.mxu0 0
    %1640 = vmatpush.bf16.msra.mxu0 %v1293
    %1641 = vmatpush.bf16.msra.mxu0 %v1291
    %1642 = vmatpush.bf16.msra.mxu0 %v1289
    %1643 = vmatpush.bf16.msra.mxu0 %v1287
    %1644 = vmatmul.bf16.gmra.mxu0 %v1621
    %v1645 = vpop.f32.mrf.mxu0
    %v1646 = vadd.f32 0.0, %v1645
    %v1647 = vpop.f32.mrf.mxu0
    %1648 = vdwg.mxu0
    %v1649 = vadd.f32 %v1617, %v1633
    %v1650 = vadd.f32 %v1618, %v1646
    %v1651 = vxor.u32 %v1649, 2147483648
    %v1652 = vxor.u32 %v1650, 2147483648
    %v1653 = vmul.f32 %v1651, 1.442695
    %v1654 = vpow.pop %v1653
    %v1655 = vmul.f32 %v1652, 1.442695
    %v1656 = vpow.pop %v1655
    %v1657 = vadd.f32 %v1654, 1.0
    %v1658 = vadd.f32 %v1656, 1.0
    %v1659 = vrcp.pop %v1657
    %v1660 = vmul.f32 %v1657, %v1659
    %v1661 = vsub.f32 1.0, %v1660
    %v1662 = vmul.f32 %v1659, %v1661
    %v1663 = vadd.f32 %v1659, %v1662
    %vm1664 = vweird.f32 %v1657
    %vm1665 = vweird.f32 %v1659
    %vm1666 = vmor %vm1664, %vm1665
    %v1667 = vsel %vm1666, %v1659, %v1663
    %v1668 = vand.u32 2147483647, %v1657
    %vm1669 = vcmp.eq.f32.partialorder %v1668, 8.507059e+37
    %v1670 = vand.u32 %v1657, 2147483648
    %v1671 = vor.u32 1.1754944e-38, %v1670
    %v1672 = vsel %vm1669, %v1671, %v1667
    %v1673 = vmul.f32 1.0, %v1672
    %v1674 = vrcp.pop %v1658
    %v1675 = vmul.f32 %v1658, %v1674
    %v1676 = vsub.f32 1.0, %v1675
    %v1677 = vmul.f32 %v1674, %v1676
    %v1678 = vadd.f32 %v1674, %v1677
    %vm1679 = vweird.f32 %v1658
    %vm1680 = vweird.f32 %v1674
    %vm1681 = vmor %vm1679, %vm1680
    %v1682 = vsel %vm1681, %v1674, %v1678
    %v1683 = vand.u32 2147483647, %v1658
    %vm1684 = vcmp.eq.f32.partialorder %v1683, 8.507059e+37
    %v1685 = vand.u32 %v1658, 2147483648
    %v1686 = vor.u32 1.1754944e-38, %v1685
    %v1687 = vsel %vm1684, %v1686, %v1682
    %v1688 = vmul.f32 1.0, %v1687
    %v1689 = vtanh.pop %v1649
    %v1690 = vtanh.pop %v1650
    %1692 = vrot.lane.b32.xlu0 %v1688, 32
    %v1693 = vpop.permute.xlu0 %1692
    %v1695 = vsel %vm307, %v1673, %v1693
    %1697 = vrot.lane.b32.xlu0 %v1673, 96
    %v1698 = vpop.permute.xlu0 %1697
    %v1700 = vsel %vm307, %v1698, %v1688
    %1702 = vrot.lane.b32.xlu0 %v1689, 64
    %v1703 = vpop.permute.xlu0 %1702
    %1706 = vrot.lane.b32.xlu0 %v1690, 96
    %v1707 = vpop.permute.xlu0 %1706
    %v1709 = vsel %vm307, %v1703, %v1707
    %1710 = vrot.lane.b32.xlu0 %v1673, 32
    %v1711 = vpop.permute.xlu0 %1710
    %1713 = vrot.lane.b32.xlu0 %v1688, 64
    %v1714 = vpop.permute.xlu0 %1713
    %v1716 = vsel %vm307, %v1711, %v1714
    %v1717 = vmul.f32 %v1700, %v1612
    %v1718 = vmul.f32 %v1695, %v1709
    %v1719 = vadd.f32 %v1717, %v1718
    %v1720 = vtanh.pop %v1719
    %v1721 = vmul.f32 %v1716, %v1720
    %1722 = vst.msk [vmem:[%s668] sm:$0xff] %vm307, %v1721
    %1723 = vst.msk [vmem:[%s670] sm:$0xff] %vm337, %v1721
    %v1724 = vld [vmem:[%s563] sm:$0xff]
    %v1725 = vld [vmem:[%s561 + $0x8] sm:$0xff]
    %v1726 = vpack.c.bf16 %v1721, %v1721
    %v1728 = vsel %vm231, %v1726, 0
    %1730 = vmatpush.bf16.msra.mxu0 0
    %1731 = vmatpush.bf16.msra.mxu0 0
    %1732 = vmatpush.bf16.msra.mxu0 0
    %1733 = vmatpush.bf16.msra.mxu0 0
    %1734 = vmatpush.bf16.msra.mxu0 %v1292
    %1735 = vmatpush.bf16.msra.mxu0 %v1290
    %1736 = vmatpush.bf16.msra.mxu0 %v1288
    %1737 = vmatpush.bf16.msra.mxu0 %v1286
    %1738 = vmatmul.bf16.gmra.mxu0 %v1728
    %v1739 = vpop.f32.mrf.mxu0
    %v1740 = vadd.f32 0.0, %v1739
    %v1741 = vpop.f32.mrf.mxu0
    %1742 = vdwg.mxu0
    %1743 = vmatpush.bf16.msra.mxu0 0
    %1744 = vmatpush.bf16.msra.mxu0 0
    %1745 = vmatpush.bf16.msra.mxu0 0
    %1746 = vmatpush.bf16.msra.mxu0 0
    %1747 = vmatpush.bf16.msra.mxu0 %v1293
    %1748 = vmatpush.bf16.msra.mxu0 %v1291
    %1749 = vmatpush.bf16.msra.mxu0 %v1289
    %1750 = vmatpush.bf16.msra.mxu0 %v1287
    %1751 = vmatmul.bf16.gmra.mxu0 %v1728
    %v1752 = vpop.f32.mrf.mxu0
    %v1753 = vadd.f32 0.0, %v1752
    %v1754 = vpop.f32.mrf.mxu0
    %1755 = vdwg.mxu0
    %v1756 = vadd.f32 %v1724, %v1740
    %v1757 = vadd.f32 %v1725, %v1753
    %v1758 = vxor.u32 %v1756, 2147483648
    %v1759 = vxor.u32 %v1757, 2147483648
    %v1760 = vmul.f32 %v1758, 1.442695
    %v1761 = vpow.pop %v1760
    %v1762 = vmul.f32 %v1759, 1.442695
    %v1763 = vpow.pop %v1762
    %v1764 = vadd.f32 %v1761, 1.0
    %v1765 = vadd.f32 %v1763, 1.0
    %v1766 = vrcp.pop %v1764
    %v1767 = vmul.f32 %v1764, %v1766
    %v1768 = vsub.f32 1.0, %v1767
    %v1769 = vmul.f32 %v1766, %v1768
    %v1770 = vadd.f32 %v1766, %v1769
    %vm1771 = vweird.f32 %v1764
    %vm1772 = vweird.f32 %v1766
    %vm1773 = vmor %vm1771, %vm1772
    %v1774 = vsel %vm1773, %v1766, %v1770
    %v1775 = vand.u32 2147483647, %v1764
    %vm1776 = vcmp.eq.f32.partialorder %v1775, 8.507059e+37
    %v1777 = vand.u32 %v1764, 2147483648
    %v1778 = vor.u32 1.1754944e-38, %v1777
    %v1779 = vsel %vm1776, %v1778, %v1774
    %v1780 = vmul.f32 1.0, %v1779
    %v1781 = vrcp.pop %v1765
    %v1782 = vmul.f32 %v1765, %v1781
    %v1783 = vsub.f32 1.0, %v1782
    %v1784 = vmul.f32 %v1781, %v1783
    %v1785 = vadd.f32 %v1781, %v1784
    %vm1786 = vweird.f32 %v1765
    %vm1787 = vweird.f32 %v1781
    %vm1788 = vmor %vm1786, %vm1787
    %v1789 = vsel %vm1788, %v1781, %v1785
    %v1790 = vand.u32 2147483647, %v1765
    %vm1791 = vcmp.eq.f32.partialorder %v1790, 8.507059e+37
    %v1792 = vand.u32 %v1765, 2147483648
    %v1793 = vor.u32 1.1754944e-38, %v1792
    %v1794 = vsel %vm1791, %v1793, %v1789
    %v1795 = vmul.f32 1.0, %v1794
    %v1796 = vtanh.pop %v1756
    %v1797 = vtanh.pop %v1757
    %1799 = vrot.lane.b32.xlu0 %v1795, 32
    %v1800 = vpop.permute.xlu0 %1799
    %v1802 = vsel %vm307, %v1780, %v1800
    %1804 = vrot.lane.b32.xlu0 %v1780, 96
    %v1805 = vpop.permute.xlu0 %1804
    %v1807 = vsel %vm307, %v1805, %v1795
    %1809 = vrot.lane.b32.xlu0 %v1796, 64
    %v1810 = vpop.permute.xlu0 %1809
    %1813 = vrot.lane.b32.xlu0 %v1797, 96
    %v1814 = vpop.permute.xlu0 %1813
    %v1816 = vsel %vm307, %v1810, %v1814
    %1817 = vrot.lane.b32.xlu0 %v1780, 32
    %v1818 = vpop.permute.xlu0 %1817
    %1820 = vrot.lane.b32.xlu0 %v1795, 64
    %v1821 = vpop.permute.xlu0 %1820
    %v1823 = vsel %vm307, %v1818, %v1821
    %v1824 = vmul.f32 %v1807, %v1719
    %v1825 = vmul.f32 %v1802, %v1816
    %v1826 = vadd.f32 %v1824, %v1825
    %v1827 = vtanh.pop %v1826
    %v1828 = vmul.f32 %v1823, %v1827
    %1829 = vst.msk [vmem:[%s670] sm:$0xff] %vm307, %v1828
    %1830 = vst.msk [vmem:[%s668] sm:$0xff] %vm337, %v1828
    %v1831 = vld [vmem:[%s452] sm:$0xff]
    %v1832 = vld [vmem:[%s450 + $0x8] sm:$0xff]
    %v1833 = vpack.c.bf16 %v1828, %v1828
    %v1835 = vsel %vm231, %v1833, 0
    %1837 = vmatpush.bf16.msra.mxu0 0
    %1838 = vmatpush.bf16.msra.mxu0 0
    %1839 = vmatpush.bf16.msra.mxu0 0
    %1840 = vmatpush.bf16.msra.mxu0 0
    %1841 = vmatpush.bf16.msra.mxu0 %v1292
    %1842 = vmatpush.bf16.msra.mxu0 %v1290
    %1843 = vmatpush.bf16.msra.mxu0 %v1288
    %1844 = vmatpush.bf16.msra.mxu0 %v1286
    %1845 = vmatmul.bf16.gmra.mxu0 %v1835
    %v1846 = vpop.f32.mrf.mxu0
    %v1847 = vadd.f32 0.0, %v1846
    %v1848 = vpop.f32.mrf.mxu0
    %1849 = vdwg.mxu0
    %1850 = vmatpush.bf16.msra.mxu0 0
    %1851 = vmatpush.bf16.msra.mxu0 0
    %1852 = vmatpush.bf16.msra.mxu0 0
    %1853 = vmatpush.bf16.msra.mxu0 0
    %1854 = vmatpush.bf16.msra.mxu0 %v1293
    %1855 = vmatpush.bf16.msra.mxu0 %v1291
    %1856 = vmatpush.bf16.msra.mxu0 %v1289
    %1857 = vmatpush.bf16.msra.mxu0 %v1287
    %1858 = vmatmul.bf16.gmra.mxu0 %v1835
    %v1859 = vpop.f32.mrf.mxu0
    %v1860 = vadd.f32 0.0, %v1859
    %v1861 = vpop.f32.mrf.mxu0
    %1862 = vdwg.mxu0
    %v1863 = vadd.f32 %v1831, %v1847
    %v1864 = vadd.f32 %v1832, %v1860
    %v1865 = vxor.u32 %v1863, 2147483648
    %v1866 = vxor.u32 %v1864, 2147483648
    %v1867 = vmul.f32 %v1865, 1.442695
    %v1868 = vpow.pop %v1867
    %v1869 = vmul.f32 %v1866, 1.442695
    %v1870 = vpow.pop %v1869
    %v1871 = vadd.f32 %v1868, 1.0
    %v1872 = vadd.f32 %v1870, 1.0
    %v1873 = vrcp.pop %v1871
    %v1874 = vmul.f32 %v1871, %v1873
    %v1875 = vsub.f32 1.0, %v1874
    %v1876 = vmul.f32 %v1873, %v1875
    %v1877 = vadd.f32 %v1873, %v1876
    %vm1878 = vweird.f32 %v1871
    %vm1879 = vweird.f32 %v1873
    %vm1880 = vmor %vm1878, %vm1879
    %v1881 = vsel %vm1880, %v1873, %v1877
    %v1882 = vand.u32 2147483647, %v1871
    %vm1883 = vcmp.eq.f32.partialorder %v1882, 8.507059e+37
    %v1884 = vand.u32 %v1871, 2147483648
    %v1885 = vor.u32 1.1754944e-38, %v1884
    %v1886 = vsel %vm1883, %v1885, %v1881
    %v1887 = vmul.f32 1.0, %v1886
    %v1888 = vrcp.pop %v1872
    %v1889 = vmul.f32 %v1872, %v1888
    %v1890 = vsub.f32 1.0, %v1889
    %v1891 = vmul.f32 %v1888, %v1890
    %v1892 = vadd.f32 %v1888, %v1891
    %vm1893 = vweird.f32 %v1872
    %vm1894 = vweird.f32 %v1888
    %vm1895 = vmor %vm1893, %vm1894
    %v1896 = vsel %vm1895, %v1888, %v1892
    %v1897 = vand.u32 2147483647, %v1872
    %vm1898 = vcmp.eq.f32.partialorder %v1897, 8.507059e+37
    %v1899 = vand.u32 %v1872, 2147483648
    %v1900 = vor.u32 1.1754944e-38, %v1899
    %v1901 = vsel %vm1898, %v1900, %v1896
    %v1902 = vmul.f32 1.0, %v1901
    %v1903 = vtanh.pop %v1863
    %v1904 = vtanh.pop %v1864
    %1906 = vrot.lane.b32.xlu0 %v1902, 32
    %v1907 = vpop.permute.xlu0 %1906
    %v1909 = vsel %vm307, %v1887, %v1907
    %1911 = vrot.lane.b32.xlu0 %v1887, 96
    %v1912 = vpop.permute.xlu0 %1911
    %v1914 = vsel %vm307, %v1912, %v1902
    %1916 = vrot.lane.b32.xlu0 %v1903, 64
    %v1917 = vpop.permute.xlu0 %1916
    %1920 = vrot.lane.b32.xlu0 %v1904, 96
    %v1921 = vpop.permute.xlu0 %1920
    %v1923 = vsel %vm307, %v1917, %v1921
    %1924 = vrot.lane.b32.xlu0 %v1887, 32
    %v1925 = vpop.permute.xlu0 %1924
    %1927 = vrot.lane.b32.xlu0 %v1902, 64
    %v1928 = vpop.permute.xlu0 %1927
    %v1930 = vsel %vm307, %v1925, %v1928
    %v1931 = vmul.f32 %v1914, %v1826
    %v1932 = vmul.f32 %v1909, %v1923
    %v1933 = vadd.f32 %v1931, %v1932
    %v1934 = vtanh.pop %v1933
    %v1935 = vmul.f32 %v1930, %v1934
    %1936 = vst.msk [vmem:[%s559] sm:$0xff] %vm307, %v1935
    %1937 = vst.msk [vmem:[%s557] sm:$0xff] %vm337, %v1935
    %v1938 = vld [vmem:[%s341] sm:$0xff]
    %v1939 = vld [vmem:[%s339 + $0x8] sm:$0xff]
    %v1940 = vpack.c.bf16 %v1935, %v1935
    %v1942 = vsel %vm231, %v1940, 0
    %1944 = vmatpush.bf16.msra.mxu0 0
    %1945 = vmatpush.bf16.msra.mxu0 0
    %1946 = vmatpush.bf16.msra.mxu0 0
    %1947 = vmatpush.bf16.msra.mxu0 0
    %1948 = vmatpush.bf16.msra.mxu0 %v1292
    %1949 = vmatpush.bf16.msra.mxu0 %v1290
    %1950 = vmatpush.bf16.msra.mxu0 %v1288
    %1951 = vmatpush.bf16.msra.mxu0 %v1286
    %1952 = vmatmul.bf16.gmra.mxu0 %v1942
    %v1953 = vpop.f32.mrf.mxu0
    %v1954 = vadd.f32 0.0, %v1953
    %v1955 = vpop.f32.mrf.mxu0
    %1956 = vdwg.mxu0
    %1957 = vmatpush.bf16.msra.mxu0 0
    %1958 = vmatpush.bf16.msra.mxu0 0
    %1959 = vmatpush.bf16.msra.mxu0 0
    %1960 = vmatpush.bf16.msra.mxu0 0
    %1961 = vmatpush.bf16.msra.mxu0 %v1293
    %1962 = vmatpush.bf16.msra.mxu0 %v1291
    %1963 = vmatpush.bf16.msra.mxu0 %v1289
    %1964 = vmatpush.bf16.msra.mxu0 %v1287
    %1965 = vmatmul.bf16.gmra.mxu0 %v1942
    %v1966 = vpop.f32.mrf.mxu0
    %v1967 = vadd.f32 0.0, %v1966
    %v1968 = vpop.f32.mrf.mxu0
    %1969 = vdwg.mxu0
    %v1970 = vadd.f32 %v1938, %v1954
    %v1971 = vadd.f32 %v1939, %v1967
    %v1972 = vxor.u32 %v1970, 2147483648
    %v1973 = vxor.u32 %v1971, 2147483648
    %v1974 = vmul.f32 %v1972, 1.442695
    %v1975 = vpow.pop %v1974
    %v1976 = vmul.f32 %v1973, 1.442695
    %v1977 = vpow.pop %v1976
    %v1978 = vadd.f32 %v1975, 1.0
    %v1979 = vadd.f32 %v1977, 1.0
    %v1980 = vrcp.pop %v1978
    %v1981 = vmul.f32 %v1978, %v1980
    %v1982 = vsub.f32 1.0, %v1981
    %v1983 = vmul.f32 %v1980, %v1982
    %v1984 = vadd.f32 %v1980, %v1983
    %vm1985 = vweird.f32 %v1978
    %vm1986 = vweird.f32 %v1980
    %vm1987 = vmor %vm1985, %vm1986
    %v1988 = vsel %vm1987, %v1980, %v1984
    %v1989 = vand.u32 2147483647, %v1978
    %vm1990 = vcmp.eq.f32.partialorder %v1989, 8.507059e+37
    %v1991 = vand.u32 %v1978, 2147483648
    %v1992 = vor.u32 1.1754944e-38, %v1991
    %v1993 = vsel %vm1990, %v1992, %v1988
    %v1994 = vmul.f32 1.0, %v1993
    %v1995 = vrcp.pop %v1979
    %v1996 = vmul.f32 %v1979, %v1995
    %v1997 = vsub.f32 1.0, %v1996
    %v1998 = vmul.f32 %v1995, %v1997
    %v1999 = vadd.f32 %v1995, %v1998
    %vm2000 = vweird.f32 %v1979
    %vm2001 = vweird.f32 %v1995
    %vm2002 = vmor %vm2000, %vm2001
    %v2003 = vsel %vm2002, %v1995, %v1999
    %v2004 = vand.u32 2147483647, %v1979
    %vm2005 = vcmp.eq.f32.partialorder %v2004, 8.507059e+37
    %v2006 = vand.u32 %v1979, 2147483648
    %v2007 = vor.u32 1.1754944e-38, %v2006
    %v2008 = vsel %vm2005, %v2007, %v2003
    %v2009 = vmul.f32 1.0, %v2008
    %v2010 = vtanh.pop %v1970
    %v2011 = vtanh.pop %v1971
    %2013 = vrot.lane.b32.xlu0 %v2009, 32
    %v2014 = vpop.permute.xlu0 %2013
    %v2016 = vsel %vm307, %v1994, %v2014
    %2018 = vrot.lane.b32.xlu0 %v1994, 96
    %v2019 = vpop.permute.xlu0 %2018
    %v2021 = vsel %vm307, %v2019, %v2009
    %2023 = vrot.lane.b32.xlu0 %v2010, 64
    %v2024 = vpop.permute.xlu0 %2023
    %2027 = vrot.lane.b32.xlu0 %v2011, 96
    %v2028 = vpop.permute.xlu0 %2027
    %v2030 = vsel %vm307, %v2024, %v2028
    %2031 = vrot.lane.b32.xlu0 %v1994, 32
    %v2032 = vpop.permute.xlu0 %2031
    %2034 = vrot.lane.b32.xlu0 %v2009, 64
    %v2035 = vpop.permute.xlu0 %2034
    %v2037 = vsel %vm307, %v2032, %v2035
    %v2038 = vmul.f32 %v2021, %v1933
    %v2039 = vmul.f32 %v2016, %v2030
    %v2040 = vadd.f32 %v2038, %v2039
    %v2041 = vtanh.pop %v2040
    %v2042 = vmul.f32 %v2037, %v2041
    %2043 = vst.msk [vmem:[%s448] sm:$0xff] %vm307, %v2042
    %2044 = vst.msk [vmem:[%s446] sm:$0xff] %vm337, %v2042
    %v2045 = vld [vmem:[%s189] sm:$0xff]
    %v2046 = vld [vmem:[#allocation2 + $0x8] sm:$0xff]
    %v2047 = vpack.c.bf16 %v2042, %v2042
    %v2049 = vsel %vm231, %v2047, 0
    %2051 = vmatpush.bf16.msra.mxu0 0
    %2052 = vmatpush.bf16.msra.mxu0 0
    %2053 = vmatpush.bf16.msra.mxu0 0
    %2054 = vmatpush.bf16.msra.mxu0 0
    %2055 = vmatpush.bf16.msra.mxu0 %v1292
    %2056 = vmatpush.bf16.msra.mxu0 %v1290
    %2057 = vmatpush.bf16.msra.mxu0 %v1288
    %2058 = vmatpush.bf16.msra.mxu0 %v1286
    %2059 = vmatmul.bf16.gmra.mxu0 %v2049
    %v2060 = vpop.f32.mrf.mxu0
    %v2061 = vadd.f32 0.0, %v2060
    %v2062 = vpop.f32.mrf.mxu0
    %2063 = vdwg.mxu0
    %2064 = vmatpush.bf16.msra.mxu0 0
    %2065 = vmatpush.bf16.msra.mxu0 0
    %2066 = vmatpush.bf16.msra.mxu0 0
    %2067 = vmatpush.bf16.msra.mxu0 0
    %2068 = vmatpush.bf16.msra.mxu0 %v1293
    %2069 = vmatpush.bf16.msra.mxu0 %v1291
    %2070 = vmatpush.bf16.msra.mxu0 %v1289
    %2071 = vmatpush.bf16.msra.mxu0 %v1287
    %2072 = vmatmul.bf16.gmra.mxu0 %v2049
    %v2073 = vpop.f32.mrf.mxu0
    %v2074 = vadd.f32 0.0, %v2073
    %v2075 = vpop.f32.mrf.mxu0
    %2076 = vdwg.mxu0
    %v2077 = vadd.f32 %v2045, %v2061
    %v2078 = vadd.f32 %v2046, %v2074
    %v2079 = vxor.u32 %v2077, 2147483648
    %v2080 = vxor.u32 %v2078, 2147483648
    %v2081 = vmul.f32 %v2079, 1.442695
    %v2082 = vpow.pop %v2081
    %v2083 = vmul.f32 %v2080, 1.442695
    %v2084 = vpow.pop %v2083
    %v2085 = vadd.f32 %v2082, 1.0
    %v2086 = vadd.f32 %v2084, 1.0
    %v2087 = vrcp.pop %v2085
    %v2088 = vmul.f32 %v2085, %v2087
    %v2089 = vsub.f32 1.0, %v2088
    %v2090 = vmul.f32 %v2087, %v2089
    %v2091 = vadd.f32 %v2087, %v2090
    %vm2092 = vweird.f32 %v2085
    %vm2093 = vweird.f32 %v2087
    %vm2094 = vmor %vm2092, %vm2093
    %v2095 = vsel %vm2094, %v2087, %v2091
    %v2096 = vand.u32 2147483647, %v2085
    %vm2097 = vcmp.eq.f32.partialorder %v2096, 8.507059e+37
    %v2098 = vand.u32 %v2085, 2147483648
    %v2099 = vor.u32 1.1754944e-38, %v2098
    %v2100 = vsel %vm2097, %v2099, %v2095
    %v2101 = vmul.f32 1.0, %v2100
    %v2102 = vrcp.pop %v2086
    %v2103 = vmul.f32 %v2086, %v2102
    %v2104 = vsub.f32 1.0, %v2103
    %v2105 = vmul.f32 %v2102, %v2104
    %v2106 = vadd.f32 %v2102, %v2105
    %vm2107 = vweird.f32 %v2086
    %vm2108 = vweird.f32 %v2102
    %vm2109 = vmor %vm2107, %vm2108
    %v2110 = vsel %vm2109, %v2102, %v2106
    %v2111 = vand.u32 2147483647, %v2086
    %vm2112 = vcmp.eq.f32.partialorder %v2111, 8.507059e+37
    %v2113 = vand.u32 %v2086, 2147483648
    %v2114 = vor.u32 1.1754944e-38, %v2113
    %v2115 = vsel %vm2112, %v2114, %v2110
    %v2116 = vmul.f32 1.0, %v2115
    %v2117 = vtanh.pop %v2077
    %v2118 = vtanh.pop %v2078
    %2120 = vrot.lane.b32.xlu0 %v2116, 32
    %v2121 = vpop.permute.xlu0 %2120
    %v2123 = vsel %vm307, %v2101, %v2121
    %2125 = vrot.lane.b32.xlu0 %v2101, 96
    %v2126 = vpop.permute.xlu0 %2125
    %v2128 = vsel %vm307, %v2126, %v2116
    %2130 = vrot.lane.b32.xlu0 %v2117, 64
    %v2131 = vpop.permute.xlu0 %2130
    %2134 = vrot.lane.b32.xlu0 %v2118, 96
    %v2135 = vpop.permute.xlu0 %2134
    %v2137 = vsel %vm307, %v2131, %v2135
    %2138 = vrot.lane.b32.xlu0 %v2101, 32
    %v2139 = vpop.permute.xlu0 %2138
    %2141 = vrot.lane.b32.xlu0 %v2116, 64
    %v2142 = vpop.permute.xlu0 %2141
    %v2144 = vsel %vm307, %v2139, %v2142
    %v2145 = vmul.f32 %v2128, %v2040
    %v2146 = vmul.f32 %v2123, %v2137
    %v2147 = vadd.f32 %v2145, %v2146
    %v2148 = vtanh.pop %v2147
    %v2149 = vmul.f32 %v2144, %v2148
    %2150 = vst.msk [vmem:[%s336] sm:$0xff] %vm307, %v2149
    %2151 = vst.msk [vmem:[#allocation3] sm:$0xff] %vm337, %v2149
    %v2152 = vld [vmem:[#allocation3] sm:$0xff]
    %v2153 = vld [vmem:[#allocation3 + $0x8] sm:$0xff]
    %v2154 = vld [vmem:[#allocation3 + $0x10] sm:$0xff]
    %v2155 = vld [vmem:[#allocation3 + $0x18] sm:$0xff]
    %v2156 = vld [vmem:[#allocation3 + $0x20] sm:$0xff]
    %v2157 = vld [vmem:[#allocation3 + $0x28] sm:$0xff]
    %v2158 = vld [vmem:[#allocation3 + $0x30] sm:$0xff]
    %v2159 = vld [vmem:[#allocation3 + $0x38] sm:$0xff]
    %v2160 = vpack.c.bf16 %v2153, %v2152
    %v2161 = vpack.c.bf16 %v2155, %v2154
    %v2162 = vpack.c.bf16 %v2157, %v2156
    %v2163 = vpack.c.bf16 %v2159, %v2158
    %v2164 = vld [vmem:[%s7] sm:$0xf]
    %v2165 = vld [vmem:[%s7 + $0x4] sm:$0xf]
    %v2166 = vld [vmem:[%s7 + $0x8] sm:$0xf]
    %v2167 = vld [vmem:[%s7 + $0xc] sm:$0xf]
    %v2168 = vld [vmem:[%s7 + $0x10] sm:$0xf]
    %v2169 = vld [vmem:[%s7 + $0x14] sm:$0xf]
    %v2170 = vld [vmem:[%s7 + $0x18] sm:$0xf]
    %v2171 = vld [vmem:[%s7 + $0x1c] sm:$0xf]
    %v2172 = vld [vmem:[%s8] sm:$0x1]
    %v2174 = vperm.slane %v2172, 0
    %v2184 = vunpack.c.l.b16 %v2164
    %v2185 = vunpack.c.l.b16 %v2165
    %v2186 = vunpack.c.l.b16 %v2166
    %v2187 = vunpack.c.l.b16 %v2167
    %v2188 = vunpack.c.l.b16 %v2168
    %v2189 = vunpack.c.l.b16 %v2169
    %v2190 = vunpack.c.l.b16 %v2170
    %v2191 = vunpack.c.l.b16 %v2171
    %v2192 = vpack.c.b16 %v2185, %v2184
    %v2193 = vpack.c.b16 %v2187, %v2186
    %v2194 = vpack.c.b16 %v2189, %v2188
    %v2195 = vpack.c.b16 %v2191, %v2190
    %v2201 = vsel %vm231, %v2160, 0
    %v2204 = vsel %vm231, %v2161, 0
    %v2207 = vsel %vm231, %v2162, 0
    %v2210 = vsel %vm231, %v2163, 0
    %2212 = vmatpush.bf16.msra.mxu0 0
    %2213 = vmatpush.bf16.msra.mxu0 0
    %2214 = vmatpush.bf16.msra.mxu0 0
    %2215 = vmatpush.bf16.msra.mxu0 0
    %2216 = vmatpush.bf16.msra.mxu0 %v2195
    %2217 = vmatpush.bf16.msra.mxu0 %v2194
    %2218 = vmatpush.bf16.msra.mxu0 %v2193
    %2219 = vmatpush.bf16.msra.mxu0 %v2192
    %2220 = vmatmul.bf16.gmra.mxu0 %v2201
    %v2221 = vpop.f32.mrf.mxu0
    %v2222 = vadd.f32 %v2174, %v2221
    %v2223 = vpop.f32.mrf.mxu0
    %v2224 = vadd.f32 %v2174, %v2223
    %2225 = vmatmul.bf16.gmra.mxu0 %v2204
    %v2226 = vpop.f32.mrf.mxu0
    %v2227 = vadd.f32 %v2174, %v2226
    %v2228 = vpop.f32.mrf.mxu0
    %v2229 = vadd.f32 %v2174, %v2228
    %2230 = vmatmul.bf16.gmra.mxu0 %v2207
    %v2231 = vpop.f32.mrf.mxu0
    %v2232 = vadd.f32 %v2174, %v2231
    %v2233 = vpop.f32.mrf.mxu0
    %v2234 = vadd.f32 %v2174, %v2233
    %2235 = vmatmul.bf16.gmra.mxu0 %v2210
    %v2236 = vpop.f32.mrf.mxu0
    %v2237 = vadd.f32 %v2174, %v2236
    %v2238 = vpop.f32.mrf.mxu0
    %v2239 = vadd.f32 %v2174, %v2238
    %2240 = vdwg.mxu0
    %2241 = vst [vmem:[%s9] sm:$0xff] %v2222
    %2242 = vst [vmem:[%s9 + $0x8] sm:$0xff] %v2224
    %2243 = vst [vmem:[%s9 + $0x10] sm:$0xff] %v2227
    %2244 = vst [vmem:[%s9 + $0x18] sm:$0xff] %v2229
    %2245 = vst [vmem:[%s9 + $0x20] sm:$0xff] %v2232
    %2246 = vst [vmem:[%s9 + $0x28] sm:$0xff] %v2234
    %2247 = vst [vmem:[%s9 + $0x30] sm:$0xff] %v2237
    %2248 = vst [vmem:[%s9 + $0x38] sm:$0xff] %v2239
    // Predicated region
    $region42: #{tg_rnn_forward.1} parent=1 // pred_check
      _
    $region43: #{tg_rnn_forward.1} parent=1 // pred_check_branch
      %2250 = sbr.rel (0) target = $region45
    $region44: #{tg_rnn_forward.1} parent=1 // pred_region
      _
    $region45: #{tg_rnn_forward.1} parent=1 // pred_fallthru
      _
    // Predicated region
    $region46: #{tg_rnn_forward.1} parent=1 // pred_check
      _
    $region47: #{tg_rnn_forward.1} parent=1 // pred_check_branch
      %2252 = sbr.rel (0) target = $region49
    $region48: #{tg_rnn_forward.1} parent=1 // pred_region
      _
    $region49: #{tg_rnn_forward.1} parent=1 // pred_fallthru
      _
    %2253 = vsyncpa [#allocation5], 1

</llo_original>
